<compile_context>
chip_gen: v7x
topology: tpu7x:2x2x1
jax: 0.10.0
libtpu: 0.0.40
codegen_flags: <defaults>
</compile_context>

<pallas_src>
import jax
import jax.numpy as jnp
from jax.experimental import pallas as pl
from jax.experimental.pallas import tpu as pltpu

INPUT_DIM = 784
INPUT_PAD = 896            # 7 * 128: lane-dense padded input/output width
HIDDEN_DIM = 512
HALF_HIDDEN = HIDDEN_DIM // 2
LATENT_DIM = 32
STATS_DIM = 2 * LATENT_DIM  # fused [mu | logvar] projection width


def _round_up(x, m):
    return (x + m - 1) // m * m


def _vae_kernel(
    x_ref, eps_ref,
    w_e1, b_e1, w_e2, b_e2,
    w_ml, b_ml,
    w_d1, b_d1, w_d2, b_d2, w_d3, b_d3,
    recon_ref, stats_ref,
):
    # ---- encoder: Linear(896->512)+ReLU, Linear(512->256)+ReLU (bf16 MXU) ----
    x = x_ref[...]                                            # bf16 [tb, 896]
    h = jnp.dot(x, w_e1[...], preferred_element_type=jnp.float32) + b_e1[...]
    h = jnp.maximum(h, 0.0).astype(jnp.bfloat16)
    h = jnp.dot(h, w_e2[...], preferred_element_type=jnp.float32) + b_e2[...]
    h = jnp.maximum(h, 0.0).astype(jnp.bfloat16)

    # ---- fused latent projection: one 64-wide matmul for [mu | logvar] ----
    stats = jnp.dot(h, w_ml[...], preferred_element_type=jnp.float32) + b_ml[...]
    stats_ref[...] = stats                                    # f32 [tb, 64]

    mu = stats[:, :LATENT_DIM]
    logvar = stats[:, LATENT_DIM:]

    # ---- reparameterization trick: z = mu + eps * exp(0.5 * logvar) (f32) ----
    z = mu + eps_ref[...] * jnp.exp(0.5 * logvar)
    z = z.astype(jnp.bfloat16)

    # ---- decoder: Linear(32->256)+ReLU, Linear(256->512)+ReLU,
    # ----          Linear(512->896)+Sigmoid ----
    d = jnp.dot(z, w_d1[...], preferred_element_type=jnp.float32) + b_d1[...]
    d = jnp.maximum(d, 0.0).astype(jnp.bfloat16)
    d = jnp.dot(d, w_d2[...], preferred_element_type=jnp.float32) + b_d2[...]
    d = jnp.maximum(d, 0.0).astype(jnp.bfloat16)
    d = jnp.dot(d, w_d3[...], preferred_element_type=jnp.float32) + b_d3[...]
    recon_ref[...] = jax.nn.sigmoid(d)                        # f32 [tb, 896]


def prepare_kernel_params(params):
    """Pads / fuses / casts logical f32 [in, out] params for the kernel.

    - w_e1: rows padded 784 -> 896 with zeros (K padding; x columns are zero).
    - w_d3/b_d3: output columns padded 784 -> 896 with zeros (N padding).
    - w_mu|w_lv fused into w_ml [256, 64], b_mu|b_lv into b_ml [1, 64].
    - All weights cast to bf16; biases stay f32 (element-wise path).
    """
    f32, bf16 = jnp.float32, jnp.bfloat16
    w_e1 = jnp.zeros((INPUT_PAD, HIDDEN_DIM), f32).at[:INPUT_DIM].set(params["w_e1"])
    w_d3 = jnp.zeros((HIDDEN_DIM, INPUT_PAD), f32).at[:, :INPUT_DIM].set(params["w_d3"])
    b_d3 = jnp.zeros((1, INPUT_PAD), f32).at[:, :INPUT_DIM].set(params["b_d3"])
    w_ml = jnp.concatenate([params["w_mu"], params["w_lv"]], axis=1)
    b_ml = jnp.concatenate([params["b_mu"], params["b_lv"]], axis=1)
    return dict(
        w_e1=w_e1.astype(bf16), b_e1=params["b_e1"],
        w_e2=params["w_e2"].astype(bf16), b_e2=params["b_e2"],
        w_ml=w_ml.astype(bf16), b_ml=b_ml,
        w_d1=params["w_d1"].astype(bf16), b_d1=params["b_d1"],
        w_d2=params["w_d2"].astype(bf16), b_d2=params["b_d2"],
        w_d3=w_d3.astype(bf16), b_d3=b_d3,
    )


def vae_forward(x, eps, kp, *, block_b=256):
    """Fused VAE forward.

    Args:
      x:   [B, INPUT_DIM] f32 flattened images.
      eps: [B, LATENT_DIM] f32 standard-normal noise (the torch.randn_like
           draw of `reparameterize`, made deterministic by drawing it outside).
      kp:  output of prepare_kernel_params().

    Returns:
      (reconstructed [B, INPUT_DIM] f32, mu [B, LATENT_DIM] f32,
       logvar [B, LATENT_DIM] f32)
    """
    B = x.shape[0]
    # Pad batch to a multiple of 8; tile it at block_b rows once it is large
    # enough so x/recon tiles pipeline behind the matmuls while the
    # constant-index weight blocks stay resident in VMEM.
    Bp = _round_up(B, 8)
    if Bp >= block_b:
        tb = block_b
        Bp = _round_up(Bp, tb)
    else:
        tb = Bp

    # Pad + cast activations (bf16 x with zero-padded lanes; padded batch rows
    # are zeros and are sliced off at the end).
    x_p = (jnp.zeros((Bp, INPUT_PAD), jnp.float32)
           .at[:B, :INPUT_DIM].set(x).astype(jnp.bfloat16))
    eps_p = jnp.zeros((Bp, LATENT_DIM), jnp.float32).at[:B].set(eps)

    weight_args = (
        kp["w_e1"], kp["b_e1"], kp["w_e2"], kp["b_e2"],
        kp["w_ml"], kp["b_ml"],
        kp["w_d1"], kp["b_d1"], kp["w_d2"], kp["b_d2"], kp["w_d3"], kp["b_d3"],
    )

    batch_spec = lambda shape: pl.BlockSpec(shape, lambda i: (i, 0))
    const_spec = lambda arr: pl.BlockSpec(arr.shape, lambda i: (0, 0))

    in_specs = [batch_spec((tb, INPUT_PAD)), batch_spec((tb, LATENT_DIM))]
    in_specs += [const_spec(w) for w in weight_args]
    out_specs = (batch_spec((tb, INPUT_PAD)), batch_spec((tb, STATS_DIM)))

    # Advisory cost estimate for XLA's scheduler.
    matmul_elems = (INPUT_PAD * HIDDEN_DIM + HIDDEN_DIM * HALF_HIDDEN
                    + HALF_HIDDEN * STATS_DIM + LATENT_DIM * HALF_HIDDEN
                    + HALF_HIDDEN * HIDDEN_DIM + HIDDEN_DIM * INPUT_PAD)
    weight_bytes = (2 * matmul_elems
                    + 4 * (2 * HIDDEN_DIM + 2 * HALF_HIDDEN + STATS_DIM + INPUT_PAD))
    act_bytes = Bp * (2 * INPUT_PAD + 4 * LATENT_DIM + 4 * INPUT_PAD + 4 * STATS_DIM)
    cost = pl.CostEstimate(
        flops=2 * Bp * matmul_elems,
        transcendentals=Bp * (LATENT_DIM + INPUT_PAD),
        bytes_accessed=weight_bytes + act_bytes,
    )

    recon_p, stats = pl.pallas_call(
        _vae_kernel,
        out_shape=(
            jax.ShapeDtypeStruct((Bp, INPUT_PAD), jnp.float32),
            jax.ShapeDtypeStruct((Bp, STATS_DIM), jnp.float32),
        ),
        grid=(Bp // tb,),
        in_specs=in_specs,
        out_specs=out_specs,
        compiler_params=pltpu.CompilerParams(
            dimension_semantics=("parallel",),          # shards across v7x TCs
            vmem_limit_bytes=32 * 1024 * 1024,          # > v5e 16 MiB default
        ),
        cost_estimate=cost,
    )(x_p, eps_p, *weight_args)

    recon = recon_p[:B, :INPUT_DIM]
    mu = stats[:B, :LATENT_DIM]
    logvar = stats[:B, LATENT_DIM:]
    return recon, mu, logvar


def init_params(key):
    """Deterministic parameter init (uniform, PyTorch-Linear-style scaling).

    Weights are stored as [in_features, out_features] (already transposed
    relative to torch.nn.Linear.weight); all f32 at logical (unpadded) shapes.
    """
    dims = {
        "e1": (INPUT_DIM, HIDDEN_DIM),
        "e2": (HIDDEN_DIM, HALF_HIDDEN),
        "mu": (HALF_HIDDEN, LATENT_DIM),
        "lv": (HALF_HIDDEN, LATENT_DIM),
        "d1": (LATENT_DIM, HALF_HIDDEN),
        "d2": (HALF_HIDDEN, HIDDEN_DIM),
        "d3": (HIDDEN_DIM, INPUT_DIM),
    }
    params = {}
    for name, (fan_in, fan_out) in dims.items():
        key, kw, kb = jax.random.split(key, 3)
        bound = 1.0 / jnp.sqrt(fan_in)
        params[f"w_{name}"] = jax.random.uniform(
            kw, (fan_in, fan_out), jnp.float32, -bound, bound)
        params[f"b_{name}"] = jax.random.uniform(
            kb, (1, fan_out), jnp.float32, -bound, bound)
    return params


def vae_reference(x, eps, p):
    """Pure-JAX reference with the same bf16-matmul / f32-elementwise math."""
    bf16 = jnp.bfloat16

    def mm(a, w):
        return jnp.dot(a.astype(bf16), w.astype(bf16),
                       preferred_element_type=jnp.float32)

    h = jnp.maximum(mm(x, p["w_e1"]) + p["b_e1"], 0.0)
    h = jnp.maximum(mm(h, p["w_e2"]) + p["b_e2"], 0.0)
    mu = mm(h, p["w_mu"]) + p["b_mu"]
    logvar = mm(h, p["w_lv"]) + p["b_lv"]
    z = mu + eps * jnp.exp(0.5 * logvar)
    d = jnp.maximum(mm(z, p["w_d1"]) + p["b_d1"], 0.0)
    d = jnp.maximum(mm(d, p["w_d2"]) + p["b_d2"], 0.0)
    recon = jax.nn.sigmoid(mm(d, p["w_d3"]) + p["b_d3"])
    return recon, mu, logvar


if __name__ == "__main__":
    key = jax.random.PRNGKey(0)
    k_params, k_x, k_eps = jax.random.split(key, 3)

    batch = 8
    params = init_params(k_params)
    kparams = prepare_kernel_params(params)

    # Input: flattened FashionMNIST-style images in [0, 1).
    x = jax.random.uniform(k_x, (batch, INPUT_DIM), jnp.float32)
    # Deterministic stand-in for torch.randn_like in reparameterize().
    eps = jax.random.normal(k_eps, (batch, LATENT_DIM), jnp.float32)

    recon, mu, logvar = jax.block_until_ready(vae_forward(x, eps, kparams))

    recon_ref, mu_ref, logvar_ref = vae_reference(x, eps, params)
    assert recon.shape == (batch, INPUT_DIM)
    assert mu.shape == (batch, LATENT_DIM)
    assert logvar.shape == (batch, LATENT_DIM)
    # bf16 matmuls -> loosened tolerances (review note).
    assert jnp.allclose(recon, recon_ref, atol=1e-2, rtol=1e-2)
    assert jnp.allclose(mu, mu_ref, atol=1e-2, rtol=1e-2)
    assert jnp.allclose(logvar, logvar_ref, atol=1e-2, rtol=1e-2)

    print("KERNEL_OK")
</pallas_src>

<mosaic_0001>
module attributes {stable_mosaic.version = 11 : i64} {
  func.func @_vae_kernel(%arg0: i32, %arg1: memref<8x896xbf16, #tpu.memory_space<vmem>>, %arg2: memref<8x32xf32, #tpu.memory_space<vmem>>, %arg3: memref<896x512xbf16, #tpu.memory_space<vmem>>, %arg4: memref<1x512xf32, #tpu.memory_space<vmem>>, %arg5: memref<512x256xbf16, #tpu.memory_space<vmem>>, %arg6: memref<1x256xf32, #tpu.memory_space<vmem>>, %arg7: memref<256x64xbf16, #tpu.memory_space<vmem>>, %arg8: memref<1x64xf32, #tpu.memory_space<vmem>>, %arg9: memref<32x256xbf16, #tpu.memory_space<vmem>>, %arg10: memref<1x256xf32, #tpu.memory_space<vmem>>, %arg11: memref<256x512xbf16, #tpu.memory_space<vmem>>, %arg12: memref<1x512xf32, #tpu.memory_space<vmem>>, %arg13: memref<512x896xbf16, #tpu.memory_space<vmem>>, %arg14: memref<1x896xf32, #tpu.memory_space<vmem>>, %arg15: memref<8x896xf32, #tpu.memory_space<vmem>>, %arg16: memref<8x64xf32, #tpu.memory_space<vmem>>) attributes {dimension_semantics = [#tpu.dimension_semantics<parallel>], iteration_bounds = array<i64: 1>, scalar_prefetch = 0 : i64, scratch_operands = 0 : i64, tpu.core_type = #tpu.core_type<tc>, window_params = [{transform_indices = @transform_0, window_bounds = array<i64: 8, 896>}, {transform_indices = @transform_1, window_bounds = array<i64: 8, 32>}, {pipeline_mode = #tpu.pipeline_mode<synchronous>, transform_indices = @transform_2, window_bounds = array<i64: 896, 512>}, {pipeline_mode = #tpu.pipeline_mode<synchronous>, transform_indices = @transform_3, window_bounds = array<i64: 1, 512>}, {pipeline_mode = #tpu.pipeline_mode<synchronous>, transform_indices = @transform_4, window_bounds = array<i64: 512, 256>}, {pipeline_mode = #tpu.pipeline_mode<synchronous>, transform_indices = @transform_5, window_bounds = array<i64: 1, 256>}, {pipeline_mode = #tpu.pipeline_mode<synchronous>, transform_indices = @transform_6, window_bounds = array<i64: 256, 64>}, {pipeline_mode = #tpu.pipeline_mode<synchronous>, transform_indices = @transform_7, window_bounds = array<i64: 1, 64>}, {pipeline_mode = #tpu.pipeline_mode<synchronous>, transform_indices = @transform_8, window_bounds = array<i64: 32, 256>}, {pipeline_mode = #tpu.pipeline_mode<synchronous>, transform_indices = @transform_9, window_bounds = array<i64: 1, 256>}, {pipeline_mode = #tpu.pipeline_mode<synchronous>, transform_indices = @transform_10, window_bounds = array<i64: 256, 512>}, {pipeline_mode = #tpu.pipeline_mode<synchronous>, transform_indices = @transform_11, window_bounds = array<i64: 1, 512>}, {pipeline_mode = #tpu.pipeline_mode<synchronous>, transform_indices = @transform_12, window_bounds = array<i64: 512, 896>}, {pipeline_mode = #tpu.pipeline_mode<synchronous>, transform_indices = @transform_13, window_bounds = array<i64: 1, 896>}, {transform_indices = @transform_14, window_bounds = array<i64: 8, 896>}, {transform_indices = @transform_15, window_bounds = array<i64: 8, 64>}]} {
    %c0 = arith.constant 0 : index
    %c0_0 = arith.constant 0 : index
    %0 = vector.load %arg1[%c0, %c0_0] : memref<8x896xbf16, #tpu.memory_space<vmem>>, vector<8x896xbf16>
    %c0_1 = arith.constant 0 : index
    %c0_2 = arith.constant 0 : index
    %1 = vector.load %arg3[%c0_1, %c0_2] : memref<896x512xbf16, #tpu.memory_space<vmem>>, vector<896x512xbf16>
    %cst = arith.constant dense<0.000000e+00> : vector<8x512xf32>
    %2 = tpu.matmul %0, %1, %cst {dimension_numbers = #tpu.dot_dimension_numbers<[1], [0], [0], [1], [0, 0, 1, 1], [], []>} : vector<8x896xbf16>, vector<896x512xbf16>, vector<8x512xf32> -> vector<8x512xf32>
    %c0_3 = arith.constant 0 : index
    %c0_4 = arith.constant 0 : index
    %3 = vector.load %arg4[%c0_3, %c0_4] : memref<1x512xf32, #tpu.memory_space<vmem>>, vector<1x512xf32>
    %4 = vector.broadcast %3 : vector<1x512xf32> to vector<8x512xf32>
    %5 = arith.addf %2, %4 : vector<8x512xf32>
    %cst_5 = arith.constant 0.000000e+00 : f32
    %6 = vector.broadcast %cst_5 : f32 to vector<8x512xf32>
    %7 = arith.maximumf %5, %6 : vector<8x512xf32>
    %8 = arith.truncf %7 : vector<8x512xf32> to vector<8x512xbf16>
    %c0_6 = arith.constant 0 : index
    %c0_7 = arith.constant 0 : index
    %9 = vector.load %arg5[%c0_6, %c0_7] : memref<512x256xbf16, #tpu.memory_space<vmem>>, vector<512x256xbf16>
    %cst_8 = arith.constant dense<0.000000e+00> : vector<8x256xf32>
    %10 = tpu.matmul %8, %9, %cst_8 {dimension_numbers = #tpu.dot_dimension_numbers<[1], [0], [0], [1], [0, 0, 1, 1], [], []>} : vector<8x512xbf16>, vector<512x256xbf16>, vector<8x256xf32> -> vector<8x256xf32>
    %c0_9 = arith.constant 0 : index
    %c0_10 = arith.constant 0 : index
    %11 = vector.load %arg6[%c0_9, %c0_10] : memref<1x256xf32, #tpu.memory_space<vmem>>, vector<1x256xf32>
    %12 = vector.broadcast %11 : vector<1x256xf32> to vector<8x256xf32>
    %13 = arith.addf %10, %12 : vector<8x256xf32>
    %cst_11 = arith.constant 0.000000e+00 : f32
    %14 = vector.broadcast %cst_11 : f32 to vector<8x256xf32>
    %15 = arith.maximumf %13, %14 : vector<8x256xf32>
    %16 = arith.truncf %15 : vector<8x256xf32> to vector<8x256xbf16>
    %c0_12 = arith.constant 0 : index
    %c0_13 = arith.constant 0 : index
    %17 = vector.load %arg7[%c0_12, %c0_13] : memref<256x64xbf16, #tpu.memory_space<vmem>>, vector<256x64xbf16>
    %cst_14 = arith.constant dense<0.000000e+00> : vector<8x64xf32>
    %18 = tpu.matmul %16, %17, %cst_14 {dimension_numbers = #tpu.dot_dimension_numbers<[1], [0], [0], [1], [0, 0, 1, 1], [], []>} : vector<8x256xbf16>, vector<256x64xbf16>, vector<8x64xf32> -> vector<8x64xf32>
    %c0_15 = arith.constant 0 : index
    %c0_16 = arith.constant 0 : index
    %19 = vector.load %arg8[%c0_15, %c0_16] : memref<1x64xf32, #tpu.memory_space<vmem>>, vector<1x64xf32>
    %20 = vector.broadcast %19 : vector<1x64xf32> to vector<8x64xf32>
    %21 = arith.addf %18, %20 : vector<8x64xf32>
    %c0_17 = arith.constant 0 : index
    %c0_18 = arith.constant 0 : index
    %22 = vector.load %arg16[%c0_17, %c0_18] : memref<8x64xf32, #tpu.memory_space<vmem>>, vector<8x64xf32>
    tpu.vector_store %arg16[%c0_17, %c0_18], %21 {strides = array<i32>} : memref<8x64xf32, #tpu.memory_space<vmem>>, vector<8x64xf32>,
    %23 = vector.extract_strided_slice %21 {offsets = [0, 0], sizes = [8, 32], strides = [1, 1]} : vector<8x64xf32> to vector<8x32xf32>
    %24 = vector.extract_strided_slice %21 {offsets = [0, 32], sizes = [8, 32], strides = [1, 1]} : vector<8x64xf32> to vector<8x32xf32>
    %c0_19 = arith.constant 0 : index
    %c0_20 = arith.constant 0 : index
    %25 = vector.load %arg2[%c0_19, %c0_20] : memref<8x32xf32, #tpu.memory_space<vmem>>, vector<8x32xf32>
    %cst_21 = arith.constant 5.000000e-01 : f32
    %26 = vector.broadcast %cst_21 : f32 to vector<8x32xf32>
    %27 = arith.mulf %26, %24 : vector<8x32xf32>
    %28 = math.exp %27 : vector<8x32xf32>
    %29 = arith.mulf %25, %28 : vector<8x32xf32>
    %30 = arith.addf %23, %29 : vector<8x32xf32>
    %31 = arith.truncf %30 : vector<8x32xf32> to vector<8x32xbf16>
    %c0_22 = arith.constant 0 : index
    %c0_23 = arith.constant 0 : index
    %32 = vector.load %arg9[%c0_22, %c0_23] : memref<32x256xbf16, #tpu.memory_space<vmem>>, vector<32x256xbf16>
    %cst_24 = arith.constant dense<0.000000e+00> : vector<8x256xf32>
    %33 = tpu.matmul %31, %32, %cst_24 {dimension_numbers = #tpu.dot_dimension_numbers<[1], [0], [0], [1], [0, 0, 1, 1], [], []>} : vector<8x32xbf16>, vector<32x256xbf16>, vector<8x256xf32> -> vector<8x256xf32>
    %c0_25 = arith.constant 0 : index
    %c0_26 = arith.constant 0 : index
    %34 = vector.load %arg10[%c0_25, %c0_26] : memref<1x256xf32, #tpu.memory_space<vmem>>, vector<1x256xf32>
    %35 = vector.broadcast %34 : vector<1x256xf32> to vector<8x256xf32>
    %36 = arith.addf %33, %35 : vector<8x256xf32>
    %cst_27 = arith.constant 0.000000e+00 : f32
    %37 = vector.broadcast %cst_27 : f32 to vector<8x256xf32>
    %38 = arith.maximumf %36, %37 : vector<8x256xf32>
    %39 = arith.truncf %38 : vector<8x256xf32> to vector<8x256xbf16>
    %c0_28 = arith.constant 0 : index
    %c0_29 = arith.constant 0 : index
    %40 = vector.load %arg11[%c0_28, %c0_29] : memref<256x512xbf16, #tpu.memory_space<vmem>>, vector<256x512xbf16>
    %cst_30 = arith.constant dense<0.000000e+00> : vector<8x512xf32>
    %41 = tpu.matmul %39, %40, %cst_30 {dimension_numbers = #tpu.dot_dimension_numbers<[1], [0], [0], [1], [0, 0, 1, 1], [], []>} : vector<8x256xbf16>, vector<256x512xbf16>, vector<8x512xf32> -> vector<8x512xf32>
    %c0_31 = arith.constant 0 : index
    %c0_32 = arith.constant 0 : index
    %42 = vector.load %arg12[%c0_31, %c0_32] : memref<1x512xf32, #tpu.memory_space<vmem>>, vector<1x512xf32>
    %43 = vector.broadcast %42 : vector<1x512xf32> to vector<8x512xf32>
    %44 = arith.addf %41, %43 : vector<8x512xf32>
    %cst_33 = arith.constant 0.000000e+00 : f32
    %45 = vector.broadcast %cst_33 : f32 to vector<8x512xf32>
    %46 = arith.maximumf %44, %45 : vector<8x512xf32>
    %47 = arith.truncf %46 : vector<8x512xf32> to vector<8x512xbf16>
    %c0_34 = arith.constant 0 : index
    %c0_35 = arith.constant 0 : index
    %48 = vector.load %arg13[%c0_34, %c0_35] : memref<512x896xbf16, #tpu.memory_space<vmem>>, vector<512x896xbf16>
    %cst_36 = arith.constant dense<0.000000e+00> : vector<8x896xf32>
    %49 = tpu.matmul %47, %48, %cst_36 {dimension_numbers = #tpu.dot_dimension_numbers<[1], [0], [0], [1], [0, 0, 1, 1], [], []>} : vector<8x512xbf16>, vector<512x896xbf16>, vector<8x896xf32> -> vector<8x896xf32>
    %c0_37 = arith.constant 0 : index
    %c0_38 = arith.constant 0 : index
    %50 = vector.load %arg14[%c0_37, %c0_38] : memref<1x896xf32, #tpu.memory_space<vmem>>, vector<1x896xf32>
    %51 = vector.broadcast %50 : vector<1x896xf32> to vector<8x896xf32>
    %52 = arith.addf %49, %51 : vector<8x896xf32>
    %53 = arith.negf %52 : vector<8x896xf32>
    %54 = math.exp %53 : vector<8x896xf32>
    %cst_39 = arith.constant 1.000000e+00 : f32
    %55 = vector.broadcast %cst_39 : f32 to vector<8x896xf32>
    %56 = arith.addf %55, %54 : vector<8x896xf32>
    %57 = arith.divf %55, %56 : vector<8x896xf32>
    %c0_40 = arith.constant 0 : index
    %c0_41 = arith.constant 0 : index
    %58 = vector.load %arg15[%c0_40, %c0_41] : memref<8x896xf32, #tpu.memory_space<vmem>>, vector<8x896xf32>
    tpu.vector_store %arg15[%c0_40, %c0_41], %57 {strides = array<i32>} : memref<8x896xf32, #tpu.memory_space<vmem>>, vector<8x896xf32>,
    return
  }
  func.func @transform_0(%arg0: i32) -> (i32, i32) {
    %c0_i32 = arith.constant 0 : i32
    %c0_i32_0 = arith.constant 0 : i32
    return %arg0, %c0_i32 : i32, i32
  }
  func.func @transform_1(%arg0: i32) -> (i32, i32) {
    %c0_i32 = arith.constant 0 : i32
    %c0_i32_0 = arith.constant 0 : i32
    return %arg0, %c0_i32 : i32, i32
  }
  func.func @transform_2(%arg0: i32) -> (i32, i32) {
    %c0_i32 = arith.constant 0 : i32
    %c0_i32_0 = arith.constant 0 : i32
    %c0_i32_1 = arith.constant 0 : i32
    return %c0_i32, %c0_i32_0 : i32, i32
  }
  func.func @transform_3(%arg0: i32) -> (i32, i32) {
    %c0_i32 = arith.constant 0 : i32
    %c0_i32_0 = arith.constant 0 : i32
    %c0_i32_1 = arith.constant 0 : i32
    return %c0_i32, %c0_i32_0 : i32, i32
  }
  func.func @transform_4(%arg0: i32) -> (i32, i32) {
    %c0_i32 = arith.constant 0 : i32
    %c0_i32_0 = arith.constant 0 : i32
    %c0_i32_1 = arith.constant 0 : i32
    return %c0_i32, %c0_i32_0 : i32, i32
  }
  func.func @transform_5(%arg0: i32) -> (i32, i32) {
    %c0_i32 = arith.constant 0 : i32
    %c0_i32_0 = arith.constant 0 : i32
    %c0_i32_1 = arith.constant 0 : i32
    return %c0_i32, %c0_i32_0 : i32, i32
  }
  func.func @transform_6(%arg0: i32) -> (i32, i32) {
    %c0_i32 = arith.constant 0 : i32
    %c0_i32_0 = arith.constant 0 : i32
    %c0_i32_1 = arith.constant 0 : i32
    return %c0_i32, %c0_i32_0 : i32, i32
  }
  func.func @transform_7(%arg0: i32) -> (i32, i32) {
    %c0_i32 = arith.constant 0 : i32
    %c0_i32_0 = arith.constant 0 : i32
    %c0_i32_1 = arith.constant 0 : i32
    return %c0_i32, %c0_i32_0 : i32, i32
  }
  func.func @transform_8(%arg0: i32) -> (i32, i32) {
    %c0_i32 = arith.constant 0 : i32
    %c0_i32_0 = arith.constant 0 : i32
    %c0_i32_1 = arith.constant 0 : i32
    return %c0_i32, %c0_i32_0 : i32, i32
  }
  func.func @transform_9(%arg0: i32) -> (i32, i32) {
    %c0_i32 = arith.constant 0 : i32
    %c0_i32_0 = arith.constant 0 : i32
    %c0_i32_1 = arith.constant 0 : i32
    return %c0_i32, %c0_i32_0 : i32, i32
  }
  func.func @transform_10(%arg0: i32) -> (i32, i32) {
    %c0_i32 = arith.constant 0 : i32
    %c0_i32_0 = arith.constant 0 : i32
    %c0_i32_1 = arith.constant 0 : i32
    return %c0_i32, %c0_i32_0 : i32, i32
  }
  func.func @transform_11(%arg0: i32) -> (i32, i32) {
    %c0_i32 = arith.constant 0 : i32
    %c0_i32_0 = arith.constant 0 : i32
    %c0_i32_1 = arith.constant 0 : i32
    return %c0_i32, %c0_i32_0 : i32, i32
  }
  func.func @transform_12(%arg0: i32) -> (i32, i32) {
    %c0_i32 = arith.constant 0 : i32
    %c0_i32_0 = arith.constant 0 : i32
    %c0_i32_1 = arith.constant 0 : i32
    return %c0_i32, %c0_i32_0 : i32, i32
  }
  func.func @transform_13(%arg0: i32) -> (i32, i32) {
    %c0_i32 = arith.constant 0 : i32
    %c0_i32_0 = arith.constant 0 : i32
    %c0_i32_1 = arith.constant 0 : i32
    return %c0_i32, %c0_i32_0 : i32, i32
  }
  func.func @transform_14(%arg0: i32) -> (i32, i32) {
    %c0_i32 = arith.constant 0 : i32
    %c0_i32_0 = arith.constant 0 : i32
    return %arg0, %c0_i32 : i32, i32
  }
  func.func @transform_15(%arg0: i32) -> (i32, i32) {
    %c0_i32 = arith.constant 0 : i32
    %c0_i32_0 = arith.constant 0 : i32
    return %arg0, %c0_i32 : i32, i32
  }
}

</mosaic_0001>

<llo_original>
// kernel: tpu_custom_call.1
$region0: #{tpu_custom_call.1}
  #allocation0 [shape = 'u32[]', space=smem, size = 0x4, offset = 0x4, fixed_abs, tag = 'smem constant byte address 0x4 - core index']
  #allocation1 [shape = 'u32[144,128]{1,0:T(1,128)}', space=vmem, size = 0x12000, scoped, tag = 'internal scratch']
  %s0 = inlined_call_operand.vmem [shape: bf16[8,896], index: 0, kind: input, shape index: {}]
  %s1 = inlined_call_operand.vmem [shape: f32[8,32], index: 1, kind: input, shape index: {}]
  %s2 = inlined_call_operand.hbm [shape: bf16[896,512], index: 2, kind: input, shape index: {}]
  %s3 = inlined_call_operand.vmem [shape: f32[1,512], index: 3, kind: input, shape index: {}]
  %s4 = inlined_call_operand.hbm [shape: bf16[512,256], index: 4, kind: input, shape index: {}]
  %s5 = inlined_call_operand.vmem [shape: f32[1,256], index: 5, kind: input, shape index: {}]
  %s6 = inlined_call_operand.vmem [shape: bf16[256,64], index: 6, kind: input, shape index: {}]
  %s7 = inlined_call_operand.vmem [shape: f32[1,64], index: 7, kind: input, shape index: {}]
  %s8 = inlined_call_operand.vmem [shape: bf16[32,256], index: 8, kind: input, shape index: {}]
  %s9 = inlined_call_operand.vmem [shape: f32[1,256], index: 9, kind: input, shape index: {}]
  %s10 = inlined_call_operand.hbm [shape: bf16[256,512], index: 10, kind: input, shape index: {}]
  %s11 = inlined_call_operand.vmem [shape: f32[1,512], index: 11, kind: input, shape index: {}]
  %s12 = inlined_call_operand.hbm [shape: bf16[512,896], index: 12, kind: input, shape index: {}]
  %s13 = inlined_call_operand.vmem [shape: f32[1,896], index: 13, kind: input, shape index: {}]
  %s14 = inlined_call_operand.hbm [shape: f32[8,896], index: 14, kind: output, shape index: {0}]
  %s15 = inlined_call_operand.hbm [shape: f32[8,64], index: 15, kind: output, shape index: {1}]
  %16 = xla_tuple %s14, %s15
  %s17 = sld [smem:[#allocation0]]
  $region90: #{tpu_custom_call.1} parent=0
    _
  %s19 = ssub.s32 1, %s17
  %s20 = scalar_select 0, %s19, %s17
  $region1: #{tpu_custom_call.1} parent=0
    #allocation2 [shape = 'u8[917504]{0}', space=vmem, size = 0xe0000, scoped, tag = 'input window, operand 2, single buffered']
    #allocation3 [shape = 's32[1]{0}', space=sflag, size = 0x4, scoped, tag = 'scoped memory for tpu_custom_call.1']
    #allocation4 [shape = 's32[1]{0}', space=sflag, size = 0x4, scoped, tag = 'scoped memory for tpu_custom_call.1']
    #allocation5 [shape = 'u8[262144]{0}', space=vmem, size = 0x40000, scoped, tag = 'input window, operand 4, single buffered']
    #allocation6 [shape = 's32[1]{0}', space=sflag, size = 0x4, scoped, tag = 'scoped memory for tpu_custom_call.1']
    #allocation7 [shape = 'u8[262144]{0}', space=vmem, size = 0x40000, scoped, tag = 'input window, operand 10, single buffered']
    #allocation8 [shape = 'u8[917504]{0}', space=vmem, size = 0xe0000, scoped, tag = 'input window, operand 12, single buffered']
    #allocation9 [shape = 's32[1]{0}', space=sflag, size = 0x4, scoped, tag = 'scoped memory for tpu_custom_call.1']
    #allocation10 [shape = 'u8[28672]{0}', space=vmem, size = 0x7000, scoped, tag = 'output window, operand 0, single buffered']
    #allocation11 [shape = 'u8[4096]{0}', space=vmem, size = 0x1000, scoped, tag = 'output window, operand 1, single buffered']
    #allocation12 [shape = 's32[1]{0}', space=sflag, size = 0x4, scoped, tag = 'scoped memory for tpu_custom_call.1']
    %21 = vsyncpa [#allocation3], 0
    %22 = vsyncpa [#allocation6], 0
    %23 = vsyncpa [#allocation9], 0
    %24 = vsyncpa [#allocation4], 0
    %25 = vsyncpa [#allocation12], 0
    // Predicated region
    $region2: #{tpu_custom_call.1} parent=1 // pred_check
      _
    $region3: #{tpu_custom_call.1} parent=1 // pred_check_branch
      %27 = sbr.rel (0) target = $region5
    $region4: #{tpu_custom_call.1} parent=1 // pred_region
      _
    $region5: #{tpu_custom_call.1} parent=1 // pred_fallthru
      _
    // Predicated region
    $region6: #{tpu_custom_call.1} parent=1 // pred_check
      _
    $region7: #{tpu_custom_call.1} parent=1 // pred_check_branch
      %29 = sbr.rel (0) target = $region9
    $region8: #{tpu_custom_call.1} parent=1 // pred_region
      _
    $region9: #{tpu_custom_call.1} parent=1 // pred_fallthru
      _
    // Predicated region
    $region10: #{tpu_custom_call.1} parent=1 // pred_check
      _
    $region11: #{tpu_custom_call.1} parent=1 // pred_check_branch
      %31 = sbr.rel (0) target = $region13
    $region12: #{tpu_custom_call.1} parent=1 // pred_region
      %s33 = ssub.s32 28672, 28672
      %34 = vsyncadd [#allocation3], %s33
      %s35 = sshll.u32 [#allocation2], 4
      %s36 = int_to_ptr.vmem [resolvable:$true] %s35
      %41 = dma.hbm_to_vmem [thread:$0]  %s2, 28672, %s36, [#allocation3], 256, 256, 16
    $region13: #{tpu_custom_call.1} parent=1 // pred_fallthru
      _
    // Predicated region
    $region14: #{tpu_custom_call.1} parent=1 // pred_check
      _
    $region15: #{tpu_custom_call.1} parent=1 // pred_check_branch
      %43 = sbr.rel (0) target = $region17
    $region16: #{tpu_custom_call.1} parent=1 // pred_region
      _
    $region17: #{tpu_custom_call.1} parent=1 // pred_fallthru
      _
    // Predicated region
    $region18: #{tpu_custom_call.1} parent=1 // pred_check
      _
    $region19: #{tpu_custom_call.1} parent=1 // pred_check_branch
      %45 = sbr.rel (0) target = $region21
    $region20: #{tpu_custom_call.1} parent=1 // pred_region
      %s47 = ssub.s32 8192, 8192
      %48 = vsyncadd [#allocation6], %s47
      %s49 = sshll.u32 [#allocation5], 4
      %s50 = int_to_ptr.vmem [resolvable:$true] %s49
      %55 = dma.hbm_to_vmem [thread:$0]  %s4, 8192, %s50, [#allocation6], 128, 128, 8
    $region21: #{tpu_custom_call.1} parent=1 // pred_fallthru
      _
    // Predicated region
    $region22: #{tpu_custom_call.1} parent=1 // pred_check
      _
    $region23: #{tpu_custom_call.1} parent=1 // pred_check_branch
      %57 = sbr.rel (0) target = $region25
    $region24: #{tpu_custom_call.1} parent=1 // pred_region
      _
    $region25: #{tpu_custom_call.1} parent=1 // pred_fallthru
      _
    // Predicated region
    $region26: #{tpu_custom_call.1} parent=1 // pred_check
      _
    $region27: #{tpu_custom_call.1} parent=1 // pred_check_branch
      %59 = sbr.rel (0) target = $region29
    $region28: #{tpu_custom_call.1} parent=1 // pred_region
      _
    $region29: #{tpu_custom_call.1} parent=1 // pred_fallthru
      _
    // Predicated region
    $region30: #{tpu_custom_call.1} parent=1 // pred_check
      _
    $region31: #{tpu_custom_call.1} parent=1 // pred_check_branch
      %61 = sbr.rel (0) target = $region33
    $region32: #{tpu_custom_call.1} parent=1 // pred_region
      _
    $region33: #{tpu_custom_call.1} parent=1 // pred_fallthru
      _
    // Predicated region
    $region34: #{tpu_custom_call.1} parent=1 // pred_check
      _
    $region35: #{tpu_custom_call.1} parent=1 // pred_check_branch
      %63 = sbr.rel (0) target = $region37
    $region36: #{tpu_custom_call.1} parent=1 // pred_region
      _
    $region37: #{tpu_custom_call.1} parent=1 // pred_fallthru
      _
    // Predicated region
    $region38: #{tpu_custom_call.1} parent=1 // pred_check
      _
    $region39: #{tpu_custom_call.1} parent=1 // pred_check_branch
      %65 = sbr.rel (0) target = $region41
    $region40: #{tpu_custom_call.1} parent=1 // pred_region
      _
    $region41: #{tpu_custom_call.1} parent=1 // pred_fallthru
      _
    // Predicated region
    $region42: #{tpu_custom_call.1} parent=1 // pred_check
      _
    $region43: #{tpu_custom_call.1} parent=1 // pred_check_branch
      %67 = sbr.rel (0) target = $region45
    $region44: #{tpu_custom_call.1} parent=1 // pred_region
      %s69 = ssub.s32 8192, 8192
      %70 = vsyncadd [#allocation6], %s69
      %s71 = sshll.u32 [#allocation7], 4
      %s72 = int_to_ptr.vmem [resolvable:$true] %s71
      %77 = dma.hbm_to_vmem [thread:$0]  %s10, 8192, %s72, [#allocation6], 256, 256, 16
    $region45: #{tpu_custom_call.1} parent=1 // pred_fallthru
      _
    // Predicated region
    $region46: #{tpu_custom_call.1} parent=1 // pred_check
      _
    $region47: #{tpu_custom_call.1} parent=1 // pred_check_branch
      %79 = sbr.rel (0) target = $region49
    $region48: #{tpu_custom_call.1} parent=1 // pred_region
      _
    $region49: #{tpu_custom_call.1} parent=1 // pred_fallthru
      _
    // Predicated region
    $region50: #{tpu_custom_call.1} parent=1 // pred_check
      _
    $region51: #{tpu_custom_call.1} parent=1 // pred_check_branch
      %81 = sbr.rel (0) target = $region53
    $region52: #{tpu_custom_call.1} parent=1 // pred_region
      %s83 = ssub.s32 28672, 28672
      %84 = vsyncadd [#allocation9], %s83
      %s85 = sshll.u32 [#allocation8], 4
      %s86 = int_to_ptr.vmem [resolvable:$true] %s85
      %91 = dma.hbm_to_vmem [thread:$0]  %s12, 28672, %s86, [#allocation9], 448, 448, 28
    $region53: #{tpu_custom_call.1} parent=1 // pred_fallthru
      _
    // Predicated region
    $region54: #{tpu_custom_call.1} parent=1 // pred_check
      _
    $region55: #{tpu_custom_call.1} parent=1 // pred_check_branch
      %93 = sbr.rel (0) target = $region57
    $region56: #{tpu_custom_call.1} parent=1 // pred_region
      _
    $region57: #{tpu_custom_call.1} parent=1 // pred_fallthru
      _
    // Predicated region
    $region58: #{tpu_custom_call.1} parent=1 // pred_check
      _
    $region59: #{tpu_custom_call.1} parent=1 // pred_check_branch
      %95 = sbr.rel (0) target = $region61
    $region60: #{tpu_custom_call.1} parent=1 // pred_region
      %96 = dma.done [#allocation3], 28672
    $region61: #{tpu_custom_call.1} parent=1 // pred_fallthru
      _
    // Predicated region
    $region62: #{tpu_custom_call.1} parent=1 // pred_check
      _
    $region63: #{tpu_custom_call.1} parent=1 // pred_check_branch
      %98 = sbr.rel (0) target = $region65
    $region64: #{tpu_custom_call.1} parent=1 // pred_region
      %99 = dma.done [#allocation6], 8192
    $region65: #{tpu_custom_call.1} parent=1 // pred_fallthru
      _
    // Predicated region
    $region66: #{tpu_custom_call.1} parent=1 // pred_check
      _
    $region67: #{tpu_custom_call.1} parent=1 // pred_check_branch
      %101 = sbr.rel (0) target = $region69
    $region68: #{tpu_custom_call.1} parent=1 // pred_region
      %102 = dma.done [#allocation6], 8192
    $region69: #{tpu_custom_call.1} parent=1 // pred_fallthru
      _
    // Predicated region
    $region70: #{tpu_custom_call.1} parent=1 // pred_check
      _
    $region71: #{tpu_custom_call.1} parent=1 // pred_check_branch
      %104 = sbr.rel (0) target = $region73
    $region72: #{tpu_custom_call.1} parent=1 // pred_region
      %105 = dma.done [#allocation9], 28672
    $region73: #{tpu_custom_call.1} parent=1 // pred_fallthru
      _
    %v107 = vld [vmem:[%s0] sm:$0xff]
    %v108 = vld [vmem:[%s0 + $0x8] sm:$0xff]
    %v109 = vld [vmem:[%s0 + $0x10] sm:$0xff]
    %v110 = vld [vmem:[%s0 + $0x18] sm:$0xf]
    %v111 = vld [vmem:[#allocation2] sm:$0xff]
    %v112 = vld [vmem:[#allocation2 + $0x8] sm:$0xff]
    %v113 = vld [vmem:[#allocation2 + $0x10] sm:$0xff]
    %v114 = vld [vmem:[#allocation2 + $0x18] sm:$0xff]
    %v115 = vld [vmem:[#allocation2 + $0x20] sm:$0xff]
    %v116 = vld [vmem:[#allocation2 + $0x28] sm:$0xff]
    %v117 = vld [vmem:[#allocation2 + $0x30] sm:$0xff]
    %v118 = vld [vmem:[#allocation2 + $0x38] sm:$0xff]
    %v119 = vld [vmem:[#allocation2 + $0x40] sm:$0xff]
    %v120 = vld [vmem:[#allocation2 + $0x48] sm:$0xff]
    %v121 = vld [vmem:[#allocation2 + $0x50] sm:$0xff]
    %v122 = vld [vmem:[#allocation2 + $0x58] sm:$0xff]
    %v123 = vld [vmem:[#allocation2 + $0x60] sm:$0xff]
    %v124 = vld [vmem:[#allocation2 + $0x68] sm:$0xff]
    %v125 = vld [vmem:[#allocation2 + $0x70] sm:$0xff]
    %v126 = vld [vmem:[#allocation2 + $0x78] sm:$0xff]
    %v127 = vld [vmem:[#allocation2 + $0x80] sm:$0xff]
    %v128 = vld [vmem:[#allocation2 + $0x88] sm:$0xff]
    %v129 = vld [vmem:[#allocation2 + $0x90] sm:$0xff]
    %v130 = vld [vmem:[#allocation2 + $0x98] sm:$0xff]
    %v131 = vld [vmem:[#allocation2 + $0xa0] sm:$0xff]
    %v132 = vld [vmem:[#allocation2 + $0xa8] sm:$0xff]
    %v133 = vld [vmem:[#allocation2 + $0xb0] sm:$0xff]
    %v134 = vld [vmem:[#allocation2 + $0xb8] sm:$0xff]
    %v135 = vld [vmem:[#allocation2 + $0xc0] sm:$0xff]
    %v136 = vld [vmem:[#allocation2 + $0xc8] sm:$0xff]
    %v137 = vld [vmem:[#allocation2 + $0xd0] sm:$0xff]
    %v138 = vld [vmem:[#allocation2 + $0xd8] sm:$0xff]
    %v139 = vld [vmem:[#allocation2 + $0xe0] sm:$0xff]
    %v140 = vld [vmem:[#allocation2 + $0xe8] sm:$0xff]
    %v141 = vld [vmem:[#allocation2 + $0xf0] sm:$0xff]
    %v142 = vld [vmem:[#allocation2 + $0xf8] sm:$0xff]
    %v143 = vld [vmem:[#allocation2 + $0x100] sm:$0xff]
    %v144 = vld [vmem:[#allocation2 + $0x108] sm:$0xff]
    %v145 = vld [vmem:[#allocation2 + $0x110] sm:$0xff]
    %v146 = vld [vmem:[#allocation2 + $0x118] sm:$0xff]
    %v147 = vld [vmem:[#allocation2 + $0x120] sm:$0xff]
    %v148 = vld [vmem:[#allocation2 + $0x128] sm:$0xff]
    %v149 = vld [vmem:[#allocation2 + $0x130] sm:$0xff]
    %v150 = vld [vmem:[#allocation2 + $0x138] sm:$0xff]
    %v151 = vld [vmem:[#allocation2 + $0x140] sm:$0xff]
    %v152 = vld [vmem:[#allocation2 + $0x148] sm:$0xff]
    %v153 = vld [vmem:[#allocation2 + $0x150] sm:$0xff]
    %v154 = vld [vmem:[#allocation2 + $0x158] sm:$0xff]
    %v155 = vld [vmem:[#allocation2 + $0x160] sm:$0xff]
    %v156 = vld [vmem:[#allocation2 + $0x168] sm:$0xff]
    %v157 = vld [vmem:[#allocation2 + $0x170] sm:$0xff]
    %v158 = vld [vmem:[#allocation2 + $0x178] sm:$0xff]
    %v159 = vld [vmem:[#allocation2 + $0x180] sm:$0xff]
    %v160 = vld [vmem:[#allocation2 + $0x188] sm:$0xff]
    %v161 = vld [vmem:[#allocation2 + $0x190] sm:$0xff]
    %v162 = vld [vmem:[#allocation2 + $0x198] sm:$0xff]
    %v163 = vld [vmem:[#allocation2 + $0x1a0] sm:$0xff]
    %v164 = vld [vmem:[#allocation2 + $0x1a8] sm:$0xff]
    %v165 = vld [vmem:[#allocation2 + $0x1b0] sm:$0xff]
    %v166 = vld [vmem:[#allocation2 + $0x1b8] sm:$0xff]
    %v167 = vld [vmem:[#allocation2 + $0x1c0] sm:$0xff]
    %v168 = vld [vmem:[#allocation2 + $0x1c8] sm:$0xff]
    %v169 = vld [vmem:[#allocation2 + $0x1d0] sm:$0xff]
    %v170 = vld [vmem:[#allocation2 + $0x1d8] sm:$0xff]
    %v171 = vld [vmem:[#allocation2 + $0x1e0] sm:$0xff]
    %v172 = vld [vmem:[#allocation2 + $0x1e8] sm:$0xff]
    %v173 = vld [vmem:[#allocation2 + $0x1f0] sm:$0xff]
    %v174 = vld [vmem:[#allocation2 + $0x1f8] sm:$0xff]
    %v175 = vld [vmem:[#allocation2 + $0x200] sm:$0xff]
    %v176 = vld [vmem:[#allocation2 + $0x208] sm:$0xff]
    %v177 = vld [vmem:[#allocation2 + $0x210] sm:$0xff]
    %v178 = vld [vmem:[#allocation2 + $0x218] sm:$0xff]
    %v179 = vld [vmem:[#allocation2 + $0x220] sm:$0xff]
    %v180 = vld [vmem:[#allocation2 + $0x228] sm:$0xff]
    %v181 = vld [vmem:[#allocation2 + $0x230] sm:$0xff]
    %v182 = vld [vmem:[#allocation2 + $0x238] sm:$0xff]
    %v183 = vld [vmem:[#allocation2 + $0x240] sm:$0xff]
    %v184 = vld [vmem:[#allocation2 + $0x248] sm:$0xff]
    %v185 = vld [vmem:[#allocation2 + $0x250] sm:$0xff]
    %v186 = vld [vmem:[#allocation2 + $0x258] sm:$0xff]
    %v187 = vld [vmem:[#allocation2 + $0x260] sm:$0xff]
    %v188 = vld [vmem:[#allocation2 + $0x268] sm:$0xff]
    %v189 = vld [vmem:[#allocation2 + $0x270] sm:$0xff]
    %v190 = vld [vmem:[#allocation2 + $0x278] sm:$0xff]
    %v191 = vld [vmem:[#allocation2 + $0x280] sm:$0xff]
    %v192 = vld [vmem:[#allocation2 + $0x288] sm:$0xff]
    %v193 = vld [vmem:[#allocation2 + $0x290] sm:$0xff]
    %v194 = vld [vmem:[#allocation2 + $0x298] sm:$0xff]
    %v195 = vld [vmem:[#allocation2 + $0x2a0] sm:$0xff]
    %v196 = vld [vmem:[#allocation2 + $0x2a8] sm:$0xff]
    %v197 = vld [vmem:[#allocation2 + $0x2b0] sm:$0xff]
    %v198 = vld [vmem:[#allocation2 + $0x2b8] sm:$0xff]
    %v199 = vld [vmem:[#allocation2 + $0x2c0] sm:$0xff]
    %v200 = vld [vmem:[#allocation2 + $0x2c8] sm:$0xff]
    %v201 = vld [vmem:[#allocation2 + $0x2d0] sm:$0xff]
    %v202 = vld [vmem:[#allocation2 + $0x2d8] sm:$0xff]
    %v203 = vld [vmem:[#allocation2 + $0x2e0] sm:$0xff]
    %v204 = vld [vmem:[#allocation2 + $0x2e8] sm:$0xff]
    %v205 = vld [vmem:[#allocation2 + $0x2f0] sm:$0xff]
    %v206 = vld [vmem:[#allocation2 + $0x2f8] sm:$0xff]
    %v207 = vld [vmem:[#allocation2 + $0x300] sm:$0xff]
    %v208 = vld [vmem:[#allocation2 + $0x308] sm:$0xff]
    %v209 = vld [vmem:[#allocation2 + $0x310] sm:$0xff]
    %v210 = vld [vmem:[#allocation2 + $0x318] sm:$0xff]
    %v211 = vld [vmem:[#allocation2 + $0x320] sm:$0xff]
    %v212 = vld [vmem:[#allocation2 + $0x328] sm:$0xff]
    %v213 = vld [vmem:[#allocation2 + $0x330] sm:$0xff]
    %v214 = vld [vmem:[#allocation2 + $0x338] sm:$0xff]
    %v215 = vld [vmem:[#allocation2 + $0x340] sm:$0xff]
    %v216 = vld [vmem:[#allocation2 + $0x348] sm:$0xff]
    %v217 = vld [vmem:[#allocation2 + $0x350] sm:$0xff]
    %v218 = vld [vmem:[#allocation2 + $0x358] sm:$0xff]
    %v219 = vld [vmem:[#allocation2 + $0x360] sm:$0xff]
    %v220 = vld [vmem:[#allocation2 + $0x368] sm:$0xff]
    %v221 = vld [vmem:[#allocation2 + $0x370] sm:$0xff]
    %v222 = vld [vmem:[#allocation2 + $0x378] sm:$0xff]
    %v223 = vld [vmem:[#allocation2 + $0x380] sm:$0xff]
    %v224 = vld [vmem:[#allocation2 + $0x388] sm:$0xff]
    %v225 = vld [vmem:[#allocation2 + $0x390] sm:$0xff]
    %v226 = vld [vmem:[#allocation2 + $0x398] sm:$0xff]
    %v227 = vld [vmem:[#allocation2 + $0x3a0] sm:$0xff]
    %v228 = vld [vmem:[#allocation2 + $0x3a8] sm:$0xff]
    %v229 = vld [vmem:[#allocation2 + $0x3b0] sm:$0xff]
    %v230 = vld [vmem:[#allocation2 + $0x3b8] sm:$0xff]
    %v231 = vld [vmem:[#allocation2 + $0x3c0] sm:$0xff]
    %v232 = vld [vmem:[#allocation2 + $0x3c8] sm:$0xff]
    %v233 = vld [vmem:[#allocation2 + $0x3d0] sm:$0xff]
    %v234 = vld [vmem:[#allocation2 + $0x3d8] sm:$0xff]
    %v235 = vld [vmem:[#allocation2 + $0x3e0] sm:$0xff]
    %v236 = vld [vmem:[#allocation2 + $0x3e8] sm:$0xff]
    %v237 = vld [vmem:[#allocation2 + $0x3f0] sm:$0xff]
    %v238 = vld [vmem:[#allocation2 + $0x3f8] sm:$0xff]
    %v239 = vld [vmem:[#allocation2 + $0x400] sm:$0xff]
    %v240 = vld [vmem:[#allocation2 + $0x408] sm:$0xff]
    %v241 = vld [vmem:[#allocation2 + $0x410] sm:$0xff]
    %v242 = vld [vmem:[#allocation2 + $0x418] sm:$0xff]
    %v243 = vld [vmem:[#allocation2 + $0x420] sm:$0xff]
    %v244 = vld [vmem:[#allocation2 + $0x428] sm:$0xff]
    %v245 = vld [vmem:[#allocation2 + $0x430] sm:$0xff]
    %v246 = vld [vmem:[#allocation2 + $0x438] sm:$0xff]
    %v247 = vld [vmem:[#allocation2 + $0x440] sm:$0xff]
    %v248 = vld [vmem:[#allocation2 + $0x448] sm:$0xff]
    %v249 = vld [vmem:[#allocation2 + $0x450] sm:$0xff]
    %v250 = vld [vmem:[#allocation2 + $0x458] sm:$0xff]
    %v251 = vld [vmem:[#allocation2 + $0x460] sm:$0xff]
    %v252 = vld [vmem:[#allocation2 + $0x468] sm:$0xff]
    %v253 = vld [vmem:[#allocation2 + $0x470] sm:$0xff]
    %v254 = vld [vmem:[#allocation2 + $0x478] sm:$0xff]
    %v255 = vld [vmem:[#allocation2 + $0x480] sm:$0xff]
    %v256 = vld [vmem:[#allocation2 + $0x488] sm:$0xff]
    %v257 = vld [vmem:[#allocation2 + $0x490] sm:$0xff]
    %v258 = vld [vmem:[#allocation2 + $0x498] sm:$0xff]
    %v259 = vld [vmem:[#allocation2 + $0x4a0] sm:$0xff]
    %v260 = vld [vmem:[#allocation2 + $0x4a8] sm:$0xff]
    %v261 = vld [vmem:[#allocation2 + $0x4b0] sm:$0xff]
    %v262 = vld [vmem:[#allocation2 + $0x4b8] sm:$0xff]
    %v263 = vld [vmem:[#allocation2 + $0x4c0] sm:$0xff]
    %v264 = vld [vmem:[#allocation2 + $0x4c8] sm:$0xff]
    %v265 = vld [vmem:[#allocation2 + $0x4d0] sm:$0xff]
    %v266 = vld [vmem:[#allocation2 + $0x4d8] sm:$0xff]
    %v267 = vld [vmem:[#allocation2 + $0x4e0] sm:$0xff]
    %v268 = vld [vmem:[#allocation2 + $0x4e8] sm:$0xff]
    %v269 = vld [vmem:[#allocation2 + $0x4f0] sm:$0xff]
    %v270 = vld [vmem:[#allocation2 + $0x4f8] sm:$0xff]
    %v271 = vld [vmem:[#allocation2 + $0x500] sm:$0xff]
    %v272 = vld [vmem:[#allocation2 + $0x508] sm:$0xff]
    %v273 = vld [vmem:[#allocation2 + $0x510] sm:$0xff]
    %v274 = vld [vmem:[#allocation2 + $0x518] sm:$0xff]
    %v275 = vld [vmem:[#allocation2 + $0x520] sm:$0xff]
    %v276 = vld [vmem:[#allocation2 + $0x528] sm:$0xff]
    %v277 = vld [vmem:[#allocation2 + $0x530] sm:$0xff]
    %v278 = vld [vmem:[#allocation2 + $0x538] sm:$0xff]
    %v279 = vld [vmem:[#allocation2 + $0x540] sm:$0xff]
    %v280 = vld [vmem:[#allocation2 + $0x548] sm:$0xff]
    %v281 = vld [vmem:[#allocation2 + $0x550] sm:$0xff]
    %v282 = vld [vmem:[#allocation2 + $0x558] sm:$0xff]
    %v283 = vld [vmem:[#allocation2 + $0x560] sm:$0xff]
    %v284 = vld [vmem:[#allocation2 + $0x568] sm:$0xff]
    %v285 = vld [vmem:[#allocation2 + $0x570] sm:$0xff]
    %v286 = vld [vmem:[#allocation2 + $0x578] sm:$0xff]
    %v287 = vld [vmem:[#allocation2 + $0x580] sm:$0xff]
    %v288 = vld [vmem:[#allocation2 + $0x588] sm:$0xff]
    %v289 = vld [vmem:[#allocation2 + $0x590] sm:$0xff]
    %v290 = vld [vmem:[#allocation2 + $0x598] sm:$0xff]
    %v291 = vld [vmem:[#allocation2 + $0x5a0] sm:$0xff]
    %v292 = vld [vmem:[#allocation2 + $0x5a8] sm:$0xff]
    %v293 = vld [vmem:[#allocation2 + $0x5b0] sm:$0xff]
    %v294 = vld [vmem:[#allocation2 + $0x5b8] sm:$0xff]
    %v295 = vld [vmem:[#allocation2 + $0x5c0] sm:$0xff]
    %v296 = vld [vmem:[#allocation2 + $0x5c8] sm:$0xff]
    %v297 = vld [vmem:[#allocation2 + $0x5d0] sm:$0xff]
    %v298 = vld [vmem:[#allocation2 + $0x5d8] sm:$0xff]
    %v299 = vld [vmem:[#allocation2 + $0x5e0] sm:$0xff]
    %v300 = vld [vmem:[#allocation2 + $0x5e8] sm:$0xff]
    %v301 = vld [vmem:[#allocation2 + $0x5f0] sm:$0xff]
    %v302 = vld [vmem:[#allocation2 + $0x5f8] sm:$0xff]
    %v303 = vld [vmem:[#allocation2 + $0x600] sm:$0xff]
    %v304 = vld [vmem:[#allocation2 + $0x608] sm:$0xff]
    %v305 = vld [vmem:[#allocation2 + $0x610] sm:$0xff]
    %v306 = vld [vmem:[#allocation2 + $0x618] sm:$0xff]
    %v307 = vld [vmem:[#allocation2 + $0x620] sm:$0xff]
    %v308 = vld [vmem:[#allocation2 + $0x628] sm:$0xff]
    %v309 = vld [vmem:[#allocation2 + $0x630] sm:$0xff]
    %v310 = vld [vmem:[#allocation2 + $0x638] sm:$0xff]
    %v311 = vld [vmem:[#allocation2 + $0x640] sm:$0xff]
    %v312 = vld [vmem:[#allocation2 + $0x648] sm:$0xff]
    %v313 = vld [vmem:[#allocation2 + $0x650] sm:$0xff]
    %v314 = vld [vmem:[#allocation2 + $0x658] sm:$0xff]
    %v315 = vld [vmem:[#allocation2 + $0x660] sm:$0xff]
    %v316 = vld [vmem:[#allocation2 + $0x668] sm:$0xff]
    %v317 = vld [vmem:[#allocation2 + $0x670] sm:$0xff]
    %v318 = vld [vmem:[#allocation2 + $0x678] sm:$0xff]
    %v319 = vld [vmem:[#allocation2 + $0x680] sm:$0xff]
    %v320 = vld [vmem:[#allocation2 + $0x688] sm:$0xff]
    %v321 = vld [vmem:[#allocation2 + $0x690] sm:$0xff]
    %v322 = vld [vmem:[#allocation2 + $0x698] sm:$0xff]
    %v323 = vld [vmem:[#allocation2 + $0x6a0] sm:$0xff]
    %v324 = vld [vmem:[#allocation2 + $0x6a8] sm:$0xff]
    %v325 = vld [vmem:[#allocation2 + $0x6b0] sm:$0xff]
    %v326 = vld [vmem:[#allocation2 + $0x6b8] sm:$0xff]
    %v327 = vld [vmem:[#allocation2 + $0x6c0] sm:$0xff]
    %v328 = vld [vmem:[#allocation2 + $0x6c8] sm:$0xff]
    %v329 = vld [vmem:[#allocation2 + $0x6d0] sm:$0xff]
    %v330 = vld [vmem:[#allocation2 + $0x6d8] sm:$0xff]
    %v331 = vld [vmem:[#allocation2 + $0x6e0] sm:$0xff]
    %v332 = vld [vmem:[#allocation2 + $0x6e8] sm:$0xff]
    %v333 = vld [vmem:[#allocation2 + $0x6f0] sm:$0xff]
    %v334 = vld [vmem:[#allocation2 + $0x6f8] sm:$0xff]
    %v335 = vld [vmem:[%s3] sm:$0xf]
    %v337 = vlaneseq
    %v338 = vshrl.u32 %v337, 7
    %v339 = vsub.s32 0, %v338
    %v340 = vrot.slane %v335, %v339
    %v341 = vlaneseq
    %v342 = vshrl.u32 %v341, 7
    %v343 = vsub.s32 1, %v342
    %v344 = vrot.slane %v335, %v343
    %v345 = vlaneseq
    %v346 = vshrl.u32 %v345, 7
    %v347 = vsub.s32 2, %v346
    %v348 = vrot.slane %v335, %v347
    %v349 = vlaneseq
    %v350 = vshrl.u32 %v349, 7
    %v351 = vsub.s32 3, %v350
    %v352 = vrot.slane %v335, %v351
    %v361 = vunpack.c.l.b16 %v107
    %v362 = vunpack.c.h.b16 %v107
    %v363 = vunpack.c.l.b16 %v108
    %v364 = vunpack.c.h.b16 %v108
    %v365 = vunpack.c.l.b16 %v109
    %v366 = vunpack.c.h.b16 %v109
    %v367 = vunpack.c.l.b16 %v110
    %v368 = vpack.c.b16 %v361, %v361
    %v369 = vpack.c.b16 %v362, %v362
    %v370 = vpack.c.b16 %v363, %v363
    %v371 = vpack.c.b16 %v364, %v364
    %v372 = vpack.c.b16 %v365, %v365
    %v373 = vpack.c.b16 %v366, %v366
    %v374 = vpack.c.b16 %v367, %v367
    %v606 = vunpack.c.l.b16 %v111
    %v607 = vunpack.c.h.b16 %v111
    %v608 = vunpack.c.l.b16 %v112
    %v609 = vunpack.c.h.b16 %v112
    %v610 = vunpack.c.l.b16 %v113
    %v611 = vunpack.c.h.b16 %v113
    %v612 = vunpack.c.l.b16 %v114
    %v613 = vunpack.c.h.b16 %v114
    %v614 = vunpack.c.l.b16 %v115
    %v615 = vunpack.c.h.b16 %v115
    %v616 = vunpack.c.l.b16 %v116
    %v617 = vunpack.c.h.b16 %v116
    %v618 = vunpack.c.l.b16 %v117
    %v619 = vunpack.c.h.b16 %v117
    %v620 = vunpack.c.l.b16 %v118
    %v621 = vunpack.c.h.b16 %v118
    %v622 = vunpack.c.l.b16 %v119
    %v623 = vunpack.c.h.b16 %v119
    %v624 = vunpack.c.l.b16 %v120
    %v625 = vunpack.c.h.b16 %v120
    %v626 = vunpack.c.l.b16 %v121
    %v627 = vunpack.c.h.b16 %v121
    %v628 = vunpack.c.l.b16 %v122
    %v629 = vunpack.c.h.b16 %v122
    %v630 = vunpack.c.l.b16 %v123
    %v631 = vunpack.c.h.b16 %v123
    %v632 = vunpack.c.l.b16 %v124
    %v633 = vunpack.c.h.b16 %v124
    %v634 = vunpack.c.l.b16 %v125
    %v635 = vunpack.c.h.b16 %v125
    %v636 = vunpack.c.l.b16 %v126
    %v637 = vunpack.c.h.b16 %v126
    %v638 = vunpack.c.l.b16 %v127
    %v639 = vunpack.c.h.b16 %v127
    %v640 = vunpack.c.l.b16 %v128
    %v641 = vunpack.c.h.b16 %v128
    %v642 = vunpack.c.l.b16 %v129
    %v643 = vunpack.c.h.b16 %v129
    %v644 = vunpack.c.l.b16 %v130
    %v645 = vunpack.c.h.b16 %v130
    %v646 = vunpack.c.l.b16 %v131
    %v647 = vunpack.c.h.b16 %v131
    %v648 = vunpack.c.l.b16 %v132
    %v649 = vunpack.c.h.b16 %v132
    %v650 = vunpack.c.l.b16 %v133
    %v651 = vunpack.c.h.b16 %v133
    %v652 = vunpack.c.l.b16 %v134
    %v653 = vunpack.c.h.b16 %v134
    %v654 = vunpack.c.l.b16 %v135
    %v655 = vunpack.c.h.b16 %v135
    %v656 = vunpack.c.l.b16 %v136
    %v657 = vunpack.c.h.b16 %v136
    %v658 = vunpack.c.l.b16 %v137
    %v659 = vunpack.c.h.b16 %v137
    %v660 = vunpack.c.l.b16 %v138
    %v661 = vunpack.c.h.b16 %v138
    %v662 = vunpack.c.l.b16 %v139
    %v663 = vunpack.c.h.b16 %v139
    %v664 = vunpack.c.l.b16 %v140
    %v665 = vunpack.c.h.b16 %v140
    %v666 = vunpack.c.l.b16 %v141
    %v667 = vunpack.c.h.b16 %v141
    %v668 = vunpack.c.l.b16 %v142
    %v669 = vunpack.c.h.b16 %v142
    %v670 = vunpack.c.l.b16 %v143
    %v671 = vunpack.c.h.b16 %v143
    %v672 = vunpack.c.l.b16 %v144
    %v673 = vunpack.c.h.b16 %v144
    %v674 = vunpack.c.l.b16 %v145
    %v675 = vunpack.c.h.b16 %v145
    %v676 = vunpack.c.l.b16 %v146
    %v677 = vunpack.c.h.b16 %v146
    %v678 = vunpack.c.l.b16 %v147
    %v679 = vunpack.c.h.b16 %v147
    %v680 = vunpack.c.l.b16 %v148
    %v681 = vunpack.c.h.b16 %v148
    %v682 = vunpack.c.l.b16 %v149
    %v683 = vunpack.c.h.b16 %v149
    %v684 = vunpack.c.l.b16 %v150
    %v685 = vunpack.c.h.b16 %v150
    %v686 = vunpack.c.l.b16 %v151
    %v687 = vunpack.c.h.b16 %v151
    %v688 = vunpack.c.l.b16 %v152
    %v689 = vunpack.c.h.b16 %v152
    %v690 = vunpack.c.l.b16 %v153
    %v691 = vunpack.c.h.b16 %v153
    %v692 = vunpack.c.l.b16 %v154
    %v693 = vunpack.c.h.b16 %v154
    %v694 = vunpack.c.l.b16 %v155
    %v695 = vunpack.c.h.b16 %v155
    %v696 = vunpack.c.l.b16 %v156
    %v697 = vunpack.c.h.b16 %v156
    %v698 = vunpack.c.l.b16 %v157
    %v699 = vunpack.c.h.b16 %v157
    %v700 = vunpack.c.l.b16 %v158
    %v701 = vunpack.c.h.b16 %v158
    %v702 = vunpack.c.l.b16 %v159
    %v703 = vunpack.c.h.b16 %v159
    %v704 = vunpack.c.l.b16 %v160
    %v705 = vunpack.c.h.b16 %v160
    %v706 = vunpack.c.l.b16 %v161
    %v707 = vunpack.c.h.b16 %v161
    %v708 = vunpack.c.l.b16 %v162
    %v709 = vunpack.c.h.b16 %v162
    %v710 = vunpack.c.l.b16 %v163
    %v711 = vunpack.c.h.b16 %v163
    %v712 = vunpack.c.l.b16 %v164
    %v713 = vunpack.c.h.b16 %v164
    %v714 = vunpack.c.l.b16 %v165
    %v715 = vunpack.c.h.b16 %v165
    %v716 = vunpack.c.l.b16 %v166
    %v717 = vunpack.c.h.b16 %v166
    %v718 = vunpack.c.l.b16 %v167
    %v719 = vunpack.c.h.b16 %v167
    %v720 = vunpack.c.l.b16 %v168
    %v721 = vunpack.c.h.b16 %v168
    %v722 = vunpack.c.l.b16 %v169
    %v723 = vunpack.c.h.b16 %v169
    %v724 = vunpack.c.l.b16 %v170
    %v725 = vunpack.c.h.b16 %v170
    %v726 = vunpack.c.l.b16 %v171
    %v727 = vunpack.c.h.b16 %v171
    %v728 = vunpack.c.l.b16 %v172
    %v729 = vunpack.c.h.b16 %v172
    %v730 = vunpack.c.l.b16 %v173
    %v731 = vunpack.c.h.b16 %v173
    %v732 = vunpack.c.l.b16 %v174
    %v733 = vunpack.c.h.b16 %v174
    %v734 = vunpack.c.l.b16 %v175
    %v735 = vunpack.c.h.b16 %v175
    %v736 = vunpack.c.l.b16 %v176
    %v737 = vunpack.c.h.b16 %v176
    %v738 = vunpack.c.l.b16 %v177
    %v739 = vunpack.c.h.b16 %v177
    %v740 = vunpack.c.l.b16 %v178
    %v741 = vunpack.c.h.b16 %v178
    %v742 = vunpack.c.l.b16 %v179
    %v743 = vunpack.c.h.b16 %v179
    %v744 = vunpack.c.l.b16 %v180
    %v745 = vunpack.c.h.b16 %v180
    %v746 = vunpack.c.l.b16 %v181
    %v747 = vunpack.c.h.b16 %v181
    %v748 = vunpack.c.l.b16 %v182
    %v749 = vunpack.c.h.b16 %v182
    %v750 = vunpack.c.l.b16 %v183
    %v751 = vunpack.c.h.b16 %v183
    %v752 = vunpack.c.l.b16 %v184
    %v753 = vunpack.c.h.b16 %v184
    %v754 = vunpack.c.l.b16 %v185
    %v755 = vunpack.c.h.b16 %v185
    %v756 = vunpack.c.l.b16 %v186
    %v757 = vunpack.c.h.b16 %v186
    %v758 = vunpack.c.l.b16 %v187
    %v759 = vunpack.c.h.b16 %v187
    %v760 = vunpack.c.l.b16 %v188
    %v761 = vunpack.c.h.b16 %v188
    %v762 = vunpack.c.l.b16 %v189
    %v763 = vunpack.c.h.b16 %v189
    %v764 = vunpack.c.l.b16 %v190
    %v765 = vunpack.c.h.b16 %v190
    %v766 = vunpack.c.l.b16 %v191
    %v767 = vunpack.c.h.b16 %v191
    %v768 = vunpack.c.l.b16 %v192
    %v769 = vunpack.c.h.b16 %v192
    %v770 = vunpack.c.l.b16 %v193
    %v771 = vunpack.c.h.b16 %v193
    %v772 = vunpack.c.l.b16 %v194
    %v773 = vunpack.c.h.b16 %v194
    %v774 = vunpack.c.l.b16 %v195
    %v775 = vunpack.c.h.b16 %v195
    %v776 = vunpack.c.l.b16 %v196
    %v777 = vunpack.c.h.b16 %v196
    %v778 = vunpack.c.l.b16 %v197
    %v779 = vunpack.c.h.b16 %v197
    %v780 = vunpack.c.l.b16 %v198
    %v781 = vunpack.c.h.b16 %v198
    %v782 = vunpack.c.l.b16 %v199
    %v783 = vunpack.c.h.b16 %v199
    %v784 = vunpack.c.l.b16 %v200
    %v785 = vunpack.c.h.b16 %v200
    %v786 = vunpack.c.l.b16 %v201
    %v787 = vunpack.c.h.b16 %v201
    %v788 = vunpack.c.l.b16 %v202
    %v789 = vunpack.c.h.b16 %v202
    %v790 = vunpack.c.l.b16 %v203
    %v791 = vunpack.c.h.b16 %v203
    %v792 = vunpack.c.l.b16 %v204
    %v793 = vunpack.c.h.b16 %v204
    %v794 = vunpack.c.l.b16 %v205
    %v795 = vunpack.c.h.b16 %v205
    %v796 = vunpack.c.l.b16 %v206
    %v797 = vunpack.c.h.b16 %v206
    %v798 = vunpack.c.l.b16 %v207
    %v799 = vunpack.c.h.b16 %v207
    %v800 = vunpack.c.l.b16 %v208
    %v801 = vunpack.c.h.b16 %v208
    %v802 = vunpack.c.l.b16 %v209
    %v803 = vunpack.c.h.b16 %v209
    %v804 = vunpack.c.l.b16 %v210
    %v805 = vunpack.c.h.b16 %v210
    %v806 = vunpack.c.l.b16 %v211
    %v807 = vunpack.c.h.b16 %v211
    %v808 = vunpack.c.l.b16 %v212
    %v809 = vunpack.c.h.b16 %v212
    %v810 = vunpack.c.l.b16 %v213
    %v811 = vunpack.c.h.b16 %v213
    %v812 = vunpack.c.l.b16 %v214
    %v813 = vunpack.c.h.b16 %v214
    %v814 = vunpack.c.l.b16 %v215
    %v815 = vunpack.c.h.b16 %v215
    %v816 = vunpack.c.l.b16 %v216
    %v817 = vunpack.c.h.b16 %v216
    %v818 = vunpack.c.l.b16 %v217
    %v819 = vunpack.c.h.b16 %v217
    %v820 = vunpack.c.l.b16 %v218
    %v821 = vunpack.c.h.b16 %v218
    %v822 = vunpack.c.l.b16 %v219
    %v823 = vunpack.c.h.b16 %v219
    %v824 = vunpack.c.l.b16 %v220
    %v825 = vunpack.c.h.b16 %v220
    %v826 = vunpack.c.l.b16 %v221
    %v827 = vunpack.c.h.b16 %v221
    %v828 = vunpack.c.l.b16 %v222
    %v829 = vunpack.c.h.b16 %v222
    %v830 = vunpack.c.l.b16 %v223
    %v831 = vunpack.c.h.b16 %v223
    %v832 = vunpack.c.l.b16 %v224
    %v833 = vunpack.c.h.b16 %v224
    %v834 = vunpack.c.l.b16 %v225
    %v835 = vunpack.c.h.b16 %v225
    %v836 = vunpack.c.l.b16 %v226
    %v837 = vunpack.c.h.b16 %v226
    %v838 = vunpack.c.l.b16 %v227
    %v839 = vunpack.c.h.b16 %v227
    %v840 = vunpack.c.l.b16 %v228
    %v841 = vunpack.c.h.b16 %v228
    %v842 = vunpack.c.l.b16 %v229
    %v843 = vunpack.c.h.b16 %v229
    %v844 = vunpack.c.l.b16 %v230
    %v845 = vunpack.c.h.b16 %v230
    %v846 = vunpack.c.l.b16 %v231
    %v847 = vunpack.c.h.b16 %v231
    %v848 = vunpack.c.l.b16 %v232
    %v849 = vunpack.c.h.b16 %v232
    %v850 = vunpack.c.l.b16 %v233
    %v851 = vunpack.c.h.b16 %v233
    %v852 = vunpack.c.l.b16 %v234
    %v853 = vunpack.c.h.b16 %v234
    %v854 = vunpack.c.l.b16 %v235
    %v855 = vunpack.c.h.b16 %v235
    %v856 = vunpack.c.l.b16 %v236
    %v857 = vunpack.c.h.b16 %v236
    %v858 = vunpack.c.l.b16 %v237
    %v859 = vunpack.c.h.b16 %v237
    %v860 = vunpack.c.l.b16 %v238
    %v861 = vunpack.c.h.b16 %v238
    %v862 = vunpack.c.l.b16 %v239
    %v863 = vunpack.c.h.b16 %v239
    %v864 = vunpack.c.l.b16 %v240
    %v865 = vunpack.c.h.b16 %v240
    %v866 = vunpack.c.l.b16 %v241
    %v867 = vunpack.c.h.b16 %v241
    %v868 = vunpack.c.l.b16 %v242
    %v869 = vunpack.c.h.b16 %v242
    %v870 = vunpack.c.l.b16 %v243
    %v871 = vunpack.c.h.b16 %v243
    %v872 = vunpack.c.l.b16 %v244
    %v873 = vunpack.c.h.b16 %v244
    %v874 = vunpack.c.l.b16 %v245
    %v875 = vunpack.c.h.b16 %v245
    %v876 = vunpack.c.l.b16 %v246
    %v877 = vunpack.c.h.b16 %v246
    %v878 = vunpack.c.l.b16 %v247
    %v879 = vunpack.c.h.b16 %v247
    %v880 = vunpack.c.l.b16 %v248
    %v881 = vunpack.c.h.b16 %v248
    %v882 = vunpack.c.l.b16 %v249
    %v883 = vunpack.c.h.b16 %v249
    %v884 = vunpack.c.l.b16 %v250
    %v885 = vunpack.c.h.b16 %v250
    %v886 = vunpack.c.l.b16 %v251
    %v887 = vunpack.c.h.b16 %v251
    %v888 = vunpack.c.l.b16 %v252
    %v889 = vunpack.c.h.b16 %v252
    %v890 = vunpack.c.l.b16 %v253
    %v891 = vunpack.c.h.b16 %v253
    %v892 = vunpack.c.l.b16 %v254
    %v893 = vunpack.c.h.b16 %v254
    %v894 = vunpack.c.l.b16 %v255
    %v895 = vunpack.c.h.b16 %v255
    %v896 = vunpack.c.l.b16 %v256
    %v897 = vunpack.c.h.b16 %v256
    %v898 = vunpack.c.l.b16 %v257
    %v899 = vunpack.c.h.b16 %v257
    %v900 = vunpack.c.l.b16 %v258
    %v901 = vunpack.c.h.b16 %v258
    %v902 = vunpack.c.l.b16 %v259
    %v903 = vunpack.c.h.b16 %v259
    %v904 = vunpack.c.l.b16 %v260
    %v905 = vunpack.c.h.b16 %v260
    %v906 = vunpack.c.l.b16 %v261
    %v907 = vunpack.c.h.b16 %v261
    %v908 = vunpack.c.l.b16 %v262
    %v909 = vunpack.c.h.b16 %v262
    %v910 = vunpack.c.l.b16 %v263
    %v911 = vunpack.c.h.b16 %v263
    %v912 = vunpack.c.l.b16 %v264
    %v913 = vunpack.c.h.b16 %v264
    %v914 = vunpack.c.l.b16 %v265
    %v915 = vunpack.c.h.b16 %v265
    %v916 = vunpack.c.l.b16 %v266
    %v917 = vunpack.c.h.b16 %v266
    %v918 = vunpack.c.l.b16 %v267
    %v919 = vunpack.c.h.b16 %v267
    %v920 = vunpack.c.l.b16 %v268
    %v921 = vunpack.c.h.b16 %v268
    %v922 = vunpack.c.l.b16 %v269
    %v923 = vunpack.c.h.b16 %v269
    %v924 = vunpack.c.l.b16 %v270
    %v925 = vunpack.c.h.b16 %v270
    %v926 = vunpack.c.l.b16 %v271
    %v927 = vunpack.c.h.b16 %v271
    %v928 = vunpack.c.l.b16 %v272
    %v929 = vunpack.c.h.b16 %v272
    %v930 = vunpack.c.l.b16 %v273
    %v931 = vunpack.c.h.b16 %v273
    %v932 = vunpack.c.l.b16 %v274
    %v933 = vunpack.c.h.b16 %v274
    %v934 = vunpack.c.l.b16 %v275
    %v935 = vunpack.c.h.b16 %v275
    %v936 = vunpack.c.l.b16 %v276
    %v937 = vunpack.c.h.b16 %v276
    %v938 = vunpack.c.l.b16 %v277
    %v939 = vunpack.c.h.b16 %v277
    %v940 = vunpack.c.l.b16 %v278
    %v941 = vunpack.c.h.b16 %v278
    %v942 = vunpack.c.l.b16 %v279
    %v943 = vunpack.c.h.b16 %v279
    %v944 = vunpack.c.l.b16 %v280
    %v945 = vunpack.c.h.b16 %v280
    %v946 = vunpack.c.l.b16 %v281
    %v947 = vunpack.c.h.b16 %v281
    %v948 = vunpack.c.l.b16 %v282
    %v949 = vunpack.c.h.b16 %v282
    %v950 = vunpack.c.l.b16 %v283
    %v951 = vunpack.c.h.b16 %v283
    %v952 = vunpack.c.l.b16 %v284
    %v953 = vunpack.c.h.b16 %v284
    %v954 = vunpack.c.l.b16 %v285
    %v955 = vunpack.c.h.b16 %v285
    %v956 = vunpack.c.l.b16 %v286
    %v957 = vunpack.c.h.b16 %v286
    %v958 = vunpack.c.l.b16 %v287
    %v959 = vunpack.c.h.b16 %v287
    %v960 = vunpack.c.l.b16 %v288
    %v961 = vunpack.c.h.b16 %v288
    %v962 = vunpack.c.l.b16 %v289
    %v963 = vunpack.c.h.b16 %v289
    %v964 = vunpack.c.l.b16 %v290
    %v965 = vunpack.c.h.b16 %v290
    %v966 = vunpack.c.l.b16 %v291
    %v967 = vunpack.c.h.b16 %v291
    %v968 = vunpack.c.l.b16 %v292
    %v969 = vunpack.c.h.b16 %v292
    %v970 = vunpack.c.l.b16 %v293
    %v971 = vunpack.c.h.b16 %v293
    %v972 = vunpack.c.l.b16 %v294
    %v973 = vunpack.c.h.b16 %v294
    %v974 = vunpack.c.l.b16 %v295
    %v975 = vunpack.c.h.b16 %v295
    %v976 = vunpack.c.l.b16 %v296
    %v977 = vunpack.c.h.b16 %v296
    %v978 = vunpack.c.l.b16 %v297
    %v979 = vunpack.c.h.b16 %v297
    %v980 = vunpack.c.l.b16 %v298
    %v981 = vunpack.c.h.b16 %v298
    %v982 = vunpack.c.l.b16 %v299
    %v983 = vunpack.c.h.b16 %v299
    %v984 = vunpack.c.l.b16 %v300
    %v985 = vunpack.c.h.b16 %v300
    %v986 = vunpack.c.l.b16 %v301
    %v987 = vunpack.c.h.b16 %v301
    %v988 = vunpack.c.l.b16 %v302
    %v989 = vunpack.c.h.b16 %v302
    %v990 = vunpack.c.l.b16 %v303
    %v991 = vunpack.c.h.b16 %v303
    %v992 = vunpack.c.l.b16 %v304
    %v993 = vunpack.c.h.b16 %v304
    %v994 = vunpack.c.l.b16 %v305
    %v995 = vunpack.c.h.b16 %v305
    %v996 = vunpack.c.l.b16 %v306
    %v997 = vunpack.c.h.b16 %v306
    %v998 = vunpack.c.l.b16 %v307
    %v999 = vunpack.c.h.b16 %v307
    %v1000 = vunpack.c.l.b16 %v308
    %v1001 = vunpack.c.h.b16 %v308
    %v1002 = vunpack.c.l.b16 %v309
    %v1003 = vunpack.c.h.b16 %v309
    %v1004 = vunpack.c.l.b16 %v310
    %v1005 = vunpack.c.h.b16 %v310
    %v1006 = vunpack.c.l.b16 %v311
    %v1007 = vunpack.c.h.b16 %v311
    %v1008 = vunpack.c.l.b16 %v312
    %v1009 = vunpack.c.h.b16 %v312
    %v1010 = vunpack.c.l.b16 %v313
    %v1011 = vunpack.c.h.b16 %v313
    %v1012 = vunpack.c.l.b16 %v314
    %v1013 = vunpack.c.h.b16 %v314
    %v1014 = vunpack.c.l.b16 %v315
    %v1015 = vunpack.c.h.b16 %v315
    %v1016 = vunpack.c.l.b16 %v316
    %v1017 = vunpack.c.h.b16 %v316
    %v1018 = vunpack.c.l.b16 %v317
    %v1019 = vunpack.c.h.b16 %v317
    %v1020 = vunpack.c.l.b16 %v318
    %v1021 = vunpack.c.h.b16 %v318
    %v1022 = vunpack.c.l.b16 %v319
    %v1023 = vunpack.c.h.b16 %v319
    %v1024 = vunpack.c.l.b16 %v320
    %v1025 = vunpack.c.h.b16 %v320
    %v1026 = vunpack.c.l.b16 %v321
    %v1027 = vunpack.c.h.b16 %v321
    %v1028 = vunpack.c.l.b16 %v322
    %v1029 = vunpack.c.h.b16 %v322
    %v1030 = vunpack.c.l.b16 %v323
    %v1031 = vunpack.c.h.b16 %v323
    %v1032 = vunpack.c.l.b16 %v324
    %v1033 = vunpack.c.h.b16 %v324
    %v1034 = vunpack.c.l.b16 %v325
    %v1035 = vunpack.c.h.b16 %v325
    %v1036 = vunpack.c.l.b16 %v326
    %v1037 = vunpack.c.h.b16 %v326
    %v1038 = vunpack.c.l.b16 %v327
    %v1039 = vunpack.c.h.b16 %v327
    %v1040 = vunpack.c.l.b16 %v328
    %v1041 = vunpack.c.h.b16 %v328
    %v1042 = vunpack.c.l.b16 %v329
    %v1043 = vunpack.c.h.b16 %v329
    %v1044 = vunpack.c.l.b16 %v330
    %v1045 = vunpack.c.h.b16 %v330
    %v1046 = vunpack.c.l.b16 %v331
    %v1047 = vunpack.c.h.b16 %v331
    %v1048 = vunpack.c.l.b16 %v332
    %v1049 = vunpack.c.h.b16 %v332
    %v1050 = vunpack.c.l.b16 %v333
    %v1051 = vunpack.c.h.b16 %v333
    %v1052 = vunpack.c.l.b16 %v334
    %v1053 = vunpack.c.h.b16 %v334
    %v1054 = vpack.c.b16 %v610, %v606
    %v1055 = vpack.c.b16 %v611, %v607
    %v1056 = vpack.c.b16 %v612, %v608
    %v1057 = vpack.c.b16 %v613, %v609
    %v1058 = vpack.c.b16 %v618, %v614
    %v1059 = vpack.c.b16 %v619, %v615
    %v1060 = vpack.c.b16 %v620, %v616
    %v1061 = vpack.c.b16 %v621, %v617
    %v1062 = vpack.c.b16 %v626, %v622
    %v1063 = vpack.c.b16 %v627, %v623
    %v1064 = vpack.c.b16 %v628, %v624
    %v1065 = vpack.c.b16 %v629, %v625
    %v1066 = vpack.c.b16 %v634, %v630
    %v1067 = vpack.c.b16 %v635, %v631
    %v1068 = vpack.c.b16 %v636, %v632
    %v1069 = vpack.c.b16 %v637, %v633
    %v1070 = vpack.c.b16 %v642, %v638
    %v1071 = vpack.c.b16 %v643, %v639
    %v1072 = vpack.c.b16 %v644, %v640
    %v1073 = vpack.c.b16 %v645, %v641
    %v1074 = vpack.c.b16 %v650, %v646
    %v1075 = vpack.c.b16 %v651, %v647
    %v1076 = vpack.c.b16 %v652, %v648
    %v1077 = vpack.c.b16 %v653, %v649
    %v1078 = vpack.c.b16 %v658, %v654
    %v1079 = vpack.c.b16 %v659, %v655
    %v1080 = vpack.c.b16 %v660, %v656
    %v1081 = vpack.c.b16 %v661, %v657
    %v1082 = vpack.c.b16 %v666, %v662
    %v1083 = vpack.c.b16 %v667, %v663
    %v1084 = vpack.c.b16 %v668, %v664
    %v1085 = vpack.c.b16 %v669, %v665
    %v1086 = vpack.c.b16 %v674, %v670
    %v1087 = vpack.c.b16 %v675, %v671
    %v1088 = vpack.c.b16 %v676, %v672
    %v1089 = vpack.c.b16 %v677, %v673
    %v1090 = vpack.c.b16 %v682, %v678
    %v1091 = vpack.c.b16 %v683, %v679
    %v1092 = vpack.c.b16 %v684, %v680
    %v1093 = vpack.c.b16 %v685, %v681
    %v1094 = vpack.c.b16 %v690, %v686
    %v1095 = vpack.c.b16 %v691, %v687
    %v1096 = vpack.c.b16 %v692, %v688
    %v1097 = vpack.c.b16 %v693, %v689
    %v1098 = vpack.c.b16 %v698, %v694
    %v1099 = vpack.c.b16 %v699, %v695
    %v1100 = vpack.c.b16 %v700, %v696
    %v1101 = vpack.c.b16 %v701, %v697
    %v1102 = vpack.c.b16 %v706, %v702
    %v1103 = vpack.c.b16 %v707, %v703
    %v1104 = vpack.c.b16 %v708, %v704
    %v1105 = vpack.c.b16 %v709, %v705
    %v1106 = vpack.c.b16 %v714, %v710
    %v1107 = vpack.c.b16 %v715, %v711
    %v1108 = vpack.c.b16 %v716, %v712
    %v1109 = vpack.c.b16 %v717, %v713
    %v1110 = vpack.c.b16 %v722, %v718
    %v1111 = vpack.c.b16 %v723, %v719
    %v1112 = vpack.c.b16 %v724, %v720
    %v1113 = vpack.c.b16 %v725, %v721
    %v1114 = vpack.c.b16 %v730, %v726
    %v1115 = vpack.c.b16 %v731, %v727
    %v1116 = vpack.c.b16 %v732, %v728
    %v1117 = vpack.c.b16 %v733, %v729
    %v1118 = vpack.c.b16 %v738, %v734
    %v1119 = vpack.c.b16 %v739, %v735
    %v1120 = vpack.c.b16 %v740, %v736
    %v1121 = vpack.c.b16 %v741, %v737
    %v1122 = vpack.c.b16 %v746, %v742
    %v1123 = vpack.c.b16 %v747, %v743
    %v1124 = vpack.c.b16 %v748, %v744
    %v1125 = vpack.c.b16 %v749, %v745
    %v1126 = vpack.c.b16 %v754, %v750
    %v1127 = vpack.c.b16 %v755, %v751
    %v1128 = vpack.c.b16 %v756, %v752
    %v1129 = vpack.c.b16 %v757, %v753
    %v1130 = vpack.c.b16 %v762, %v758
    %v1131 = vpack.c.b16 %v763, %v759
    %v1132 = vpack.c.b16 %v764, %v760
    %v1133 = vpack.c.b16 %v765, %v761
    %v1134 = vpack.c.b16 %v770, %v766
    %v1135 = vpack.c.b16 %v771, %v767
    %v1136 = vpack.c.b16 %v772, %v768
    %v1137 = vpack.c.b16 %v773, %v769
    %v1138 = vpack.c.b16 %v778, %v774
    %v1139 = vpack.c.b16 %v779, %v775
    %v1140 = vpack.c.b16 %v780, %v776
    %v1141 = vpack.c.b16 %v781, %v777
    %v1142 = vpack.c.b16 %v786, %v782
    %v1143 = vpack.c.b16 %v787, %v783
    %v1144 = vpack.c.b16 %v788, %v784
    %v1145 = vpack.c.b16 %v789, %v785
    %v1146 = vpack.c.b16 %v794, %v790
    %v1147 = vpack.c.b16 %v795, %v791
    %v1148 = vpack.c.b16 %v796, %v792
    %v1149 = vpack.c.b16 %v797, %v793
    %v1150 = vpack.c.b16 %v802, %v798
    %v1151 = vpack.c.b16 %v803, %v799
    %v1152 = vpack.c.b16 %v804, %v800
    %v1153 = vpack.c.b16 %v805, %v801
    %v1154 = vpack.c.b16 %v810, %v806
    %v1155 = vpack.c.b16 %v811, %v807
    %v1156 = vpack.c.b16 %v812, %v808
    %v1157 = vpack.c.b16 %v813, %v809
    %v1158 = vpack.c.b16 %v818, %v814
    %v1159 = vpack.c.b16 %v819, %v815
    %v1160 = vpack.c.b16 %v820, %v816
    %v1161 = vpack.c.b16 %v821, %v817
    %v1162 = vpack.c.b16 %v826, %v822
    %v1163 = vpack.c.b16 %v827, %v823
    %v1164 = vpack.c.b16 %v828, %v824
    %v1165 = vpack.c.b16 %v829, %v825
    %v1166 = vpack.c.b16 %v834, %v830
    %v1167 = vpack.c.b16 %v835, %v831
    %v1168 = vpack.c.b16 %v836, %v832
    %v1169 = vpack.c.b16 %v837, %v833
    %v1170 = vpack.c.b16 %v842, %v838
    %v1171 = vpack.c.b16 %v843, %v839
    %v1172 = vpack.c.b16 %v844, %v840
    %v1173 = vpack.c.b16 %v845, %v841
    %v1174 = vpack.c.b16 %v850, %v846
    %v1175 = vpack.c.b16 %v851, %v847
    %v1176 = vpack.c.b16 %v852, %v848
    %v1177 = vpack.c.b16 %v853, %v849
    %v1178 = vpack.c.b16 %v858, %v854
    %v1179 = vpack.c.b16 %v859, %v855
    %v1180 = vpack.c.b16 %v860, %v856
    %v1181 = vpack.c.b16 %v861, %v857
    %v1182 = vpack.c.b16 %v866, %v862
    %v1183 = vpack.c.b16 %v867, %v863
    %v1184 = vpack.c.b16 %v868, %v864
    %v1185 = vpack.c.b16 %v869, %v865
    %v1186 = vpack.c.b16 %v874, %v870
    %v1187 = vpack.c.b16 %v875, %v871
    %v1188 = vpack.c.b16 %v876, %v872
    %v1189 = vpack.c.b16 %v877, %v873
    %v1190 = vpack.c.b16 %v882, %v878
    %v1191 = vpack.c.b16 %v883, %v879
    %v1192 = vpack.c.b16 %v884, %v880
    %v1193 = vpack.c.b16 %v885, %v881
    %v1194 = vpack.c.b16 %v890, %v886
    %v1195 = vpack.c.b16 %v891, %v887
    %v1196 = vpack.c.b16 %v892, %v888
    %v1197 = vpack.c.b16 %v893, %v889
    %v1198 = vpack.c.b16 %v898, %v894
    %v1199 = vpack.c.b16 %v899, %v895
    %v1200 = vpack.c.b16 %v900, %v896
    %v1201 = vpack.c.b16 %v901, %v897
    %v1202 = vpack.c.b16 %v906, %v902
    %v1203 = vpack.c.b16 %v907, %v903
    %v1204 = vpack.c.b16 %v908, %v904
    %v1205 = vpack.c.b16 %v909, %v905
    %v1206 = vpack.c.b16 %v914, %v910
    %v1207 = vpack.c.b16 %v915, %v911
    %v1208 = vpack.c.b16 %v916, %v912
    %v1209 = vpack.c.b16 %v917, %v913
    %v1210 = vpack.c.b16 %v922, %v918
    %v1211 = vpack.c.b16 %v923, %v919
    %v1212 = vpack.c.b16 %v924, %v920
    %v1213 = vpack.c.b16 %v925, %v921
    %v1214 = vpack.c.b16 %v930, %v926
    %v1215 = vpack.c.b16 %v931, %v927
    %v1216 = vpack.c.b16 %v932, %v928
    %v1217 = vpack.c.b16 %v933, %v929
    %v1218 = vpack.c.b16 %v938, %v934
    %v1219 = vpack.c.b16 %v939, %v935
    %v1220 = vpack.c.b16 %v940, %v936
    %v1221 = vpack.c.b16 %v941, %v937
    %v1222 = vpack.c.b16 %v946, %v942
    %v1223 = vpack.c.b16 %v947, %v943
    %v1224 = vpack.c.b16 %v948, %v944
    %v1225 = vpack.c.b16 %v949, %v945
    %v1226 = vpack.c.b16 %v954, %v950
    %v1227 = vpack.c.b16 %v955, %v951
    %v1228 = vpack.c.b16 %v956, %v952
    %v1229 = vpack.c.b16 %v957, %v953
    %v1230 = vpack.c.b16 %v962, %v958
    %v1231 = vpack.c.b16 %v963, %v959
    %v1232 = vpack.c.b16 %v964, %v960
    %v1233 = vpack.c.b16 %v965, %v961
    %v1234 = vpack.c.b16 %v970, %v966
    %v1235 = vpack.c.b16 %v971, %v967
    %v1236 = vpack.c.b16 %v972, %v968
    %v1237 = vpack.c.b16 %v973, %v969
    %v1238 = vpack.c.b16 %v978, %v974
    %v1239 = vpack.c.b16 %v979, %v975
    %v1240 = vpack.c.b16 %v980, %v976
    %v1241 = vpack.c.b16 %v981, %v977
    %v1242 = vpack.c.b16 %v986, %v982
    %v1243 = vpack.c.b16 %v987, %v983
    %v1244 = vpack.c.b16 %v988, %v984
    %v1245 = vpack.c.b16 %v989, %v985
    %v1246 = vpack.c.b16 %v994, %v990
    %v1247 = vpack.c.b16 %v995, %v991
    %v1248 = vpack.c.b16 %v996, %v992
    %v1249 = vpack.c.b16 %v997, %v993
    %v1250 = vpack.c.b16 %v1002, %v998
    %v1251 = vpack.c.b16 %v1003, %v999
    %v1252 = vpack.c.b16 %v1004, %v1000
    %v1253 = vpack.c.b16 %v1005, %v1001
    %v1254 = vpack.c.b16 %v1010, %v1006
    %v1255 = vpack.c.b16 %v1011, %v1007
    %v1256 = vpack.c.b16 %v1012, %v1008
    %v1257 = vpack.c.b16 %v1013, %v1009
    %v1258 = vpack.c.b16 %v1018, %v1014
    %v1259 = vpack.c.b16 %v1019, %v1015
    %v1260 = vpack.c.b16 %v1020, %v1016
    %v1261 = vpack.c.b16 %v1021, %v1017
    %v1262 = vpack.c.b16 %v1026, %v1022
    %v1263 = vpack.c.b16 %v1027, %v1023
    %v1264 = vpack.c.b16 %v1028, %v1024
    %v1265 = vpack.c.b16 %v1029, %v1025
    %v1266 = vpack.c.b16 %v1034, %v1030
    %v1267 = vpack.c.b16 %v1035, %v1031
    %v1268 = vpack.c.b16 %v1036, %v1032
    %v1269 = vpack.c.b16 %v1037, %v1033
    %v1270 = vpack.c.b16 %v1042, %v1038
    %v1271 = vpack.c.b16 %v1043, %v1039
    %v1272 = vpack.c.b16 %v1044, %v1040
    %v1273 = vpack.c.b16 %v1045, %v1041
    %v1274 = vpack.c.b16 %v1050, %v1046
    %v1275 = vpack.c.b16 %v1051, %v1047
    %v1276 = vpack.c.b16 %v1052, %v1048
    %v1277 = vpack.c.b16 %v1053, %v1049
    %1502 = vmatprep.subr.bf16.mxu0 %v1055
    %1503 = vmatpush1.bf16.msra.mxu0 %v1054
    %1504 = vmatprep.subr.bf16.mxu0 %v1059
    %1505 = vmatpush1.bf16.msra.mxu0 %v1058
    %1506 = vmatprep.subr.bf16.mxu0 %v1063
    %1507 = vmatpush1.bf16.msra.mxu0 %v1062
    %1508 = vmatprep.subr.bf16.mxu0 %v1067
    %1509 = vmatpush1.bf16.msra.mxu0 %v1066
    %1510 = vmatprep.subr.bf16.mxu0 %v1071
    %1511 = vmatpush1.bf16.msra.mxu0 %v1070
    %1512 = vmatprep.subr.bf16.mxu0 %v1075
    %1513 = vmatpush1.bf16.msra.mxu0 %v1074
    %1514 = vmatprep.subr.bf16.mxu0 %v1079
    %1515 = vmatpush1.bf16.msra.mxu0 %v1078
    %1516 = vmatprep.subr.bf16.mxu0 %v1083
    %1517 = vmatpush1.bf16.msra.mxu0 %v1082
    %1518 = vmatprep.subr.bf16.mxu0 %v1087
    %1519 = vmatpush1.bf16.msra.mxu0 %v1086
    %1520 = vmatprep.subr.bf16.mxu0 %v1091
    %1521 = vmatpush1.bf16.msra.mxu0 %v1090
    %1522 = vmatprep.subr.bf16.mxu0 %v1095
    %1523 = vmatpush1.bf16.msra.mxu0 %v1094
    %1524 = vmatprep.subr.bf16.mxu0 %v1099
    %1525 = vmatpush1.bf16.msra.mxu0 %v1098
    %1526 = vmatprep.subr.bf16.mxu0 %v1103
    %1527 = vmatpush1.bf16.msra.mxu0 %v1102
    %1528 = vmatprep.subr.bf16.mxu0 %v1107
    %1529 = vmatpush1.bf16.msra.mxu0 %v1106
    %1530 = vmatprep.subr.bf16.mxu0 %v1111
    %1531 = vmatpush1.bf16.msra.mxu0 %v1110
    %1532 = vmatprep.subr.bf16.mxu0 %v1115
    %1533 = vmatpush1.bf16.msra.mxu0 %v1114
    %1534 = vmatprep.mubr.bf16.mxu0 %v369
    %1535 = vmatmul.mubr.bf16.gmra.mrb[0].mxu0 %v368
    %v1536 = vpop.f32.mrb[0].mxu0
    %v1537 = vadd.f32 %v340, %v1536
    %v1538 = vpop.f32.mrb[0].mxu0
    %v1539 = vadd.f32 %v344, %v1538
    %v1540 = vpop.f32.mrb[0].mxu0
    %v1541 = vpop.f32.mrb[0].mxu0
    %1542 = vdwg.mxu0
    %1543 = vmatprep.subr.bf16.mxu0 %v1119
    %1544 = vmatpush1.bf16.msra.mxu0 %v1118
    %1545 = vmatprep.subr.bf16.mxu0 %v1123
    %1546 = vmatpush1.bf16.msra.mxu0 %v1122
    %1547 = vmatprep.subr.bf16.mxu0 %v1127
    %1548 = vmatpush1.bf16.msra.mxu0 %v1126
    %1549 = vmatprep.subr.bf16.mxu0 %v1131
    %1550 = vmatpush1.bf16.msra.mxu0 %v1130
    %1551 = vmatprep.subr.bf16.mxu0 %v1135
    %1552 = vmatpush1.bf16.msra.mxu0 %v1134
    %1553 = vmatprep.subr.bf16.mxu0 %v1139
    %1554 = vmatpush1.bf16.msra.mxu0 %v1138
    %1555 = vmatprep.subr.bf16.mxu0 %v1143
    %1556 = vmatpush1.bf16.msra.mxu0 %v1142
    %1557 = vmatprep.subr.bf16.mxu0 %v1147
    %1558 = vmatpush1.bf16.msra.mxu0 %v1146
    %1559 = vmatprep.subr.bf16.mxu0 %v1151
    %1560 = vmatpush1.bf16.msra.mxu0 %v1150
    %1561 = vmatprep.subr.bf16.mxu0 %v1155
    %1562 = vmatpush1.bf16.msra.mxu0 %v1154
    %1563 = vmatprep.subr.bf16.mxu0 %v1159
    %1564 = vmatpush1.bf16.msra.mxu0 %v1158
    %1565 = vmatprep.subr.bf16.mxu0 %v1163
    %1566 = vmatpush1.bf16.msra.mxu0 %v1162
    %1567 = vmatprep.subr.bf16.mxu0 %v1167
    %1568 = vmatpush1.bf16.msra.mxu0 %v1166
    %1569 = vmatprep.subr.bf16.mxu0 %v1171
    %1570 = vmatpush1.bf16.msra.mxu0 %v1170
    %1571 = vmatprep.subr.bf16.mxu0 %v1175
    %1572 = vmatpush1.bf16.msra.mxu0 %v1174
    %1573 = vmatprep.subr.bf16.mxu0 %v1179
    %1574 = vmatpush1.bf16.msra.mxu0 %v1178
    %1575 = vmatprep.mubr.bf16.mxu0 %v371
    %1576 = vmatmul.mubr.bf16.gmra.mrb[0].mxu0 %v370
    %v1577 = vpop.f32.mrb[0].mxu0
    %v1578 = vadd.f32 %v1537, %v1577
    %v1579 = vpop.f32.mrb[0].mxu0
    %v1580 = vadd.f32 %v1539, %v1579
    %v1581 = vpop.f32.mrb[0].mxu0
    %v1582 = vpop.f32.mrb[0].mxu0
    %1583 = vdwg.mxu0
    %1584 = vmatprep.subr.bf16.mxu0 %v1183
    %1585 = vmatpush1.bf16.msra.mxu0 %v1182
    %1586 = vmatprep.subr.bf16.mxu0 %v1187
    %1587 = vmatpush1.bf16.msra.mxu0 %v1186
    %1588 = vmatprep.subr.bf16.mxu0 %v1191
    %1589 = vmatpush1.bf16.msra.mxu0 %v1190
    %1590 = vmatprep.subr.bf16.mxu0 %v1195
    %1591 = vmatpush1.bf16.msra.mxu0 %v1194
    %1592 = vmatprep.subr.bf16.mxu0 %v1199
    %1593 = vmatpush1.bf16.msra.mxu0 %v1198
    %1594 = vmatprep.subr.bf16.mxu0 %v1203
    %1595 = vmatpush1.bf16.msra.mxu0 %v1202
    %1596 = vmatprep.subr.bf16.mxu0 %v1207
    %1597 = vmatpush1.bf16.msra.mxu0 %v1206
    %1598 = vmatprep.subr.bf16.mxu0 %v1211
    %1599 = vmatpush1.bf16.msra.mxu0 %v1210
    %1600 = vmatprep.subr.bf16.mxu0 %v1215
    %1601 = vmatpush1.bf16.msra.mxu0 %v1214
    %1602 = vmatprep.subr.bf16.mxu0 %v1219
    %1603 = vmatpush1.bf16.msra.mxu0 %v1218
    %1604 = vmatprep.subr.bf16.mxu0 %v1223
    %1605 = vmatpush1.bf16.msra.mxu0 %v1222
    %1606 = vmatprep.subr.bf16.mxu0 %v1227
    %1607 = vmatpush1.bf16.msra.mxu0 %v1226
    %1608 = vmatprep.subr.bf16.mxu0 %v1231
    %1609 = vmatpush1.bf16.msra.mxu0 %v1230
    %1610 = vmatprep.subr.bf16.mxu0 %v1235
    %1611 = vmatpush1.bf16.msra.mxu0 %v1234
    %1612 = vmatprep.subr.bf16.mxu0 %v1239
    %1613 = vmatpush1.bf16.msra.mxu0 %v1238
    %1614 = vmatprep.subr.bf16.mxu0 %v1243
    %1615 = vmatpush1.bf16.msra.mxu0 %v1242
    %1616 = vmatprep.mubr.bf16.mxu0 %v373
    %1617 = vmatmul.mubr.bf16.gmra.mrb[0].mxu0 %v372
    %v1618 = vpop.f32.mrb[0].mxu0
    %v1619 = vadd.f32 %v1578, %v1618
    %v1620 = vpop.f32.mrb[0].mxu0
    %v1621 = vadd.f32 %v1580, %v1620
    %v1622 = vpop.f32.mrb[0].mxu0
    %v1623 = vpop.f32.mrb[0].mxu0
    %1624 = vdwg.mxu0
    %1625 = vmatprep.subr.bf16.mxu0 %v1247
    %1626 = vmatpush1.bf16.msra.mxu0 %v1246
    %1627 = vmatprep.subr.bf16.mxu0 %v1251
    %1628 = vmatpush1.bf16.msra.mxu0 %v1250
    %1629 = vmatprep.subr.bf16.mxu0 %v1255
    %1630 = vmatpush1.bf16.msra.mxu0 %v1254
    %1631 = vmatprep.subr.bf16.mxu0 %v1259
    %1632 = vmatpush1.bf16.msra.mxu0 %v1258
    %1633 = vmatprep.subr.bf16.mxu0 %v1263
    %1634 = vmatpush1.bf16.msra.mxu0 %v1262
    %1635 = vmatprep.subr.bf16.mxu0 %v1267
    %1636 = vmatpush1.bf16.msra.mxu0 %v1266
    %1637 = vmatprep.subr.bf16.mxu0 %v1271
    %1638 = vmatpush1.bf16.msra.mxu0 %v1270
    %1639 = vmatprep.subr.bf16.mxu0 %v1275
    %1640 = vmatpush1.bf16.msra.mxu0 %v1274
    %1641 = vmatprep.subr.bf16.mxu0 0
    %1642 = vmatpush1.bf16.msra.mxu0 0
    %1643 = vmatprep.subr.bf16.mxu0 0
    %1644 = vmatpush1.bf16.msra.mxu0 0
    %1645 = vmatprep.subr.bf16.mxu0 0
    %1646 = vmatpush1.bf16.msra.mxu0 0
    %1647 = vmatprep.subr.bf16.mxu0 0
    %1648 = vmatpush1.bf16.msra.mxu0 0
    %1649 = vmatprep.subr.bf16.mxu0 0
    %1650 = vmatpush1.bf16.msra.mxu0 0
    %1651 = vmatprep.subr.bf16.mxu0 0
    %1652 = vmatpush1.bf16.msra.mxu0 0
    %1653 = vmatprep.subr.bf16.mxu0 0
    %1654 = vmatpush1.bf16.msra.mxu0 0
    %1655 = vmatprep.subr.bf16.mxu0 0
    %1656 = vmatpush1.bf16.msra.mxu0 0
    %1657 = vmatprep.mubr.bf16.mxu0 0
    %1658 = vmatmul.mubr.bf16.gmra.mrb[0].mxu0 %v374
    %v1659 = vpop.f32.mrb[0].mxu0
    %v1660 = vadd.f32 %v1619, %v1659
    %v1661 = vpop.f32.mrb[0].mxu0
    %v1662 = vadd.f32 %v1621, %v1661
    %v1663 = vpop.f32.mrb[0].mxu0
    %v1664 = vpop.f32.mrb[0].mxu0
    %1665 = vdwg.mxu0
    %1666 = vmatprep.subr.bf16.mxu0 %v1057
    %1667 = vmatpush1.bf16.msra.mxu0 %v1056
    %1668 = vmatprep.subr.bf16.mxu0 %v1061
    %1669 = vmatpush1.bf16.msra.mxu0 %v1060
    %1670 = vmatprep.subr.bf16.mxu0 %v1065
    %1671 = vmatpush1.bf16.msra.mxu0 %v1064
    %1672 = vmatprep.subr.bf16.mxu0 %v1069
    %1673 = vmatpush1.bf16.msra.mxu0 %v1068
    %1674 = vmatprep.subr.bf16.mxu0 %v1073
    %1675 = vmatpush1.bf16.msra.mxu0 %v1072
    %1676 = vmatprep.subr.bf16.mxu0 %v1077
    %1677 = vmatpush1.bf16.msra.mxu0 %v1076
    %1678 = vmatprep.subr.bf16.mxu0 %v1081
    %1679 = vmatpush1.bf16.msra.mxu0 %v1080
    %1680 = vmatprep.subr.bf16.mxu0 %v1085
    %1681 = vmatpush1.bf16.msra.mxu0 %v1084
    %1682 = vmatprep.subr.bf16.mxu0 %v1089
    %1683 = vmatpush1.bf16.msra.mxu0 %v1088
    %1684 = vmatprep.subr.bf16.mxu0 %v1093
    %1685 = vmatpush1.bf16.msra.mxu0 %v1092
    %1686 = vmatprep.subr.bf16.mxu0 %v1097
    %1687 = vmatpush1.bf16.msra.mxu0 %v1096
    %1688 = vmatprep.subr.bf16.mxu0 %v1101
    %1689 = vmatpush1.bf16.msra.mxu0 %v1100
    %1690 = vmatprep.subr.bf16.mxu0 %v1105
    %1691 = vmatpush1.bf16.msra.mxu0 %v1104
    %1692 = vmatprep.subr.bf16.mxu0 %v1109
    %1693 = vmatpush1.bf16.msra.mxu0 %v1108
    %1694 = vmatprep.subr.bf16.mxu0 %v1113
    %1695 = vmatpush1.bf16.msra.mxu0 %v1112
    %1696 = vmatprep.subr.bf16.mxu0 %v1117
    %1697 = vmatpush1.bf16.msra.mxu0 %v1116
    %1698 = vmatprep.mubr.bf16.mxu0 %v369
    %1699 = vmatmul.mubr.bf16.gmra.mrb[0].mxu0 %v368
    %v1700 = vpop.f32.mrb[0].mxu0
    %v1701 = vadd.f32 %v348, %v1700
    %v1702 = vpop.f32.mrb[0].mxu0
    %v1703 = vadd.f32 %v352, %v1702
    %v1704 = vpop.f32.mrb[0].mxu0
    %v1705 = vpop.f32.mrb[0].mxu0
    %1706 = vdwg.mxu0
    %1707 = vmatprep.subr.bf16.mxu0 %v1121
    %1708 = vmatpush1.bf16.msra.mxu0 %v1120
    %1709 = vmatprep.subr.bf16.mxu0 %v1125
    %1710 = vmatpush1.bf16.msra.mxu0 %v1124
    %1711 = vmatprep.subr.bf16.mxu0 %v1129
    %1712 = vmatpush1.bf16.msra.mxu0 %v1128
    %1713 = vmatprep.subr.bf16.mxu0 %v1133
    %1714 = vmatpush1.bf16.msra.mxu0 %v1132
    %1715 = vmatprep.subr.bf16.mxu0 %v1137
    %1716 = vmatpush1.bf16.msra.mxu0 %v1136
    %1717 = vmatprep.subr.bf16.mxu0 %v1141
    %1718 = vmatpush1.bf16.msra.mxu0 %v1140
    %1719 = vmatprep.subr.bf16.mxu0 %v1145
    %1720 = vmatpush1.bf16.msra.mxu0 %v1144
    %1721 = vmatprep.subr.bf16.mxu0 %v1149
    %1722 = vmatpush1.bf16.msra.mxu0 %v1148
    %1723 = vmatprep.subr.bf16.mxu0 %v1153
    %1724 = vmatpush1.bf16.msra.mxu0 %v1152
    %1725 = vmatprep.subr.bf16.mxu0 %v1157
    %1726 = vmatpush1.bf16.msra.mxu0 %v1156
    %1727 = vmatprep.subr.bf16.mxu0 %v1161
    %1728 = vmatpush1.bf16.msra.mxu0 %v1160
    %1729 = vmatprep.subr.bf16.mxu0 %v1165
    %1730 = vmatpush1.bf16.msra.mxu0 %v1164
    %1731 = vmatprep.subr.bf16.mxu0 %v1169
    %1732 = vmatpush1.bf16.msra.mxu0 %v1168
    %1733 = vmatprep.subr.bf16.mxu0 %v1173
    %1734 = vmatpush1.bf16.msra.mxu0 %v1172
    %1735 = vmatprep.subr.bf16.mxu0 %v1177
    %1736 = vmatpush1.bf16.msra.mxu0 %v1176
    %1737 = vmatprep.subr.bf16.mxu0 %v1181
    %1738 = vmatpush1.bf16.msra.mxu0 %v1180
    %1739 = vmatprep.mubr.bf16.mxu0 %v371
    %1740 = vmatmul.mubr.bf16.gmra.mrb[0].mxu0 %v370
    %v1741 = vpop.f32.mrb[0].mxu0
    %v1742 = vadd.f32 %v1701, %v1741
    %v1743 = vpop.f32.mrb[0].mxu0
    %v1744 = vadd.f32 %v1703, %v1743
    %v1745 = vpop.f32.mrb[0].mxu0
    %v1746 = vpop.f32.mrb[0].mxu0
    %1747 = vdwg.mxu0
    %1748 = vmatprep.subr.bf16.mxu0 %v1185
    %1749 = vmatpush1.bf16.msra.mxu0 %v1184
    %1750 = vmatprep.subr.bf16.mxu0 %v1189
    %1751 = vmatpush1.bf16.msra.mxu0 %v1188
    %1752 = vmatprep.subr.bf16.mxu0 %v1193
    %1753 = vmatpush1.bf16.msra.mxu0 %v1192
    %1754 = vmatprep.subr.bf16.mxu0 %v1197
    %1755 = vmatpush1.bf16.msra.mxu0 %v1196
    %1756 = vmatprep.subr.bf16.mxu0 %v1201
    %1757 = vmatpush1.bf16.msra.mxu0 %v1200
    %1758 = vmatprep.subr.bf16.mxu0 %v1205
    %1759 = vmatpush1.bf16.msra.mxu0 %v1204
    %1760 = vmatprep.subr.bf16.mxu0 %v1209
    %1761 = vmatpush1.bf16.msra.mxu0 %v1208
    %1762 = vmatprep.subr.bf16.mxu0 %v1213
    %1763 = vmatpush1.bf16.msra.mxu0 %v1212
    %1764 = vmatprep.subr.bf16.mxu0 %v1217
    %1765 = vmatpush1.bf16.msra.mxu0 %v1216
    %1766 = vmatprep.subr.bf16.mxu0 %v1221
    %1767 = vmatpush1.bf16.msra.mxu0 %v1220
    %1768 = vmatprep.subr.bf16.mxu0 %v1225
    %1769 = vmatpush1.bf16.msra.mxu0 %v1224
    %1770 = vmatprep.subr.bf16.mxu0 %v1229
    %1771 = vmatpush1.bf16.msra.mxu0 %v1228
    %1772 = vmatprep.subr.bf16.mxu0 %v1233
    %1773 = vmatpush1.bf16.msra.mxu0 %v1232
    %1774 = vmatprep.subr.bf16.mxu0 %v1237
    %1775 = vmatpush1.bf16.msra.mxu0 %v1236
    %1776 = vmatprep.subr.bf16.mxu0 %v1241
    %1777 = vmatpush1.bf16.msra.mxu0 %v1240
    %1778 = vmatprep.subr.bf16.mxu0 %v1245
    %1779 = vmatpush1.bf16.msra.mxu0 %v1244
    %1780 = vmatprep.mubr.bf16.mxu0 %v373
    %1781 = vmatmul.mubr.bf16.gmra.mrb[0].mxu0 %v372
    %v1782 = vpop.f32.mrb[0].mxu0
    %v1783 = vadd.f32 %v1742, %v1782
    %v1784 = vpop.f32.mrb[0].mxu0
    %v1785 = vadd.f32 %v1744, %v1784
    %v1786 = vpop.f32.mrb[0].mxu0
    %v1787 = vpop.f32.mrb[0].mxu0
    %1788 = vdwg.mxu0
    %1789 = vmatprep.subr.bf16.mxu0 %v1249
    %1790 = vmatpush1.bf16.msra.mxu0 %v1248
    %1791 = vmatprep.subr.bf16.mxu0 %v1253
    %1792 = vmatpush1.bf16.msra.mxu0 %v1252
    %1793 = vmatprep.subr.bf16.mxu0 %v1257
    %1794 = vmatpush1.bf16.msra.mxu0 %v1256
    %1795 = vmatprep.subr.bf16.mxu0 %v1261
    %1796 = vmatpush1.bf16.msra.mxu0 %v1260
    %1797 = vmatprep.subr.bf16.mxu0 %v1265
    %1798 = vmatpush1.bf16.msra.mxu0 %v1264
    %1799 = vmatprep.subr.bf16.mxu0 %v1269
    %1800 = vmatpush1.bf16.msra.mxu0 %v1268
    %1801 = vmatprep.subr.bf16.mxu0 %v1273
    %1802 = vmatpush1.bf16.msra.mxu0 %v1272
    %1803 = vmatprep.subr.bf16.mxu0 %v1277
    %1804 = vmatpush1.bf16.msra.mxu0 %v1276
    %1805 = vmatprep.subr.bf16.mxu0 0
    %1806 = vmatpush1.bf16.msra.mxu0 0
    %1807 = vmatprep.subr.bf16.mxu0 0
    %1808 = vmatpush1.bf16.msra.mxu0 0
    %1809 = vmatprep.subr.bf16.mxu0 0
    %1810 = vmatpush1.bf16.msra.mxu0 0
    %1811 = vmatprep.subr.bf16.mxu0 0
    %1812 = vmatpush1.bf16.msra.mxu0 0
    %1813 = vmatprep.subr.bf16.mxu0 0
    %1814 = vmatpush1.bf16.msra.mxu0 0
    %1815 = vmatprep.subr.bf16.mxu0 0
    %1816 = vmatpush1.bf16.msra.mxu0 0
    %1817 = vmatprep.subr.bf16.mxu0 0
    %1818 = vmatpush1.bf16.msra.mxu0 0
    %1819 = vmatprep.subr.bf16.mxu0 0
    %1820 = vmatpush1.bf16.msra.mxu0 0
    %1821 = vmatprep.mubr.bf16.mxu0 0
    %1822 = vmatmul.mubr.bf16.gmra.mrb[0].mxu0 %v374
    %v1823 = vpop.f32.mrb[0].mxu0
    %v1824 = vadd.f32 %v1783, %v1823
    %v1825 = vpop.f32.mrb[0].mxu0
    %v1826 = vadd.f32 %v1785, %v1825
    %v1827 = vpop.f32.mrb[0].mxu0
    %v1828 = vpop.f32.mrb[0].mxu0
    %1829 = vdwg.mxu0
    %v1830 = vmax.f32 %v1660, 0.0
    %v1831 = vmax.f32 %v1662, 0.0
    %v1832 = vmax.f32 %v1824, 0.0
    %v1833 = vmax.f32 %v1826, 0.0
    %v1834 = vpack.c.bf16 %v1830, %v1830
    %v1835 = vpack.c.bf16 %v1831, %v1831
    %v1836 = vpack.c.bf16 %v1832, %v1832
    %v1837 = vpack.c.bf16 %v1833, %v1833
    %v1838 = vld [vmem:[#allocation5] sm:$0xff]
    %v1839 = vld [vmem:[#allocation5 + $0x8] sm:$0xff]
    %v1840 = vld [vmem:[#allocation5 + $0x10] sm:$0xff]
    %v1841 = vld [vmem:[#allocation5 + $0x18] sm:$0xff]
    %v1842 = vld [vmem:[#allocation5 + $0x20] sm:$0xff]
    %v1843 = vld [vmem:[#allocation5 + $0x28] sm:$0xff]
    %v1844 = vld [vmem:[#allocation5 + $0x30] sm:$0xff]
    %v1845 = vld [vmem:[#allocation5 + $0x38] sm:$0xff]
    %v1846 = vld [vmem:[#allocation5 + $0x40] sm:$0xff]
    %v1847 = vld [vmem:[#allocation5 + $0x48] sm:$0xff]
    %v1848 = vld [vmem:[#allocation5 + $0x50] sm:$0xff]
    %v1849 = vld [vmem:[#allocation5 + $0x58] sm:$0xff]
    %v1850 = vld [vmem:[#allocation5 + $0x60] sm:$0xff]
    %v1851 = vld [vmem:[#allocation5 + $0x68] sm:$0xff]
    %v1852 = vld [vmem:[#allocation5 + $0x70] sm:$0xff]
    %v1853 = vld [vmem:[#allocation5 + $0x78] sm:$0xff]
    %v1854 = vld [vmem:[#allocation5 + $0x80] sm:$0xff]
    %v1855 = vld [vmem:[#allocation5 + $0x88] sm:$0xff]
    %v1856 = vld [vmem:[#allocation5 + $0x90] sm:$0xff]
    %v1857 = vld [vmem:[#allocation5 + $0x98] sm:$0xff]
    %v1858 = vld [vmem:[#allocation5 + $0xa0] sm:$0xff]
    %v1859 = vld [vmem:[#allocation5 + $0xa8] sm:$0xff]
    %v1860 = vld [vmem:[#allocation5 + $0xb0] sm:$0xff]
    %v1861 = vld [vmem:[#allocation5 + $0xb8] sm:$0xff]
    %v1862 = vld [vmem:[#allocation5 + $0xc0] sm:$0xff]
    %v1863 = vld [vmem:[#allocation5 + $0xc8] sm:$0xff]
    %v1864 = vld [vmem:[#allocation5 + $0xd0] sm:$0xff]
    %v1865 = vld [vmem:[#allocation5 + $0xd8] sm:$0xff]
    %v1866 = vld [vmem:[#allocation5 + $0xe0] sm:$0xff]
    %v1867 = vld [vmem:[#allocation5 + $0xe8] sm:$0xff]
    %v1868 = vld [vmem:[#allocation5 + $0xf0] sm:$0xff]
    %v1869 = vld [vmem:[#allocation5 + $0xf8] sm:$0xff]
    %v1870 = vld [vmem:[#allocation5 + $0x100] sm:$0xff]
    %v1871 = vld [vmem:[#allocation5 + $0x108] sm:$0xff]
    %v1872 = vld [vmem:[#allocation5 + $0x110] sm:$0xff]
    %v1873 = vld [vmem:[#allocation5 + $0x118] sm:$0xff]
    %v1874 = vld [vmem:[#allocation5 + $0x120] sm:$0xff]
    %v1875 = vld [vmem:[#allocation5 + $0x128] sm:$0xff]
    %v1876 = vld [vmem:[#allocation5 + $0x130] sm:$0xff]
    %v1877 = vld [vmem:[#allocation5 + $0x138] sm:$0xff]
    %v1878 = vld [vmem:[#allocation5 + $0x140] sm:$0xff]
    %v1879 = vld [vmem:[#allocation5 + $0x148] sm:$0xff]
    %v1880 = vld [vmem:[#allocation5 + $0x150] sm:$0xff]
    %v1881 = vld [vmem:[#allocation5 + $0x158] sm:$0xff]
    %v1882 = vld [vmem:[#allocation5 + $0x160] sm:$0xff]
    %v1883 = vld [vmem:[#allocation5 + $0x168] sm:$0xff]
    %v1884 = vld [vmem:[#allocation5 + $0x170] sm:$0xff]
    %v1885 = vld [vmem:[#allocation5 + $0x178] sm:$0xff]
    %v1886 = vld [vmem:[#allocation5 + $0x180] sm:$0xff]
    %v1887 = vld [vmem:[#allocation5 + $0x188] sm:$0xff]
    %v1888 = vld [vmem:[#allocation5 + $0x190] sm:$0xff]
    %v1889 = vld [vmem:[#allocation5 + $0x198] sm:$0xff]
    %v1890 = vld [vmem:[#allocation5 + $0x1a0] sm:$0xff]
    %v1891 = vld [vmem:[#allocation5 + $0x1a8] sm:$0xff]
    %v1892 = vld [vmem:[#allocation5 + $0x1b0] sm:$0xff]
    %v1893 = vld [vmem:[#allocation5 + $0x1b8] sm:$0xff]
    %v1894 = vld [vmem:[#allocation5 + $0x1c0] sm:$0xff]
    %v1895 = vld [vmem:[#allocation5 + $0x1c8] sm:$0xff]
    %v1896 = vld [vmem:[#allocation5 + $0x1d0] sm:$0xff]
    %v1897 = vld [vmem:[#allocation5 + $0x1d8] sm:$0xff]
    %v1898 = vld [vmem:[#allocation5 + $0x1e0] sm:$0xff]
    %v1899 = vld [vmem:[#allocation5 + $0x1e8] sm:$0xff]
    %v1900 = vld [vmem:[#allocation5 + $0x1f0] sm:$0xff]
    %v1901 = vld [vmem:[#allocation5 + $0x1f8] sm:$0xff]
    %v1902 = vld [vmem:[%s5] sm:$0x3]
    %v1904 = vlaneseq
    %v1905 = vshrl.u32 %v1904, 7
    %v1906 = vsub.s32 0, %v1905
    %v1907 = vrot.slane %v1902, %v1906
    %v1908 = vlaneseq
    %v1909 = vshrl.u32 %v1908, 7
    %v1910 = vsub.s32 1, %v1909
    %v1911 = vrot.slane %v1902, %v1910
    %v1978 = vunpack.c.l.b16 %v1838
    %v1979 = vunpack.c.h.b16 %v1838
    %v1980 = vunpack.c.l.b16 %v1839
    %v1981 = vunpack.c.h.b16 %v1839
    %v1982 = vunpack.c.l.b16 %v1840
    %v1983 = vunpack.c.h.b16 %v1840
    %v1984 = vunpack.c.l.b16 %v1841
    %v1985 = vunpack.c.h.b16 %v1841
    %v1986 = vunpack.c.l.b16 %v1842
    %v1987 = vunpack.c.h.b16 %v1842
    %v1988 = vunpack.c.l.b16 %v1843
    %v1989 = vunpack.c.h.b16 %v1843
    %v1990 = vunpack.c.l.b16 %v1844
    %v1991 = vunpack.c.h.b16 %v1844
    %v1992 = vunpack.c.l.b16 %v1845
    %v1993 = vunpack.c.h.b16 %v1845
    %v1994 = vunpack.c.l.b16 %v1846
    %v1995 = vunpack.c.h.b16 %v1846
    %v1996 = vunpack.c.l.b16 %v1847
    %v1997 = vunpack.c.h.b16 %v1847
    %v1998 = vunpack.c.l.b16 %v1848
    %v1999 = vunpack.c.h.b16 %v1848
    %v2000 = vunpack.c.l.b16 %v1849
    %v2001 = vunpack.c.h.b16 %v1849
    %v2002 = vunpack.c.l.b16 %v1850
    %v2003 = vunpack.c.h.b16 %v1850
    %v2004 = vunpack.c.l.b16 %v1851
    %v2005 = vunpack.c.h.b16 %v1851
    %v2006 = vunpack.c.l.b16 %v1852
    %v2007 = vunpack.c.h.b16 %v1852
    %v2008 = vunpack.c.l.b16 %v1853
    %v2009 = vunpack.c.h.b16 %v1853
    %v2010 = vunpack.c.l.b16 %v1854
    %v2011 = vunpack.c.h.b16 %v1854
    %v2012 = vunpack.c.l.b16 %v1855
    %v2013 = vunpack.c.h.b16 %v1855
    %v2014 = vunpack.c.l.b16 %v1856
    %v2015 = vunpack.c.h.b16 %v1856
    %v2016 = vunpack.c.l.b16 %v1857
    %v2017 = vunpack.c.h.b16 %v1857
    %v2018 = vunpack.c.l.b16 %v1858
    %v2019 = vunpack.c.h.b16 %v1858
    %v2020 = vunpack.c.l.b16 %v1859
    %v2021 = vunpack.c.h.b16 %v1859
    %v2022 = vunpack.c.l.b16 %v1860
    %v2023 = vunpack.c.h.b16 %v1860
    %v2024 = vunpack.c.l.b16 %v1861
    %v2025 = vunpack.c.h.b16 %v1861
    %v2026 = vunpack.c.l.b16 %v1862
    %v2027 = vunpack.c.h.b16 %v1862
    %v2028 = vunpack.c.l.b16 %v1863
    %v2029 = vunpack.c.h.b16 %v1863
    %v2030 = vunpack.c.l.b16 %v1864
    %v2031 = vunpack.c.h.b16 %v1864
    %v2032 = vunpack.c.l.b16 %v1865
    %v2033 = vunpack.c.h.b16 %v1865
    %v2034 = vunpack.c.l.b16 %v1866
    %v2035 = vunpack.c.h.b16 %v1866
    %v2036 = vunpack.c.l.b16 %v1867
    %v2037 = vunpack.c.h.b16 %v1867
    %v2038 = vunpack.c.l.b16 %v1868
    %v2039 = vunpack.c.h.b16 %v1868
    %v2040 = vunpack.c.l.b16 %v1869
    %v2041 = vunpack.c.h.b16 %v1869
    %v2042 = vunpack.c.l.b16 %v1870
    %v2043 = vunpack.c.h.b16 %v1870
    %v2044 = vunpack.c.l.b16 %v1871
    %v2045 = vunpack.c.h.b16 %v1871
    %v2046 = vunpack.c.l.b16 %v1872
    %v2047 = vunpack.c.h.b16 %v1872
    %v2048 = vunpack.c.l.b16 %v1873
    %v2049 = vunpack.c.h.b16 %v1873
    %v2050 = vunpack.c.l.b16 %v1874
    %v2051 = vunpack.c.h.b16 %v1874
    %v2052 = vunpack.c.l.b16 %v1875
    %v2053 = vunpack.c.h.b16 %v1875
    %v2054 = vunpack.c.l.b16 %v1876
    %v2055 = vunpack.c.h.b16 %v1876
    %v2056 = vunpack.c.l.b16 %v1877
    %v2057 = vunpack.c.h.b16 %v1877
    %v2058 = vunpack.c.l.b16 %v1878
    %v2059 = vunpack.c.h.b16 %v1878
    %v2060 = vunpack.c.l.b16 %v1879
    %v2061 = vunpack.c.h.b16 %v1879
    %v2062 = vunpack.c.l.b16 %v1880
    %v2063 = vunpack.c.h.b16 %v1880
    %v2064 = vunpack.c.l.b16 %v1881
    %v2065 = vunpack.c.h.b16 %v1881
    %v2066 = vunpack.c.l.b16 %v1882
    %v2067 = vunpack.c.h.b16 %v1882
    %v2068 = vunpack.c.l.b16 %v1883
    %v2069 = vunpack.c.h.b16 %v1883
    %v2070 = vunpack.c.l.b16 %v1884
    %v2071 = vunpack.c.h.b16 %v1884
    %v2072 = vunpack.c.l.b16 %v1885
    %v2073 = vunpack.c.h.b16 %v1885
    %v2074 = vunpack.c.l.b16 %v1886
    %v2075 = vunpack.c.h.b16 %v1886
    %v2076 = vunpack.c.l.b16 %v1887
    %v2077 = vunpack.c.h.b16 %v1887
    %v2078 = vunpack.c.l.b16 %v1888
    %v2079 = vunpack.c.h.b16 %v1888
    %v2080 = vunpack.c.l.b16 %v1889
    %v2081 = vunpack.c.h.b16 %v1889
    %v2082 = vunpack.c.l.b16 %v1890
    %v2083 = vunpack.c.h.b16 %v1890
    %v2084 = vunpack.c.l.b16 %v1891
    %v2085 = vunpack.c.h.b16 %v1891
    %v2086 = vunpack.c.l.b16 %v1892
    %v2087 = vunpack.c.h.b16 %v1892
    %v2088 = vunpack.c.l.b16 %v1893
    %v2089 = vunpack.c.h.b16 %v1893
    %v2090 = vunpack.c.l.b16 %v1894
    %v2091 = vunpack.c.h.b16 %v1894
    %v2092 = vunpack.c.l.b16 %v1895
    %v2093 = vunpack.c.h.b16 %v1895
    %v2094 = vunpack.c.l.b16 %v1896
    %v2095 = vunpack.c.h.b16 %v1896
    %v2096 = vunpack.c.l.b16 %v1897
    %v2097 = vunpack.c.h.b16 %v1897
    %v2098 = vunpack.c.l.b16 %v1898
    %v2099 = vunpack.c.h.b16 %v1898
    %v2100 = vunpack.c.l.b16 %v1899
    %v2101 = vunpack.c.h.b16 %v1899
    %v2102 = vunpack.c.l.b16 %v1900
    %v2103 = vunpack.c.h.b16 %v1900
    %v2104 = vunpack.c.l.b16 %v1901
    %v2105 = vunpack.c.h.b16 %v1901
    %v2106 = vpack.c.b16 %v1980, %v1978
    %v2107 = vpack.c.b16 %v1981, %v1979
    %v2108 = vpack.c.b16 %v1984, %v1982
    %v2109 = vpack.c.b16 %v1985, %v1983
    %v2110 = vpack.c.b16 %v1988, %v1986
    %v2111 = vpack.c.b16 %v1989, %v1987
    %v2112 = vpack.c.b16 %v1992, %v1990
    %v2113 = vpack.c.b16 %v1993, %v1991
    %v2114 = vpack.c.b16 %v1996, %v1994
    %v2115 = vpack.c.b16 %v1997, %v1995
    %v2116 = vpack.c.b16 %v2000, %v1998
    %v2117 = vpack.c.b16 %v2001, %v1999
    %v2118 = vpack.c.b16 %v2004, %v2002
    %v2119 = vpack.c.b16 %v2005, %v2003
    %v2120 = vpack.c.b16 %v2008, %v2006
    %v2121 = vpack.c.b16 %v2009, %v2007
    %v2122 = vpack.c.b16 %v2012, %v2010
    %v2123 = vpack.c.b16 %v2013, %v2011
    %v2124 = vpack.c.b16 %v2016, %v2014
    %v2125 = vpack.c.b16 %v2017, %v2015
    %v2126 = vpack.c.b16 %v2020, %v2018
    %v2127 = vpack.c.b16 %v2021, %v2019
    %v2128 = vpack.c.b16 %v2024, %v2022
    %v2129 = vpack.c.b16 %v2025, %v2023
    %v2130 = vpack.c.b16 %v2028, %v2026
    %v2131 = vpack.c.b16 %v2029, %v2027
    %v2132 = vpack.c.b16 %v2032, %v2030
    %v2133 = vpack.c.b16 %v2033, %v2031
    %v2134 = vpack.c.b16 %v2036, %v2034
    %v2135 = vpack.c.b16 %v2037, %v2035
    %v2136 = vpack.c.b16 %v2040, %v2038
    %v2137 = vpack.c.b16 %v2041, %v2039
    %v2138 = vpack.c.b16 %v2044, %v2042
    %v2139 = vpack.c.b16 %v2045, %v2043
    %v2140 = vpack.c.b16 %v2048, %v2046
    %v2141 = vpack.c.b16 %v2049, %v2047
    %v2142 = vpack.c.b16 %v2052, %v2050
    %v2143 = vpack.c.b16 %v2053, %v2051
    %v2144 = vpack.c.b16 %v2056, %v2054
    %v2145 = vpack.c.b16 %v2057, %v2055
    %v2146 = vpack.c.b16 %v2060, %v2058
    %v2147 = vpack.c.b16 %v2061, %v2059
    %v2148 = vpack.c.b16 %v2064, %v2062
    %v2149 = vpack.c.b16 %v2065, %v2063
    %v2150 = vpack.c.b16 %v2068, %v2066
    %v2151 = vpack.c.b16 %v2069, %v2067
    %v2152 = vpack.c.b16 %v2072, %v2070
    %v2153 = vpack.c.b16 %v2073, %v2071
    %v2154 = vpack.c.b16 %v2076, %v2074
    %v2155 = vpack.c.b16 %v2077, %v2075
    %v2156 = vpack.c.b16 %v2080, %v2078
    %v2157 = vpack.c.b16 %v2081, %v2079
    %v2158 = vpack.c.b16 %v2084, %v2082
    %v2159 = vpack.c.b16 %v2085, %v2083
    %v2160 = vpack.c.b16 %v2088, %v2086
    %v2161 = vpack.c.b16 %v2089, %v2087
    %v2162 = vpack.c.b16 %v2092, %v2090
    %v2163 = vpack.c.b16 %v2093, %v2091
    %v2164 = vpack.c.b16 %v2096, %v2094
    %v2165 = vpack.c.b16 %v2097, %v2095
    %v2166 = vpack.c.b16 %v2100, %v2098
    %v2167 = vpack.c.b16 %v2101, %v2099
    %v2168 = vpack.c.b16 %v2104, %v2102
    %v2169 = vpack.c.b16 %v2105, %v2103
    %2234 = vmatprep.subr.bf16.mxu0 %v2107
    %2235 = vmatpush1.bf16.msra.mxu0 %v2106
    %2236 = vmatprep.subr.bf16.mxu0 %v2109
    %2237 = vmatpush1.bf16.msra.mxu0 %v2108
    %2238 = vmatprep.subr.bf16.mxu0 %v2111
    %2239 = vmatpush1.bf16.msra.mxu0 %v2110
    %2240 = vmatprep.subr.bf16.mxu0 %v2113
    %2241 = vmatpush1.bf16.msra.mxu0 %v2112
    %2242 = vmatprep.subr.bf16.mxu0 %v2115
    %2243 = vmatpush1.bf16.msra.mxu0 %v2114
    %2244 = vmatprep.subr.bf16.mxu0 %v2117
    %2245 = vmatpush1.bf16.msra.mxu0 %v2116
    %2246 = vmatprep.subr.bf16.mxu0 %v2119
    %2247 = vmatpush1.bf16.msra.mxu0 %v2118
    %2248 = vmatprep.subr.bf16.mxu0 %v2121
    %2249 = vmatpush1.bf16.msra.mxu0 %v2120
    %2250 = vmatprep.subr.bf16.mxu0 %v2123
    %2251 = vmatpush1.bf16.msra.mxu0 %v2122
    %2252 = vmatprep.subr.bf16.mxu0 %v2125
    %2253 = vmatpush1.bf16.msra.mxu0 %v2124
    %2254 = vmatprep.subr.bf16.mxu0 %v2127
    %2255 = vmatpush1.bf16.msra.mxu0 %v2126
    %2256 = vmatprep.subr.bf16.mxu0 %v2129
    %2257 = vmatpush1.bf16.msra.mxu0 %v2128
    %2258 = vmatprep.subr.bf16.mxu0 %v2131
    %2259 = vmatpush1.bf16.msra.mxu0 %v2130
    %2260 = vmatprep.subr.bf16.mxu0 %v2133
    %2261 = vmatpush1.bf16.msra.mxu0 %v2132
    %2262 = vmatprep.subr.bf16.mxu0 %v2135
    %2263 = vmatpush1.bf16.msra.mxu0 %v2134
    %2264 = vmatprep.subr.bf16.mxu0 %v2137
    %2265 = vmatpush1.bf16.msra.mxu0 %v2136
    %2266 = vmatprep.mubr.bf16.mxu0 %v1835
    %2267 = vmatmul.mubr.bf16.gmra.mrb[0].mxu0 %v1834
    %v2268 = vpop.f32.mrb[0].mxu0
    %v2269 = vadd.f32 %v1907, %v2268
    %v2270 = vpop.f32.mrb[0].mxu0
    %v2271 = vadd.f32 %v1911, %v2270
    %v2272 = vpop.f32.mrb[0].mxu0
    %v2273 = vpop.f32.mrb[0].mxu0
    %2274 = vdwg.mxu0
    %2275 = vmatprep.subr.bf16.mxu0 %v2139
    %2276 = vmatpush1.bf16.msra.mxu0 %v2138
    %2277 = vmatprep.subr.bf16.mxu0 %v2141
    %2278 = vmatpush1.bf16.msra.mxu0 %v2140
    %2279 = vmatprep.subr.bf16.mxu0 %v2143
    %2280 = vmatpush1.bf16.msra.mxu0 %v2142
    %2281 = vmatprep.subr.bf16.mxu0 %v2145
    %2282 = vmatpush1.bf16.msra.mxu0 %v2144
    %2283 = vmatprep.subr.bf16.mxu0 %v2147
    %2284 = vmatpush1.bf16.msra.mxu0 %v2146
    %2285 = vmatprep.subr.bf16.mxu0 %v2149
    %2286 = vmatpush1.bf16.msra.mxu0 %v2148
    %2287 = vmatprep.subr.bf16.mxu0 %v2151
    %2288 = vmatpush1.bf16.msra.mxu0 %v2150
    %2289 = vmatprep.subr.bf16.mxu0 %v2153
    %2290 = vmatpush1.bf16.msra.mxu0 %v2152
    %2291 = vmatprep.subr.bf16.mxu0 %v2155
    %2292 = vmatpush1.bf16.msra.mxu0 %v2154
    %2293 = vmatprep.subr.bf16.mxu0 %v2157
    %2294 = vmatpush1.bf16.msra.mxu0 %v2156
    %2295 = vmatprep.subr.bf16.mxu0 %v2159
    %2296 = vmatpush1.bf16.msra.mxu0 %v2158
    %2297 = vmatprep.subr.bf16.mxu0 %v2161
    %2298 = vmatpush1.bf16.msra.mxu0 %v2160
    %2299 = vmatprep.subr.bf16.mxu0 %v2163
    %2300 = vmatpush1.bf16.msra.mxu0 %v2162
    %2301 = vmatprep.subr.bf16.mxu0 %v2165
    %2302 = vmatpush1.bf16.msra.mxu0 %v2164
    %2303 = vmatprep.subr.bf16.mxu0 %v2167
    %2304 = vmatpush1.bf16.msra.mxu0 %v2166
    %2305 = vmatprep.subr.bf16.mxu0 %v2169
    %2306 = vmatpush1.bf16.msra.mxu0 %v2168
    %2307 = vmatprep.mubr.bf16.mxu0 %v1837
    %2308 = vmatmul.mubr.bf16.gmra.mrb[0].mxu0 %v1836
    %v2309 = vpop.f32.mrb[0].mxu0
    %v2310 = vadd.f32 %v2269, %v2309
    %v2311 = vpop.f32.mrb[0].mxu0
    %v2312 = vadd.f32 %v2271, %v2311
    %v2313 = vpop.f32.mrb[0].mxu0
    %v2314 = vpop.f32.mrb[0].mxu0
    %2315 = vdwg.mxu0
    %v2316 = vmax.f32 %v2310, 0.0
    %v2317 = vmax.f32 %v2312, 0.0
    %v2318 = vpack.c.bf16 %v2316, %v2316
    %v2319 = vpack.c.bf16 %v2317, %v2317
    %v2320 = vld [vmem:[%s6] sm:$0xf]
    %v2321 = vld [vmem:[%s6 + $0x4] sm:$0xf]
    %v2322 = vld [vmem:[%s6 + $0x8] sm:$0xf]
    %v2323 = vld [vmem:[%s6 + $0xc] sm:$0xf]
    %v2324 = vld [vmem:[%s6 + $0x10] sm:$0xf]
    %v2325 = vld [vmem:[%s6 + $0x14] sm:$0xf]
    %v2326 = vld [vmem:[%s6 + $0x18] sm:$0xf]
    %v2327 = vld [vmem:[%s6 + $0x1c] sm:$0xf]
    %v2328 = vld [vmem:[%s6 + $0x20] sm:$0xf]
    %v2329 = vld [vmem:[%s6 + $0x24] sm:$0xf]
    %v2330 = vld [vmem:[%s6 + $0x28] sm:$0xf]
    %v2331 = vld [vmem:[%s6 + $0x2c] sm:$0xf]
    %v2332 = vld [vmem:[%s6 + $0x30] sm:$0xf]
    %v2333 = vld [vmem:[%s6 + $0x34] sm:$0xf]
    %v2334 = vld [vmem:[%s6 + $0x38] sm:$0xf]
    %v2335 = vld [vmem:[%s6 + $0x3c] sm:$0xf]
    %v2336 = vld [vmem:[%s6 + $0x40] sm:$0xf]
    %v2337 = vld [vmem:[%s6 + $0x44] sm:$0xf]
    %v2338 = vld [vmem:[%s6 + $0x48] sm:$0xf]
    %v2339 = vld [vmem:[%s6 + $0x4c] sm:$0xf]
    %v2340 = vld [vmem:[%s6 + $0x50] sm:$0xf]
    %v2341 = vld [vmem:[%s6 + $0x54] sm:$0xf]
    %v2342 = vld [vmem:[%s6 + $0x58] sm:$0xf]
    %v2343 = vld [vmem:[%s6 + $0x5c] sm:$0xf]
    %v2344 = vld [vmem:[%s6 + $0x60] sm:$0xf]
    %v2345 = vld [vmem:[%s6 + $0x64] sm:$0xf]
    %v2346 = vld [vmem:[%s6 + $0x68] sm:$0xf]
    %v2347 = vld [vmem:[%s6 + $0x6c] sm:$0xf]
    %v2348 = vld [vmem:[%s6 + $0x70] sm:$0xf]
    %v2349 = vld [vmem:[%s6 + $0x74] sm:$0xf]
    %v2350 = vld [vmem:[%s6 + $0x78] sm:$0xf]
    %v2351 = vld [vmem:[%s6 + $0x7c] sm:$0xf]
    %v2352 = vld [vmem:[%s7] sm:$0x1]
    %v2354 = vlaneseq
    %v2355 = vshrl.u32 %v2354, 7
    %v2356 = vsub.s32 0, %v2355
    %v2357 = vrot.slane %v2352, %v2356
    %v2391 = vunpack.c.l.b16 %v2320
    %v2392 = vunpack.c.l.b16 %v2321
    %v2393 = vunpack.c.l.b16 %v2322
    %v2394 = vunpack.c.l.b16 %v2323
    %v2395 = vunpack.c.l.b16 %v2324
    %v2396 = vunpack.c.l.b16 %v2325
    %v2397 = vunpack.c.l.b16 %v2326
    %v2398 = vunpack.c.l.b16 %v2327
    %v2399 = vunpack.c.l.b16 %v2328
    %v2400 = vunpack.c.l.b16 %v2329
    %v2401 = vunpack.c.l.b16 %v2330
    %v2402 = vunpack.c.l.b16 %v2331
    %v2403 = vunpack.c.l.b16 %v2332
    %v2404 = vunpack.c.l.b16 %v2333
    %v2405 = vunpack.c.l.b16 %v2334
    %v2406 = vunpack.c.l.b16 %v2335
    %v2407 = vunpack.c.l.b16 %v2336
    %v2408 = vunpack.c.l.b16 %v2337
    %v2409 = vunpack.c.l.b16 %v2338
    %v2410 = vunpack.c.l.b16 %v2339
    %v2411 = vunpack.c.l.b16 %v2340
    %v2412 = vunpack.c.l.b16 %v2341
    %v2413 = vunpack.c.l.b16 %v2342
    %v2414 = vunpack.c.l.b16 %v2343
    %v2415 = vunpack.c.l.b16 %v2344
    %v2416 = vunpack.c.l.b16 %v2345
    %v2417 = vunpack.c.l.b16 %v2346
    %v2418 = vunpack.c.l.b16 %v2347
    %v2419 = vunpack.c.l.b16 %v2348
    %v2420 = vunpack.c.l.b16 %v2349
    %v2421 = vunpack.c.l.b16 %v2350
    %v2422 = vunpack.c.l.b16 %v2351
    %v2423 = vpack.c.b16 %v2392, %v2391
    %v2424 = vpack.c.b16 %v2394, %v2393
    %v2425 = vpack.c.b16 %v2396, %v2395
    %v2426 = vpack.c.b16 %v2398, %v2397
    %v2427 = vpack.c.b16 %v2400, %v2399
    %v2428 = vpack.c.b16 %v2402, %v2401
    %v2429 = vpack.c.b16 %v2404, %v2403
    %v2430 = vpack.c.b16 %v2406, %v2405
    %v2431 = vpack.c.b16 %v2408, %v2407
    %v2432 = vpack.c.b16 %v2410, %v2409
    %v2433 = vpack.c.b16 %v2412, %v2411
    %v2434 = vpack.c.b16 %v2414, %v2413
    %v2435 = vpack.c.b16 %v2416, %v2415
    %v2436 = vpack.c.b16 %v2418, %v2417
    %v2437 = vpack.c.b16 %v2420, %v2419
    %v2438 = vpack.c.b16 %v2422, %v2421
    %2455 = vmatprep.subr.bf16.mxu0 0
    %2456 = vmatpush1.bf16.msra.mxu0 %v2423
    %2457 = vmatprep.subr.bf16.mxu0 0
    %2458 = vmatpush1.bf16.msra.mxu0 %v2424
    %2459 = vmatprep.subr.bf16.mxu0 0
    %2460 = vmatpush1.bf16.msra.mxu0 %v2425
    %2461 = vmatprep.subr.bf16.mxu0 0
    %2462 = vmatpush1.bf16.msra.mxu0 %v2426
    %2463 = vmatprep.subr.bf16.mxu0 0
    %2464 = vmatpush1.bf16.msra.mxu0 %v2427
    %2465 = vmatprep.subr.bf16.mxu0 0
    %2466 = vmatpush1.bf16.msra.mxu0 %v2428
    %2467 = vmatprep.subr.bf16.mxu0 0
    %2468 = vmatpush1.bf16.msra.mxu0 %v2429
    %2469 = vmatprep.subr.bf16.mxu0 0
    %2470 = vmatpush1.bf16.msra.mxu0 %v2430
    %2471 = vmatprep.subr.bf16.mxu0 0
    %2472 = vmatpush1.bf16.msra.mxu0 %v2431
    %2473 = vmatprep.subr.bf16.mxu0 0
    %2474 = vmatpush1.bf16.msra.mxu0 %v2432
    %2475 = vmatprep.subr.bf16.mxu0 0
    %2476 = vmatpush1.bf16.msra.mxu0 %v2433
    %2477 = vmatprep.subr.bf16.mxu0 0
    %2478 = vmatpush1.bf16.msra.mxu0 %v2434
    %2479 = vmatprep.subr.bf16.mxu0 0
    %2480 = vmatpush1.bf16.msra.mxu0 %v2435
    %2481 = vmatprep.subr.bf16.mxu0 0
    %2482 = vmatpush1.bf16.msra.mxu0 %v2436
    %2483 = vmatprep.subr.bf16.mxu0 0
    %2484 = vmatpush1.bf16.msra.mxu0 %v2437
    %2485 = vmatprep.subr.bf16.mxu0 0
    %2486 = vmatpush1.bf16.msra.mxu0 %v2438
    %2487 = vmatprep.mubr.bf16.mxu0 %v2319
    %2488 = vmatmul.mubr.bf16.gmra.mrb[0].mxu0 %v2318
    %v2489 = vpop.f32.mrb[0].mxu0
    %v2490 = vadd.f32 %v2357, %v2489
    %v2491 = vpop.f32.mrb[0].mxu0
    %v2492 = vpop.f32.mrb[0].mxu0
    %v2493 = vpop.f32.mrb[0].mxu0
    %2494 = vdwg.mxu0
    %vm2495 = vcmask 523264
    %2496 = vst.msk [vmem:[#allocation11] sm:$0xff] %vm2495, %v2490
    %v2497 = vld [vmem:[%s1] sm:$0xff]
    %v2498 = vmul.f32 %v2490, 0.5
    %v2499 = vmul.f32 %v2498, 1.442695
    %v2500 = vpow.pop %v2499
    %2502 = vrot.lane.b32.xlu0 %v2500, 96
    %v2503 = vpop.permute.xlu0 %2502
    %v2505 = vmul.f32 %v2497, %v2503
    %v2506 = vadd.f32 %v2490, %v2505
    %v2507 = vpack.c.bf16 %v2506, %v2506
    %v2508 = vld [vmem:[%s8] sm:$0xff]
    %v2509 = vld [vmem:[%s8 + $0x8] sm:$0xff]
    %v2510 = vld [vmem:[%s8 + $0x10] sm:$0xff]
    %v2511 = vld [vmem:[%s8 + $0x18] sm:$0xff]
    %v2512 = vld [vmem:[%s9] sm:$0x3]
    %v2514 = vlaneseq
    %v2515 = vshrl.u32 %v2514, 7
    %v2516 = vsub.s32 0, %v2515
    %v2517 = vrot.slane %v2512, %v2516
    %v2518 = vlaneseq
    %v2519 = vshrl.u32 %v2518, 7
    %v2520 = vsub.s32 1, %v2519
    %v2521 = vrot.slane %v2512, %v2520
    %v2528 = vunpack.c.l.b16 %v2508
    %v2529 = vunpack.c.h.b16 %v2508
    %v2530 = vunpack.c.l.b16 %v2509
    %v2531 = vunpack.c.h.b16 %v2509
    %v2532 = vunpack.c.l.b16 %v2510
    %v2533 = vunpack.c.h.b16 %v2510
    %v2534 = vunpack.c.l.b16 %v2511
    %v2535 = vunpack.c.h.b16 %v2511
    %v2536 = vpack.c.b16 %v2530, %v2528
    %v2537 = vpack.c.b16 %v2531, %v2529
    %v2538 = vpack.c.b16 %v2534, %v2532
    %v2539 = vpack.c.b16 %v2535, %v2533
    %vm2544 = vcmask 261120
    %v2546 = vsel %vm2544, %v2507, 0
    %2548 = vmatprep.subr.bf16.mxu0 %v2537
    %2549 = vmatpush1.bf16.msra.mxu0 %v2536
    %2550 = vmatprep.subr.bf16.mxu0 %v2539
    %2551 = vmatpush1.bf16.msra.mxu0 %v2538
    %2552 = vmatprep.subr.bf16.mxu0 0
    %2553 = vmatpush1.bf16.msra.mxu0 0
    %2554 = vmatprep.subr.bf16.mxu0 0
    %2555 = vmatpush1.bf16.msra.mxu0 0
    %2556 = vmatprep.subr.bf16.mxu0 0
    %2557 = vmatpush1.bf16.msra.mxu0 0
    %2558 = vmatprep.subr.bf16.mxu0 0
    %2559 = vmatpush1.bf16.msra.mxu0 0
    %2560 = vmatprep.subr.bf16.mxu0 0
    %2561 = vmatpush1.bf16.msra.mxu0 0
    %2562 = vmatprep.subr.bf16.mxu0 0
    %2563 = vmatpush1.bf16.msra.mxu0 0
    %2564 = vmatprep.subr.bf16.mxu0 0
    %2565 = vmatpush1.bf16.msra.mxu0 0
    %2566 = vmatprep.subr.bf16.mxu0 0
    %2567 = vmatpush1.bf16.msra.mxu0 0
    %2568 = vmatprep.subr.bf16.mxu0 0
    %2569 = vmatpush1.bf16.msra.mxu0 0
    %2570 = vmatprep.subr.bf16.mxu0 0
    %2571 = vmatpush1.bf16.msra.mxu0 0
    %2572 = vmatprep.subr.bf16.mxu0 0
    %2573 = vmatpush1.bf16.msra.mxu0 0
    %2574 = vmatprep.subr.bf16.mxu0 0
    %2575 = vmatpush1.bf16.msra.mxu0 0
    %2576 = vmatprep.subr.bf16.mxu0 0
    %2577 = vmatpush1.bf16.msra.mxu0 0
    %2578 = vmatprep.subr.bf16.mxu0 0
    %2579 = vmatpush1.bf16.msra.mxu0 0
    %2580 = vmatprep.mubr.bf16.mxu0 0
    %2581 = vmatmul.mubr.bf16.gmra.mrb[0].mxu0 %v2546
    %v2582 = vpop.f32.mrb[0].mxu0
    %v2583 = vadd.f32 %v2517, %v2582
    %v2584 = vpop.f32.mrb[0].mxu0
    %v2585 = vadd.f32 %v2521, %v2584
    %v2586 = vpop.f32.mrb[0].mxu0
    %v2587 = vpop.f32.mrb[0].mxu0
    %2588 = vdwg.mxu0
    %v2589 = vmax.f32 %v2583, 0.0
    %v2590 = vmax.f32 %v2585, 0.0
    %v2591 = vpack.c.bf16 %v2589, %v2589
    %v2592 = vpack.c.bf16 %v2590, %v2590
    %v2593 = vld [vmem:[#allocation7] sm:$0xff]
    %v2594 = vld [vmem:[#allocation7 + $0x8] sm:$0xff]
    %v2595 = vld [vmem:[#allocation7 + $0x10] sm:$0xff]
    %v2596 = vld [vmem:[#allocation7 + $0x18] sm:$0xff]
    %v2597 = vld [vmem:[#allocation7 + $0x20] sm:$0xff]
    %v2598 = vld [vmem:[#allocation7 + $0x28] sm:$0xff]
    %v2599 = vld [vmem:[#allocation7 + $0x30] sm:$0xff]
    %v2600 = vld [vmem:[#allocation7 + $0x38] sm:$0xff]
    %v2601 = vld [vmem:[#allocation7 + $0x40] sm:$0xff]
    %v2602 = vld [vmem:[#allocation7 + $0x48] sm:$0xff]
    %v2603 = vld [vmem:[#allocation7 + $0x50] sm:$0xff]
    %v2604 = vld [vmem:[#allocation7 + $0x58] sm:$0xff]
    %v2605 = vld [vmem:[#allocation7 + $0x60] sm:$0xff]
    %v2606 = vld [vmem:[#allocation7 + $0x68] sm:$0xff]
    %v2607 = vld [vmem:[#allocation7 + $0x70] sm:$0xff]
    %v2608 = vld [vmem:[#allocation7 + $0x78] sm:$0xff]
    %v2609 = vld [vmem:[#allocation7 + $0x80] sm:$0xff]
    %v2610 = vld [vmem:[#allocation7 + $0x88] sm:$0xff]
    %v2611 = vld [vmem:[#allocation7 + $0x90] sm:$0xff]
    %v2612 = vld [vmem:[#allocation7 + $0x98] sm:$0xff]
    %v2613 = vld [vmem:[#allocation7 + $0xa0] sm:$0xff]
    %v2614 = vld [vmem:[#allocation7 + $0xa8] sm:$0xff]
    %v2615 = vld [vmem:[#allocation7 + $0xb0] sm:$0xff]
    %v2616 = vld [vmem:[#allocation7 + $0xb8] sm:$0xff]
    %v2617 = vld [vmem:[#allocation7 + $0xc0] sm:$0xff]
    %v2618 = vld [vmem:[#allocation7 + $0xc8] sm:$0xff]
    %v2619 = vld [vmem:[#allocation7 + $0xd0] sm:$0xff]
    %v2620 = vld [vmem:[#allocation7 + $0xd8] sm:$0xff]
    %v2621 = vld [vmem:[#allocation7 + $0xe0] sm:$0xff]
    %v2622 = vld [vmem:[#allocation7 + $0xe8] sm:$0xff]
    %v2623 = vld [vmem:[#allocation7 + $0xf0] sm:$0xff]
    %v2624 = vld [vmem:[#allocation7 + $0xf8] sm:$0xff]
    %v2625 = vld [vmem:[#allocation7 + $0x100] sm:$0xff]
    %v2626 = vld [vmem:[#allocation7 + $0x108] sm:$0xff]
    %v2627 = vld [vmem:[#allocation7 + $0x110] sm:$0xff]
    %v2628 = vld [vmem:[#allocation7 + $0x118] sm:$0xff]
    %v2629 = vld [vmem:[#allocation7 + $0x120] sm:$0xff]
    %v2630 = vld [vmem:[#allocation7 + $0x128] sm:$0xff]
    %v2631 = vld [vmem:[#allocation7 + $0x130] sm:$0xff]
    %v2632 = vld [vmem:[#allocation7 + $0x138] sm:$0xff]
    %v2633 = vld [vmem:[#allocation7 + $0x140] sm:$0xff]
    %v2634 = vld [vmem:[#allocation7 + $0x148] sm:$0xff]
    %v2635 = vld [vmem:[#allocation7 + $0x150] sm:$0xff]
    %v2636 = vld [vmem:[#allocation7 + $0x158] sm:$0xff]
    %v2637 = vld [vmem:[#allocation7 + $0x160] sm:$0xff]
    %v2638 = vld [vmem:[#allocation7 + $0x168] sm:$0xff]
    %v2639 = vld [vmem:[#allocation7 + $0x170] sm:$0xff]
    %v2640 = vld [vmem:[#allocation7 + $0x178] sm:$0xff]
    %v2641 = vld [vmem:[#allocation7 + $0x180] sm:$0xff]
    %v2642 = vld [vmem:[#allocation7 + $0x188] sm:$0xff]
    %v2643 = vld [vmem:[#allocation7 + $0x190] sm:$0xff]
    %v2644 = vld [vmem:[#allocation7 + $0x198] sm:$0xff]
    %v2645 = vld [vmem:[#allocation7 + $0x1a0] sm:$0xff]
    %v2646 = vld [vmem:[#allocation7 + $0x1a8] sm:$0xff]
    %v2647 = vld [vmem:[#allocation7 + $0x1b0] sm:$0xff]
    %v2648 = vld [vmem:[#allocation7 + $0x1b8] sm:$0xff]
    %v2649 = vld [vmem:[#allocation7 + $0x1c0] sm:$0xff]
    %v2650 = vld [vmem:[#allocation7 + $0x1c8] sm:$0xff]
    %v2651 = vld [vmem:[#allocation7 + $0x1d0] sm:$0xff]
    %v2652 = vld [vmem:[#allocation7 + $0x1d8] sm:$0xff]
    %v2653 = vld [vmem:[#allocation7 + $0x1e0] sm:$0xff]
    %v2654 = vld [vmem:[#allocation7 + $0x1e8] sm:$0xff]
    %v2655 = vld [vmem:[#allocation7 + $0x1f0] sm:$0xff]
    %v2656 = vld [vmem:[#allocation7 + $0x1f8] sm:$0xff]
    %v2657 = vld [vmem:[%s11] sm:$0xf]
    %v2659 = vlaneseq
    %v2660 = vshrl.u32 %v2659, 7
    %v2661 = vsub.s32 0, %v2660
    %v2662 = vrot.slane %v2657, %v2661
    %v2663 = vlaneseq
    %v2664 = vshrl.u32 %v2663, 7
    %v2665 = vsub.s32 1, %v2664
    %v2666 = vrot.slane %v2657, %v2665
    %v2667 = vlaneseq
    %v2668 = vshrl.u32 %v2667, 7
    %v2669 = vsub.s32 2, %v2668
    %v2670 = vrot.slane %v2657, %v2669
    %v2671 = vlaneseq
    %v2672 = vshrl.u32 %v2671, 7
    %v2673 = vsub.s32 3, %v2672
    %v2674 = vrot.slane %v2657, %v2673
    %v2743 = vunpack.c.l.b16 %v2593
    %v2744 = vunpack.c.h.b16 %v2593
    %v2745 = vunpack.c.l.b16 %v2594
    %v2746 = vunpack.c.h.b16 %v2594
    %v2747 = vunpack.c.l.b16 %v2595
    %v2748 = vunpack.c.h.b16 %v2595
    %v2749 = vunpack.c.l.b16 %v2596
    %v2750 = vunpack.c.h.b16 %v2596
    %v2751 = vunpack.c.l.b16 %v2597
    %v2752 = vunpack.c.h.b16 %v2597
    %v2753 = vunpack.c.l.b16 %v2598
    %v2754 = vunpack.c.h.b16 %v2598
    %v2755 = vunpack.c.l.b16 %v2599
    %v2756 = vunpack.c.h.b16 %v2599
    %v2757 = vunpack.c.l.b16 %v2600
    %v2758 = vunpack.c.h.b16 %v2600
    %v2759 = vunpack.c.l.b16 %v2601
    %v2760 = vunpack.c.h.b16 %v2601
    %v2761 = vunpack.c.l.b16 %v2602
    %v2762 = vunpack.c.h.b16 %v2602
    %v2763 = vunpack.c.l.b16 %v2603
    %v2764 = vunpack.c.h.b16 %v2603
    %v2765 = vunpack.c.l.b16 %v2604
    %v2766 = vunpack.c.h.b16 %v2604
    %v2767 = vunpack.c.l.b16 %v2605
    %v2768 = vunpack.c.h.b16 %v2605
    %v2769 = vunpack.c.l.b16 %v2606
    %v2770 = vunpack.c.h.b16 %v2606
    %v2771 = vunpack.c.l.b16 %v2607
    %v2772 = vunpack.c.h.b16 %v2607
    %v2773 = vunpack.c.l.b16 %v2608
    %v2774 = vunpack.c.h.b16 %v2608
    %v2775 = vunpack.c.l.b16 %v2609
    %v2776 = vunpack.c.h.b16 %v2609
    %v2777 = vunpack.c.l.b16 %v2610
    %v2778 = vunpack.c.h.b16 %v2610
    %v2779 = vunpack.c.l.b16 %v2611
    %v2780 = vunpack.c.h.b16 %v2611
    %v2781 = vunpack.c.l.b16 %v2612
    %v2782 = vunpack.c.h.b16 %v2612
    %v2783 = vunpack.c.l.b16 %v2613
    %v2784 = vunpack.c.h.b16 %v2613
    %v2785 = vunpack.c.l.b16 %v2614
    %v2786 = vunpack.c.h.b16 %v2614
    %v2787 = vunpack.c.l.b16 %v2615
    %v2788 = vunpack.c.h.b16 %v2615
    %v2789 = vunpack.c.l.b16 %v2616
    %v2790 = vunpack.c.h.b16 %v2616
    %v2791 = vunpack.c.l.b16 %v2617
    %v2792 = vunpack.c.h.b16 %v2617
    %v2793 = vunpack.c.l.b16 %v2618
    %v2794 = vunpack.c.h.b16 %v2618
    %v2795 = vunpack.c.l.b16 %v2619
    %v2796 = vunpack.c.h.b16 %v2619
    %v2797 = vunpack.c.l.b16 %v2620
    %v2798 = vunpack.c.h.b16 %v2620
    %v2799 = vunpack.c.l.b16 %v2621
    %v2800 = vunpack.c.h.b16 %v2621
    %v2801 = vunpack.c.l.b16 %v2622
    %v2802 = vunpack.c.h.b16 %v2622
    %v2803 = vunpack.c.l.b16 %v2623
    %v2804 = vunpack.c.h.b16 %v2623
    %v2805 = vunpack.c.l.b16 %v2624
    %v2806 = vunpack.c.h.b16 %v2624
    %v2807 = vunpack.c.l.b16 %v2625
    %v2808 = vunpack.c.h.b16 %v2625
    %v2809 = vunpack.c.l.b16 %v2626
    %v2810 = vunpack.c.h.b16 %v2626
    %v2811 = vunpack.c.l.b16 %v2627
    %v2812 = vunpack.c.h.b16 %v2627
    %v2813 = vunpack.c.l.b16 %v2628
    %v2814 = vunpack.c.h.b16 %v2628
    %v2815 = vunpack.c.l.b16 %v2629
    %v2816 = vunpack.c.h.b16 %v2629
    %v2817 = vunpack.c.l.b16 %v2630
    %v2818 = vunpack.c.h.b16 %v2630
    %v2819 = vunpack.c.l.b16 %v2631
    %v2820 = vunpack.c.h.b16 %v2631
    %v2821 = vunpack.c.l.b16 %v2632
    %v2822 = vunpack.c.h.b16 %v2632
    %v2823 = vunpack.c.l.b16 %v2633
    %v2824 = vunpack.c.h.b16 %v2633
    %v2825 = vunpack.c.l.b16 %v2634
    %v2826 = vunpack.c.h.b16 %v2634
    %v2827 = vunpack.c.l.b16 %v2635
    %v2828 = vunpack.c.h.b16 %v2635
    %v2829 = vunpack.c.l.b16 %v2636
    %v2830 = vunpack.c.h.b16 %v2636
    %v2831 = vunpack.c.l.b16 %v2637
    %v2832 = vunpack.c.h.b16 %v2637
    %v2833 = vunpack.c.l.b16 %v2638
    %v2834 = vunpack.c.h.b16 %v2638
    %v2835 = vunpack.c.l.b16 %v2639
    %v2836 = vunpack.c.h.b16 %v2639
    %v2837 = vunpack.c.l.b16 %v2640
    %v2838 = vunpack.c.h.b16 %v2640
    %v2839 = vunpack.c.l.b16 %v2641
    %v2840 = vunpack.c.h.b16 %v2641
    %v2841 = vunpack.c.l.b16 %v2642
    %v2842 = vunpack.c.h.b16 %v2642
    %v2843 = vunpack.c.l.b16 %v2643
    %v2844 = vunpack.c.h.b16 %v2643
    %v2845 = vunpack.c.l.b16 %v2644
    %v2846 = vunpack.c.h.b16 %v2644
    %v2847 = vunpack.c.l.b16 %v2645
    %v2848 = vunpack.c.h.b16 %v2645
    %v2849 = vunpack.c.l.b16 %v2646
    %v2850 = vunpack.c.h.b16 %v2646
    %v2851 = vunpack.c.l.b16 %v2647
    %v2852 = vunpack.c.h.b16 %v2647
    %v2853 = vunpack.c.l.b16 %v2648
    %v2854 = vunpack.c.h.b16 %v2648
    %v2855 = vunpack.c.l.b16 %v2649
    %v2856 = vunpack.c.h.b16 %v2649
    %v2857 = vunpack.c.l.b16 %v2650
    %v2858 = vunpack.c.h.b16 %v2650
    %v2859 = vunpack.c.l.b16 %v2651
    %v2860 = vunpack.c.h.b16 %v2651
    %v2861 = vunpack.c.l.b16 %v2652
    %v2862 = vunpack.c.h.b16 %v2652
    %v2863 = vunpack.c.l.b16 %v2653
    %v2864 = vunpack.c.h.b16 %v2653
    %v2865 = vunpack.c.l.b16 %v2654
    %v2866 = vunpack.c.h.b16 %v2654
    %v2867 = vunpack.c.l.b16 %v2655
    %v2868 = vunpack.c.h.b16 %v2655
    %v2869 = vunpack.c.l.b16 %v2656
    %v2870 = vunpack.c.h.b16 %v2656
    %v2871 = vpack.c.b16 %v2747, %v2743
    %v2872 = vpack.c.b16 %v2748, %v2744
    %v2873 = vpack.c.b16 %v2749, %v2745
    %v2874 = vpack.c.b16 %v2750, %v2746
    %v2875 = vpack.c.b16 %v2755, %v2751
    %v2876 = vpack.c.b16 %v2756, %v2752
    %v2877 = vpack.c.b16 %v2757, %v2753
    %v2878 = vpack.c.b16 %v2758, %v2754
    %v2879 = vpack.c.b16 %v2763, %v2759
    %v2880 = vpack.c.b16 %v2764, %v2760
    %v2881 = vpack.c.b16 %v2765, %v2761
    %v2882 = vpack.c.b16 %v2766, %v2762
    %v2883 = vpack.c.b16 %v2771, %v2767
    %v2884 = vpack.c.b16 %v2772, %v2768
    %v2885 = vpack.c.b16 %v2773, %v2769
    %v2886 = vpack.c.b16 %v2774, %v2770
    %v2887 = vpack.c.b16 %v2779, %v2775
    %v2888 = vpack.c.b16 %v2780, %v2776
    %v2889 = vpack.c.b16 %v2781, %v2777
    %v2890 = vpack.c.b16 %v2782, %v2778
    %v2891 = vpack.c.b16 %v2787, %v2783
    %v2892 = vpack.c.b16 %v2788, %v2784
    %v2893 = vpack.c.b16 %v2789, %v2785
    %v2894 = vpack.c.b16 %v2790, %v2786
    %v2895 = vpack.c.b16 %v2795, %v2791
    %v2896 = vpack.c.b16 %v2796, %v2792
    %v2897 = vpack.c.b16 %v2797, %v2793
    %v2898 = vpack.c.b16 %v2798, %v2794
    %v2899 = vpack.c.b16 %v2803, %v2799
    %v2900 = vpack.c.b16 %v2804, %v2800
    %v2901 = vpack.c.b16 %v2805, %v2801
    %v2902 = vpack.c.b16 %v2806, %v2802
    %v2903 = vpack.c.b16 %v2811, %v2807
    %v2904 = vpack.c.b16 %v2812, %v2808
    %v2905 = vpack.c.b16 %v2813, %v2809
    %v2906 = vpack.c.b16 %v2814, %v2810
    %v2907 = vpack.c.b16 %v2819, %v2815
    %v2908 = vpack.c.b16 %v2820, %v2816
    %v2909 = vpack.c.b16 %v2821, %v2817
    %v2910 = vpack.c.b16 %v2822, %v2818
    %v2911 = vpack.c.b16 %v2827, %v2823
    %v2912 = vpack.c.b16 %v2828, %v2824
    %v2913 = vpack.c.b16 %v2829, %v2825
    %v2914 = vpack.c.b16 %v2830, %v2826
    %v2915 = vpack.c.b16 %v2835, %v2831
    %v2916 = vpack.c.b16 %v2836, %v2832
    %v2917 = vpack.c.b16 %v2837, %v2833
    %v2918 = vpack.c.b16 %v2838, %v2834
    %v2919 = vpack.c.b16 %v2843, %v2839
    %v2920 = vpack.c.b16 %v2844, %v2840
    %v2921 = vpack.c.b16 %v2845, %v2841
    %v2922 = vpack.c.b16 %v2846, %v2842
    %v2923 = vpack.c.b16 %v2851, %v2847
    %v2924 = vpack.c.b16 %v2852, %v2848
    %v2925 = vpack.c.b16 %v2853, %v2849
    %v2926 = vpack.c.b16 %v2854, %v2850
    %v2927 = vpack.c.b16 %v2859, %v2855
    %v2928 = vpack.c.b16 %v2860, %v2856
    %v2929 = vpack.c.b16 %v2861, %v2857
    %v2930 = vpack.c.b16 %v2862, %v2858
    %v2931 = vpack.c.b16 %v2867, %v2863
    %v2932 = vpack.c.b16 %v2868, %v2864
    %v2933 = vpack.c.b16 %v2869, %v2865
    %v2934 = vpack.c.b16 %v2870, %v2866
    %2999 = vmatprep.subr.bf16.mxu0 %v2872
    %3000 = vmatpush1.bf16.msra.mxu0 %v2871
    %3001 = vmatprep.subr.bf16.mxu0 %v2876
    %3002 = vmatpush1.bf16.msra.mxu0 %v2875
    %3003 = vmatprep.subr.bf16.mxu0 %v2880
    %3004 = vmatpush1.bf16.msra.mxu0 %v2879
    %3005 = vmatprep.subr.bf16.mxu0 %v2884
    %3006 = vmatpush1.bf16.msra.mxu0 %v2883
    %3007 = vmatprep.subr.bf16.mxu0 %v2888
    %3008 = vmatpush1.bf16.msra.mxu0 %v2887
    %3009 = vmatprep.subr.bf16.mxu0 %v2892
    %3010 = vmatpush1.bf16.msra.mxu0 %v2891
    %3011 = vmatprep.subr.bf16.mxu0 %v2896
    %3012 = vmatpush1.bf16.msra.mxu0 %v2895
    %3013 = vmatprep.subr.bf16.mxu0 %v2900
    %3014 = vmatpush1.bf16.msra.mxu0 %v2899
    %3015 = vmatprep.subr.bf16.mxu0 %v2904
    %3016 = vmatpush1.bf16.msra.mxu0 %v2903
    %3017 = vmatprep.subr.bf16.mxu0 %v2908
    %3018 = vmatpush1.bf16.msra.mxu0 %v2907
    %3019 = vmatprep.subr.bf16.mxu0 %v2912
    %3020 = vmatpush1.bf16.msra.mxu0 %v2911
    %3021 = vmatprep.subr.bf16.mxu0 %v2916
    %3022 = vmatpush1.bf16.msra.mxu0 %v2915
    %3023 = vmatprep.subr.bf16.mxu0 %v2920
    %3024 = vmatpush1.bf16.msra.mxu0 %v2919
    %3025 = vmatprep.subr.bf16.mxu0 %v2924
    %3026 = vmatpush1.bf16.msra.mxu0 %v2923
    %3027 = vmatprep.subr.bf16.mxu0 %v2928
    %3028 = vmatpush1.bf16.msra.mxu0 %v2927
    %3029 = vmatprep.subr.bf16.mxu0 %v2932
    %3030 = vmatpush1.bf16.msra.mxu0 %v2931
    %3031 = vmatprep.mubr.bf16.mxu0 %v2592
    %3032 = vmatmul.mubr.bf16.gmra.mrb[0].mxu0 %v2591
    %v3033 = vpop.f32.mrb[0].mxu0
    %v3034 = vadd.f32 %v2662, %v3033
    %v3035 = vpop.f32.mrb[0].mxu0
    %v3036 = vadd.f32 %v2666, %v3035
    %v3037 = vpop.f32.mrb[0].mxu0
    %v3038 = vpop.f32.mrb[0].mxu0
    %3039 = vdwg.mxu0
    %3040 = vmatprep.subr.bf16.mxu0 %v2874
    %3041 = vmatpush1.bf16.msra.mxu0 %v2873
    %3042 = vmatprep.subr.bf16.mxu0 %v2878
    %3043 = vmatpush1.bf16.msra.mxu0 %v2877
    %3044 = vmatprep.subr.bf16.mxu0 %v2882
    %3045 = vmatpush1.bf16.msra.mxu0 %v2881
    %3046 = vmatprep.subr.bf16.mxu0 %v2886
    %3047 = vmatpush1.bf16.msra.mxu0 %v2885
    %3048 = vmatprep.subr.bf16.mxu0 %v2890
    %3049 = vmatpush1.bf16.msra.mxu0 %v2889
    %3050 = vmatprep.subr.bf16.mxu0 %v2894
    %3051 = vmatpush1.bf16.msra.mxu0 %v2893
    %3052 = vmatprep.subr.bf16.mxu0 %v2898
    %3053 = vmatpush1.bf16.msra.mxu0 %v2897
    %3054 = vmatprep.subr.bf16.mxu0 %v2902
    %3055 = vmatpush1.bf16.msra.mxu0 %v2901
    %3056 = vmatprep.subr.bf16.mxu0 %v2906
    %3057 = vmatpush1.bf16.msra.mxu0 %v2905
    %3058 = vmatprep.subr.bf16.mxu0 %v2910
    %3059 = vmatpush1.bf16.msra.mxu0 %v2909
    %3060 = vmatprep.subr.bf16.mxu0 %v2914
    %3061 = vmatpush1.bf16.msra.mxu0 %v2913
    %3062 = vmatprep.subr.bf16.mxu0 %v2918
    %3063 = vmatpush1.bf16.msra.mxu0 %v2917
    %3064 = vmatprep.subr.bf16.mxu0 %v2922
    %3065 = vmatpush1.bf16.msra.mxu0 %v2921
    %3066 = vmatprep.subr.bf16.mxu0 %v2926
    %3067 = vmatpush1.bf16.msra.mxu0 %v2925
    %3068 = vmatprep.subr.bf16.mxu0 %v2930
    %3069 = vmatpush1.bf16.msra.mxu0 %v2929
    %3070 = vmatprep.subr.bf16.mxu0 %v2934
    %3071 = vmatpush1.bf16.msra.mxu0 %v2933
    %3072 = vmatprep.mubr.bf16.mxu0 %v2592
    %3073 = vmatmul.mubr.bf16.gmra.mrb[0].mxu0 %v2591
    %v3074 = vpop.f32.mrb[0].mxu0
    %v3075 = vadd.f32 %v2670, %v3074
    %v3076 = vpop.f32.mrb[0].mxu0
    %v3077 = vadd.f32 %v2674, %v3076
    %v3078 = vpop.f32.mrb[0].mxu0
    %v3079 = vpop.f32.mrb[0].mxu0
    %3080 = vdwg.mxu0
    %v3081 = vmax.f32 %v3034, 0.0
    %v3082 = vmax.f32 %v3036, 0.0
    %v3083 = vmax.f32 %v3075, 0.0
    %v3084 = vmax.f32 %v3077, 0.0
    %v3085 = vpack.c.bf16 %v3081, %v3081
    %v3086 = vpack.c.bf16 %v3082, %v3082
    %v3087 = vpack.c.bf16 %v3083, %v3083
    %v3088 = vpack.c.bf16 %v3084, %v3084
    %v3089 = vld [vmem:[#allocation8] sm:$0xff]
    %v3090 = vld [vmem:[#allocation8 + $0x8] sm:$0xff]
    %v3091 = vld [vmem:[#allocation8 + $0x10] sm:$0xff]
    %v3092 = vld [vmem:[#allocation8 + $0x18] sm:$0xf]
    %v3093 = vld [vmem:[#allocation8 + $0x1c] sm:$0xff]
    %v3094 = vld [vmem:[#allocation8 + $0x24] sm:$0xff]
    %v3095 = vld [vmem:[#allocation8 + $0x2c] sm:$0xff]
    %v3096 = vld [vmem:[#allocation8 + $0x34] sm:$0xf]
    %v3097 = vld [vmem:[#allocation8 + $0x38] sm:$0xff]
    %v3098 = vld [vmem:[#allocation8 + $0x40] sm:$0xff]
    %v3099 = vld [vmem:[#allocation8 + $0x48] sm:$0xff]
    %v3100 = vld [vmem:[#allocation8 + $0x50] sm:$0xf]
    %v3101 = vld [vmem:[#allocation8 + $0x54] sm:$0xff]
    %v3102 = vld [vmem:[#allocation8 + $0x5c] sm:$0xff]
    %v3103 = vld [vmem:[#allocation8 + $0x64] sm:$0xff]
    %v3104 = vld [vmem:[#allocation8 + $0x6c] sm:$0xf]
    %v3105 = vld [vmem:[#allocation8 + $0x70] sm:$0xff]
    %v3106 = vld [vmem:[#allocation8 + $0x78] sm:$0xff]
    %v3107 = vld [vmem:[#allocation8 + $0x80] sm:$0xff]
    %v3108 = vld [vmem:[#allocation8 + $0x88] sm:$0xf]
    %v3109 = vld [vmem:[#allocation8 + $0x8c] sm:$0xff]
    %v3110 = vld [vmem:[#allocation8 + $0x94] sm:$0xff]
    %v3111 = vld [vmem:[#allocation8 + $0x9c] sm:$0xff]
    %v3112 = vld [vmem:[#allocation8 + $0xa4] sm:$0xf]
    %v3113 = vld [vmem:[#allocation8 + $0xa8] sm:$0xff]
    %v3114 = vld [vmem:[#allocation8 + $0xb0] sm:$0xff]
    %v3115 = vld [vmem:[#allocation8 + $0xb8] sm:$0xff]
    %v3116 = vld [vmem:[#allocation8 + $0xc0] sm:$0xf]
    %v3117 = vld [vmem:[#allocation8 + $0xc4] sm:$0xff]
    %v3118 = vld [vmem:[#allocation8 + $0xcc] sm:$0xff]
    %v3119 = vld [vmem:[#allocation8 + $0xd4] sm:$0xff]
    %v3120 = vld [vmem:[#allocation8 + $0xdc] sm:$0xf]
    %v3121 = vld [vmem:[#allocation8 + $0xe0] sm:$0xff]
    %v3122 = vld [vmem:[#allocation8 + $0xe8] sm:$0xff]
    %v3123 = vld [vmem:[#allocation8 + $0xf0] sm:$0xff]
    %v3124 = vld [vmem:[#allocation8 + $0xf8] sm:$0xf]
    %v3125 = vld [vmem:[#allocation8 + $0xfc] sm:$0xff]
    %v3126 = vld [vmem:[#allocation8 + $0x104] sm:$0xff]
    %v3127 = vld [vmem:[#allocation8 + $0x10c] sm:$0xff]
    %v3128 = vld [vmem:[#allocation8 + $0x114] sm:$0xf]
    %v3129 = vld [vmem:[#allocation8 + $0x118] sm:$0xff]
    %v3130 = vld [vmem:[#allocation8 + $0x120] sm:$0xff]
    %v3131 = vld [vmem:[#allocation8 + $0x128] sm:$0xff]
    %v3132 = vld [vmem:[#allocation8 + $0x130] sm:$0xf]
    %v3133 = vld [vmem:[#allocation8 + $0x134] sm:$0xff]
    %v3134 = vld [vmem:[#allocation8 + $0x13c] sm:$0xff]
    %v3135 = vld [vmem:[#allocation8 + $0x144] sm:$0xff]
    %v3136 = vld [vmem:[#allocation8 + $0x14c] sm:$0xf]
    %v3137 = vld [vmem:[#allocation8 + $0x150] sm:$0xff]
    %v3138 = vld [vmem:[#allocation8 + $0x158] sm:$0xff]
    %v3139 = vld [vmem:[#allocation8 + $0x160] sm:$0xff]
    %v3140 = vld [vmem:[#allocation8 + $0x168] sm:$0xf]
    %v3141 = vld [vmem:[#allocation8 + $0x16c] sm:$0xff]
    %v3142 = vld [vmem:[#allocation8 + $0x174] sm:$0xff]
    %v3143 = vld [vmem:[#allocation8 + $0x17c] sm:$0xff]
    %v3144 = vld [vmem:[#allocation8 + $0x184] sm:$0xf]
    %v3145 = vld [vmem:[#allocation8 + $0x188] sm:$0xff]
    %v3146 = vld [vmem:[#allocation8 + $0x190] sm:$0xff]
    %v3147 = vld [vmem:[#allocation8 + $0x198] sm:$0xff]
    %v3148 = vld [vmem:[#allocation8 + $0x1a0] sm:$0xf]
    %v3149 = vld [vmem:[#allocation8 + $0x1a4] sm:$0xff]
    %v3150 = vld [vmem:[#allocation8 + $0x1ac] sm:$0xff]
    %v3151 = vld [vmem:[#allocation8 + $0x1b4] sm:$0xff]
    %v3152 = vld [vmem:[#allocation8 + $0x1bc] sm:$0xf]
    %v3153 = vld [vmem:[#allocation8 + $0x1c0] sm:$0xff]
    %v3154 = vld [vmem:[#allocation8 + $0x1c8] sm:$0xff]
    %v3155 = vld [vmem:[#allocation8 + $0x1d0] sm:$0xff]
    %v3156 = vld [vmem:[#allocation8 + $0x1d8] sm:$0xf]
    %v3157 = vld [vmem:[#allocation8 + $0x1dc] sm:$0xff]
    %v3158 = vld [vmem:[#allocation8 + $0x1e4] sm:$0xff]
    %v3159 = vld [vmem:[#allocation8 + $0x1ec] sm:$0xff]
    %v3160 = vld [vmem:[#allocation8 + $0x1f4] sm:$0xf]
    %v3161 = vld [vmem:[#allocation8 + $0x1f8] sm:$0xff]
    %v3162 = vld [vmem:[#allocation8 + $0x200] sm:$0xff]
    %v3163 = vld [vmem:[#allocation8 + $0x208] sm:$0xff]
    %v3164 = vld [vmem:[#allocation8 + $0x210] sm:$0xf]
    %v3165 = vld [vmem:[#allocation8 + $0x214] sm:$0xff]
    %v3166 = vld [vmem:[#allocation8 + $0x21c] sm:$0xff]
    %v3167 = vld [vmem:[#allocation8 + $0x224] sm:$0xff]
    %v3168 = vld [vmem:[#allocation8 + $0x22c] sm:$0xf]
    %v3169 = vld [vmem:[#allocation8 + $0x230] sm:$0xff]
    %v3170 = vld [vmem:[#allocation8 + $0x238] sm:$0xff]
    %v3171 = vld [vmem:[#allocation8 + $0x240] sm:$0xff]
    %v3172 = vld [vmem:[#allocation8 + $0x248] sm:$0xf]
    %v3173 = vld [vmem:[#allocation8 + $0x24c] sm:$0xff]
    %v3174 = vld [vmem:[#allocation8 + $0x254] sm:$0xff]
    %v3175 = vld [vmem:[#allocation8 + $0x25c] sm:$0xff]
    %v3176 = vld [vmem:[#allocation8 + $0x264] sm:$0xf]
    %v3177 = vld [vmem:[#allocation8 + $0x268] sm:$0xff]
    %v3178 = vld [vmem:[#allocation8 + $0x270] sm:$0xff]
    %v3179 = vld [vmem:[#allocation8 + $0x278] sm:$0xff]
    %v3180 = vld [vmem:[#allocation8 + $0x280] sm:$0xf]
    %v3181 = vld [vmem:[#allocation8 + $0x284] sm:$0xff]
    %v3182 = vld [vmem:[#allocation8 + $0x28c] sm:$0xff]
    %v3183 = vld [vmem:[#allocation8 + $0x294] sm:$0xff]
    %v3184 = vld [vmem:[#allocation8 + $0x29c] sm:$0xf]
    %v3185 = vld [vmem:[#allocation8 + $0x2a0] sm:$0xff]
    %v3186 = vld [vmem:[#allocation8 + $0x2a8] sm:$0xff]
    %v3187 = vld [vmem:[#allocation8 + $0x2b0] sm:$0xff]
    %v3188 = vld [vmem:[#allocation8 + $0x2b8] sm:$0xf]
    %v3189 = vld [vmem:[#allocation8 + $0x2bc] sm:$0xff]
    %v3190 = vld [vmem:[#allocation8 + $0x2c4] sm:$0xff]
    %v3191 = vld [vmem:[#allocation8 + $0x2cc] sm:$0xff]
    %v3192 = vld [vmem:[#allocation8 + $0x2d4] sm:$0xf]
    %v3193 = vld [vmem:[#allocation8 + $0x2d8] sm:$0xff]
    %v3194 = vld [vmem:[#allocation8 + $0x2e0] sm:$0xff]
    %v3195 = vld [vmem:[#allocation8 + $0x2e8] sm:$0xff]
    %v3196 = vld [vmem:[#allocation8 + $0x2f0] sm:$0xf]
    %v3197 = vld [vmem:[#allocation8 + $0x2f4] sm:$0xff]
    %v3198 = vld [vmem:[#allocation8 + $0x2fc] sm:$0xff]
    %v3199 = vld [vmem:[#allocation8 + $0x304] sm:$0xff]
    %v3200 = vld [vmem:[#allocation8 + $0x30c] sm:$0xf]
    %v3201 = vld [vmem:[#allocation8 + $0x310] sm:$0xff]
    %v3202 = vld [vmem:[#allocation8 + $0x318] sm:$0xff]
    %v3203 = vld [vmem:[#allocation8 + $0x320] sm:$0xff]
    %v3204 = vld [vmem:[#allocation8 + $0x328] sm:$0xf]
    %v3205 = vld [vmem:[#allocation8 + $0x32c] sm:$0xff]
    %v3206 = vld [vmem:[#allocation8 + $0x334] sm:$0xff]
    %v3207 = vld [vmem:[#allocation8 + $0x33c] sm:$0xff]
    %v3208 = vld [vmem:[#allocation8 + $0x344] sm:$0xf]
    %v3209 = vld [vmem:[#allocation8 + $0x348] sm:$0xff]
    %v3210 = vld [vmem:[#allocation8 + $0x350] sm:$0xff]
    %v3211 = vld [vmem:[#allocation8 + $0x358] sm:$0xff]
    %v3212 = vld [vmem:[#allocation8 + $0x360] sm:$0xf]
    %v3213 = vld [vmem:[#allocation8 + $0x364] sm:$0xff]
    %v3214 = vld [vmem:[#allocation8 + $0x36c] sm:$0xff]
    %v3215 = vld [vmem:[#allocation8 + $0x374] sm:$0xff]
    %v3216 = vld [vmem:[#allocation8 + $0x37c] sm:$0xf]
    %v3217 = vld [vmem:[#allocation8 + $0x380] sm:$0xff]
    %v3218 = vld [vmem:[#allocation8 + $0x388] sm:$0xff]
    %v3219 = vld [vmem:[#allocation8 + $0x390] sm:$0xff]
    %v3220 = vld [vmem:[#allocation8 + $0x398] sm:$0xf]
    %v3221 = vld [vmem:[#allocation8 + $0x39c] sm:$0xff]
    %v3222 = vld [vmem:[#allocation8 + $0x3a4] sm:$0xff]
    %v3223 = vld [vmem:[#allocation8 + $0x3ac] sm:$0xff]
    %v3224 = vld [vmem:[#allocation8 + $0x3b4] sm:$0xf]
    %v3225 = vld [vmem:[#allocation8 + $0x3b8] sm:$0xff]
    %v3226 = vld [vmem:[#allocation8 + $0x3c0] sm:$0xff]
    %v3227 = vld [vmem:[#allocation8 + $0x3c8] sm:$0xff]
    %v3228 = vld [vmem:[#allocation8 + $0x3d0] sm:$0xf]
    %v3229 = vld [vmem:[#allocation8 + $0x3d4] sm:$0xff]
    %v3230 = vld [vmem:[#allocation8 + $0x3dc] sm:$0xff]
    %v3231 = vld [vmem:[#allocation8 + $0x3e4] sm:$0xff]
    %v3232 = vld [vmem:[#allocation8 + $0x3ec] sm:$0xf]
    %v3233 = vld [vmem:[#allocation8 + $0x3f0] sm:$0xff]
    %v3234 = vld [vmem:[#allocation8 + $0x3f8] sm:$0xff]
    %v3235 = vld [vmem:[#allocation8 + $0x400] sm:$0xff]
    %v3236 = vld [vmem:[#allocation8 + $0x408] sm:$0xf]
    %v3237 = vld [vmem:[#allocation8 + $0x40c] sm:$0xff]
    %v3238 = vld [vmem:[#allocation8 + $0x414] sm:$0xff]
    %v3239 = vld [vmem:[#allocation8 + $0x41c] sm:$0xff]
    %v3240 = vld [vmem:[#allocation8 + $0x424] sm:$0xf]
    %v3241 = vld [vmem:[#allocation8 + $0x428] sm:$0xff]
    %v3242 = vld [vmem:[#allocation8 + $0x430] sm:$0xff]
    %v3243 = vld [vmem:[#allocation8 + $0x438] sm:$0xff]
    %v3244 = vld [vmem:[#allocation8 + $0x440] sm:$0xf]
    %v3245 = vld [vmem:[#allocation8 + $0x444] sm:$0xff]
    %v3246 = vld [vmem:[#allocation8 + $0x44c] sm:$0xff]
    %v3247 = vld [vmem:[#allocation8 + $0x454] sm:$0xff]
    %v3248 = vld [vmem:[#allocation8 + $0x45c] sm:$0xf]
    %v3249 = vld [vmem:[#allocation8 + $0x460] sm:$0xff]
    %v3250 = vld [vmem:[#allocation8 + $0x468] sm:$0xff]
    %v3251 = vld [vmem:[#allocation8 + $0x470] sm:$0xff]
    %v3252 = vld [vmem:[#allocation8 + $0x478] sm:$0xf]
    %v3253 = vld [vmem:[#allocation8 + $0x47c] sm:$0xff]
    %v3254 = vld [vmem:[#allocation8 + $0x484] sm:$0xff]
    %v3255 = vld [vmem:[#allocation8 + $0x48c] sm:$0xff]
    %v3256 = vld [vmem:[#allocation8 + $0x494] sm:$0xf]
    %v3257 = vld [vmem:[#allocation8 + $0x498] sm:$0xff]
    %v3258 = vld [vmem:[#allocation8 + $0x4a0] sm:$0xff]
    %v3259 = vld [vmem:[#allocation8 + $0x4a8] sm:$0xff]
    %v3260 = vld [vmem:[#allocation8 + $0x4b0] sm:$0xf]
    %v3261 = vld [vmem:[#allocation8 + $0x4b4] sm:$0xff]
    %v3262 = vld [vmem:[#allocation8 + $0x4bc] sm:$0xff]
    %v3263 = vld [vmem:[#allocation8 + $0x4c4] sm:$0xff]
    %v3264 = vld [vmem:[#allocation8 + $0x4cc] sm:$0xf]
    %v3265 = vld [vmem:[#allocation8 + $0x4d0] sm:$0xff]
    %v3266 = vld [vmem:[#allocation8 + $0x4d8] sm:$0xff]
    %v3267 = vld [vmem:[#allocation8 + $0x4e0] sm:$0xff]
    %v3268 = vld [vmem:[#allocation8 + $0x4e8] sm:$0xf]
    %v3269 = vld [vmem:[#allocation8 + $0x4ec] sm:$0xff]
    %v3270 = vld [vmem:[#allocation8 + $0x4f4] sm:$0xff]
    %v3271 = vld [vmem:[#allocation8 + $0x4fc] sm:$0xff]
    %v3272 = vld [vmem:[#allocation8 + $0x504] sm:$0xf]
    %v3273 = vld [vmem:[#allocation8 + $0x508] sm:$0xff]
    %v3274 = vld [vmem:[#allocation8 + $0x510] sm:$0xff]
    %v3275 = vld [vmem:[#allocation8 + $0x518] sm:$0xff]
    %v3276 = vld [vmem:[#allocation8 + $0x520] sm:$0xf]
    %v3277 = vld [vmem:[#allocation8 + $0x524] sm:$0xff]
    %v3278 = vld [vmem:[#allocation8 + $0x52c] sm:$0xff]
    %v3279 = vld [vmem:[#allocation8 + $0x534] sm:$0xff]
    %v3280 = vld [vmem:[#allocation8 + $0x53c] sm:$0xf]
    %v3281 = vld [vmem:[#allocation8 + $0x540] sm:$0xff]
    %v3282 = vld [vmem:[#allocation8 + $0x548] sm:$0xff]
    %v3283 = vld [vmem:[#allocation8 + $0x550] sm:$0xff]
    %v3284 = vld [vmem:[#allocation8 + $0x558] sm:$0xf]
    %v3285 = vld [vmem:[#allocation8 + $0x55c] sm:$0xff]
    %v3286 = vld [vmem:[#allocation8 + $0x564] sm:$0xff]
    %v3287 = vld [vmem:[#allocation8 + $0x56c] sm:$0xff]
    %v3288 = vld [vmem:[#allocation8 + $0x574] sm:$0xf]
    %v3289 = vld [vmem:[#allocation8 + $0x578] sm:$0xff]
    %v3290 = vld [vmem:[#allocation8 + $0x580] sm:$0xff]
    %v3291 = vld [vmem:[#allocation8 + $0x588] sm:$0xff]
    %v3292 = vld [vmem:[#allocation8 + $0x590] sm:$0xf]
    %v3293 = vld [vmem:[#allocation8 + $0x594] sm:$0xff]
    %v3294 = vld [vmem:[#allocation8 + $0x59c] sm:$0xff]
    %v3295 = vld [vmem:[#allocation8 + $0x5a4] sm:$0xff]
    %v3296 = vld [vmem:[#allocation8 + $0x5ac] sm:$0xf]
    %v3297 = vld [vmem:[#allocation8 + $0x5b0] sm:$0xff]
    %v3298 = vld [vmem:[#allocation8 + $0x5b8] sm:$0xff]
    %v3299 = vld [vmem:[#allocation8 + $0x5c0] sm:$0xff]
    %v3300 = vld [vmem:[#allocation8 + $0x5c8] sm:$0xf]
    %v3301 = vld [vmem:[#allocation8 + $0x5cc] sm:$0xff]
    %v3302 = vld [vmem:[#allocation8 + $0x5d4] sm:$0xff]
    %v3303 = vld [vmem:[#allocation8 + $0x5dc] sm:$0xff]
    %v3304 = vld [vmem:[#allocation8 + $0x5e4] sm:$0xf]
    %v3305 = vld [vmem:[#allocation8 + $0x5e8] sm:$0xff]
    %v3306 = vld [vmem:[#allocation8 + $0x5f0] sm:$0xff]
    %v3307 = vld [vmem:[#allocation8 + $0x5f8] sm:$0xff]
    %v3308 = vld [vmem:[#allocation8 + $0x600] sm:$0xf]
    %v3309 = vld [vmem:[#allocation8 + $0x604] sm:$0xff]
    %v3310 = vld [vmem:[#allocation8 + $0x60c] sm:$0xff]
    %v3311 = vld [vmem:[#allocation8 + $0x614] sm:$0xff]
    %v3312 = vld [vmem:[#allocation8 + $0x61c] sm:$0xf]
    %v3313 = vld [vmem:[#allocation8 + $0x620] sm:$0xff]
    %v3314 = vld [vmem:[#allocation8 + $0x628] sm:$0xff]
    %v3315 = vld [vmem:[#allocation8 + $0x630] sm:$0xff]
    %v3316 = vld [vmem:[#allocation8 + $0x638] sm:$0xf]
    %v3317 = vld [vmem:[#allocation8 + $0x63c] sm:$0xff]
    %v3318 = vld [vmem:[#allocation8 + $0x644] sm:$0xff]
    %v3319 = vld [vmem:[#allocation8 + $0x64c] sm:$0xff]
    %v3320 = vld [vmem:[#allocation8 + $0x654] sm:$0xf]
    %v3321 = vld [vmem:[#allocation8 + $0x658] sm:$0xff]
    %v3322 = vld [vmem:[#allocation8 + $0x660] sm:$0xff]
    %v3323 = vld [vmem:[#allocation8 + $0x668] sm:$0xff]
    %v3324 = vld [vmem:[#allocation8 + $0x670] sm:$0xf]
    %v3325 = vld [vmem:[#allocation8 + $0x674] sm:$0xff]
    %v3326 = vld [vmem:[#allocation8 + $0x67c] sm:$0xff]
    %v3327 = vld [vmem:[#allocation8 + $0x684] sm:$0xff]
    %v3328 = vld [vmem:[#allocation8 + $0x68c] sm:$0xf]
    %v3329 = vld [vmem:[#allocation8 + $0x690] sm:$0xff]
    %v3330 = vld [vmem:[#allocation8 + $0x698] sm:$0xff]
    %v3331 = vld [vmem:[#allocation8 + $0x6a0] sm:$0xff]
    %v3332 = vld [vmem:[#allocation8 + $0x6a8] sm:$0xf]
    %v3333 = vld [vmem:[#allocation8 + $0x6ac] sm:$0xff]
    %v3334 = vld [vmem:[#allocation8 + $0x6b4] sm:$0xff]
    %v3335 = vld [vmem:[#allocation8 + $0x6bc] sm:$0xff]
    %v3336 = vld [vmem:[#allocation8 + $0x6c4] sm:$0xf]
    %v3337 = vld [vmem:[#allocation8 + $0x6c8] sm:$0xff]
    %v3338 = vld [vmem:[#allocation8 + $0x6d0] sm:$0xff]
    %v3339 = vld [vmem:[#allocation8 + $0x6d8] sm:$0xff]
    %v3340 = vld [vmem:[#allocation8 + $0x6e0] sm:$0xf]
    %v3341 = vld [vmem:[#allocation8 + $0x6e4] sm:$0xff]
    %v3342 = vld [vmem:[#allocation8 + $0x6ec] sm:$0xff]
    %v3343 = vld [vmem:[#allocation8 + $0x6f4] sm:$0xff]
    %v3344 = vld [vmem:[#allocation8 + $0x6fc] sm:$0xf]
    %v3345 = vld [vmem:[%s13] sm:$0xff]
    %v3347 = vlaneseq
    %v3348 = vshrl.u32 %v3347, 7
    %v3349 = vsub.s32 0, %v3348
    %v3350 = vrot.slane %v3345, %v3349
    %v3351 = vlaneseq
    %v3352 = vshrl.u32 %v3351, 7
    %v3353 = vsub.s32 1, %v3352
    %v3354 = vrot.slane %v3345, %v3353
    %v3355 = vlaneseq
    %v3356 = vshrl.u32 %v3355, 7
    %v3357 = vsub.s32 2, %v3356
    %v3358 = vrot.slane %v3345, %v3357
    %v3359 = vlaneseq
    %v3360 = vshrl.u32 %v3359, 7
    %v3361 = vsub.s32 3, %v3360
    %v3362 = vrot.slane %v3345, %v3361
    %v3363 = vlaneseq
    %v3364 = vshrl.u32 %v3363, 7
    %v3365 = vsub.s32 4, %v3364
    %v3366 = vrot.slane %v3345, %v3365
    %v3367 = vlaneseq
    %v3368 = vshrl.u32 %v3367, 7
    %v3369 = vsub.s32 5, %v3368
    %v3370 = vrot.slane %v3345, %v3369
    %v3371 = vlaneseq
    %v3372 = vshrl.u32 %v3371, 7
    %v3373 = vsub.s32 6, %v3372
    %v3374 = vrot.slane %v3345, %v3373
    %v3638 = vunpack.c.l.b16 %v3089
    %v3639 = vunpack.c.h.b16 %v3089
    %v3640 = vunpack.c.l.b16 %v3090
    %v3641 = vunpack.c.h.b16 %v3090
    %v3642 = vunpack.c.l.b16 %v3091
    %v3643 = vunpack.c.h.b16 %v3091
    %v3644 = vunpack.c.l.b16 %v3092
    %v3645 = vunpack.c.l.b16 %v3093
    %v3646 = vunpack.c.h.b16 %v3093
    %v3647 = vunpack.c.l.b16 %v3094
    %v3648 = vunpack.c.h.b16 %v3094
    %v3649 = vunpack.c.l.b16 %v3095
    %v3650 = vunpack.c.h.b16 %v3095
    %v3651 = vunpack.c.l.b16 %v3096
    %v3652 = vunpack.c.l.b16 %v3097
    %v3653 = vunpack.c.h.b16 %v3097
    %v3654 = vunpack.c.l.b16 %v3098
    %v3655 = vunpack.c.h.b16 %v3098
    %v3656 = vunpack.c.l.b16 %v3099
    %v3657 = vunpack.c.h.b16 %v3099
    %v3658 = vunpack.c.l.b16 %v3100
    %v3659 = vunpack.c.l.b16 %v3101
    %v3660 = vunpack.c.h.b16 %v3101
    %v3661 = vunpack.c.l.b16 %v3102
    %v3662 = vunpack.c.h.b16 %v3102
    %v3663 = vunpack.c.l.b16 %v3103
    %v3664 = vunpack.c.h.b16 %v3103
    %v3665 = vunpack.c.l.b16 %v3104
    %v3666 = vunpack.c.l.b16 %v3105
    %v3667 = vunpack.c.h.b16 %v3105
    %v3668 = vunpack.c.l.b16 %v3106
    %v3669 = vunpack.c.h.b16 %v3106
    %v3670 = vunpack.c.l.b16 %v3107
    %v3671 = vunpack.c.h.b16 %v3107
    %v3672 = vunpack.c.l.b16 %v3108
    %v3673 = vunpack.c.l.b16 %v3109
    %v3674 = vunpack.c.h.b16 %v3109
    %v3675 = vunpack.c.l.b16 %v3110
    %v3676 = vunpack.c.h.b16 %v3110
    %v3677 = vunpack.c.l.b16 %v3111
    %v3678 = vunpack.c.h.b16 %v3111
    %v3679 = vunpack.c.l.b16 %v3112
    %v3680 = vunpack.c.l.b16 %v3113
    %v3681 = vunpack.c.h.b16 %v3113
    %v3682 = vunpack.c.l.b16 %v3114
    %v3683 = vunpack.c.h.b16 %v3114
    %v3684 = vunpack.c.l.b16 %v3115
    %v3685 = vunpack.c.h.b16 %v3115
    %v3686 = vunpack.c.l.b16 %v3116
    %v3687 = vunpack.c.l.b16 %v3117
    %v3688 = vunpack.c.h.b16 %v3117
    %v3689 = vunpack.c.l.b16 %v3118
    %v3690 = vunpack.c.h.b16 %v3118
    %v3691 = vunpack.c.l.b16 %v3119
    %v3692 = vunpack.c.h.b16 %v3119
    %v3693 = vunpack.c.l.b16 %v3120
    %v3694 = vunpack.c.l.b16 %v3121
    %v3695 = vunpack.c.h.b16 %v3121
    %v3696 = vunpack.c.l.b16 %v3122
    %v3697 = vunpack.c.h.b16 %v3122
    %v3698 = vunpack.c.l.b16 %v3123
    %v3699 = vunpack.c.h.b16 %v3123
    %v3700 = vunpack.c.l.b16 %v3124
    %v3701 = vunpack.c.l.b16 %v3125
    %v3702 = vunpack.c.h.b16 %v3125
    %v3703 = vunpack.c.l.b16 %v3126
    %v3704 = vunpack.c.h.b16 %v3126
    %v3705 = vunpack.c.l.b16 %v3127
    %v3706 = vunpack.c.h.b16 %v3127
    %v3707 = vunpack.c.l.b16 %v3128
    %v3708 = vunpack.c.l.b16 %v3129
    %v3709 = vunpack.c.h.b16 %v3129
    %v3710 = vunpack.c.l.b16 %v3130
    %v3711 = vunpack.c.h.b16 %v3130
    %v3712 = vunpack.c.l.b16 %v3131
    %v3713 = vunpack.c.h.b16 %v3131
    %v3714 = vunpack.c.l.b16 %v3132
    %v3715 = vunpack.c.l.b16 %v3133
    %v3716 = vunpack.c.h.b16 %v3133
    %v3717 = vunpack.c.l.b16 %v3134
    %v3718 = vunpack.c.h.b16 %v3134
    %v3719 = vunpack.c.l.b16 %v3135
    %v3720 = vunpack.c.h.b16 %v3135
    %v3721 = vunpack.c.l.b16 %v3136
    %v3722 = vunpack.c.l.b16 %v3137
    %v3723 = vunpack.c.h.b16 %v3137
    %v3724 = vunpack.c.l.b16 %v3138
    %v3725 = vunpack.c.h.b16 %v3138
    %v3726 = vunpack.c.l.b16 %v3139
    %v3727 = vunpack.c.h.b16 %v3139
    %v3728 = vunpack.c.l.b16 %v3140
    %v3729 = vunpack.c.l.b16 %v3141
    %v3730 = vunpack.c.h.b16 %v3141
    %v3731 = vunpack.c.l.b16 %v3142
    %v3732 = vunpack.c.h.b16 %v3142
    %v3733 = vunpack.c.l.b16 %v3143
    %v3734 = vunpack.c.h.b16 %v3143
    %v3735 = vunpack.c.l.b16 %v3144
    %v3736 = vunpack.c.l.b16 %v3145
    %v3737 = vunpack.c.h.b16 %v3145
    %v3738 = vunpack.c.l.b16 %v3146
    %v3739 = vunpack.c.h.b16 %v3146
    %v3740 = vunpack.c.l.b16 %v3147
    %v3741 = vunpack.c.h.b16 %v3147
    %v3742 = vunpack.c.l.b16 %v3148
    %v3743 = vunpack.c.l.b16 %v3149
    %v3744 = vunpack.c.h.b16 %v3149
    %v3745 = vunpack.c.l.b16 %v3150
    %v3746 = vunpack.c.h.b16 %v3150
    %v3747 = vunpack.c.l.b16 %v3151
    %v3748 = vunpack.c.h.b16 %v3151
    %v3749 = vunpack.c.l.b16 %v3152
    %v3750 = vunpack.c.l.b16 %v3153
    %v3751 = vunpack.c.h.b16 %v3153
    %v3752 = vunpack.c.l.b16 %v3154
    %v3753 = vunpack.c.h.b16 %v3154
    %v3754 = vunpack.c.l.b16 %v3155
    %v3755 = vunpack.c.h.b16 %v3155
    %v3756 = vunpack.c.l.b16 %v3156
    %v3757 = vunpack.c.l.b16 %v3157
    %v3758 = vunpack.c.h.b16 %v3157
    %v3759 = vunpack.c.l.b16 %v3158
    %v3760 = vunpack.c.h.b16 %v3158
    %v3761 = vunpack.c.l.b16 %v3159
    %v3762 = vunpack.c.h.b16 %v3159
    %v3763 = vunpack.c.l.b16 %v3160
    %v3764 = vunpack.c.l.b16 %v3161
    %v3765 = vunpack.c.h.b16 %v3161
    %v3766 = vunpack.c.l.b16 %v3162
    %v3767 = vunpack.c.h.b16 %v3162
    %v3768 = vunpack.c.l.b16 %v3163
    %v3769 = vunpack.c.h.b16 %v3163
    %v3770 = vunpack.c.l.b16 %v3164
    %v3771 = vunpack.c.l.b16 %v3165
    %v3772 = vunpack.c.h.b16 %v3165
    %v3773 = vunpack.c.l.b16 %v3166
    %v3774 = vunpack.c.h.b16 %v3166
    %v3775 = vunpack.c.l.b16 %v3167
    %v3776 = vunpack.c.h.b16 %v3167
    %v3777 = vunpack.c.l.b16 %v3168
    %v3778 = vunpack.c.l.b16 %v3169
    %v3779 = vunpack.c.h.b16 %v3169
    %v3780 = vunpack.c.l.b16 %v3170
    %v3781 = vunpack.c.h.b16 %v3170
    %v3782 = vunpack.c.l.b16 %v3171
    %v3783 = vunpack.c.h.b16 %v3171
    %v3784 = vunpack.c.l.b16 %v3172
    %v3785 = vunpack.c.l.b16 %v3173
    %v3786 = vunpack.c.h.b16 %v3173
    %v3787 = vunpack.c.l.b16 %v3174
    %v3788 = vunpack.c.h.b16 %v3174
    %v3789 = vunpack.c.l.b16 %v3175
    %v3790 = vunpack.c.h.b16 %v3175
    %v3791 = vunpack.c.l.b16 %v3176
    %v3792 = vunpack.c.l.b16 %v3177
    %v3793 = vunpack.c.h.b16 %v3177
    %v3794 = vunpack.c.l.b16 %v3178
    %v3795 = vunpack.c.h.b16 %v3178
    %v3796 = vunpack.c.l.b16 %v3179
    %v3797 = vunpack.c.h.b16 %v3179
    %v3798 = vunpack.c.l.b16 %v3180
    %v3799 = vunpack.c.l.b16 %v3181
    %v3800 = vunpack.c.h.b16 %v3181
    %v3801 = vunpack.c.l.b16 %v3182
    %v3802 = vunpack.c.h.b16 %v3182
    %v3803 = vunpack.c.l.b16 %v3183
    %v3804 = vunpack.c.h.b16 %v3183
    %v3805 = vunpack.c.l.b16 %v3184
    %v3806 = vunpack.c.l.b16 %v3185
    %v3807 = vunpack.c.h.b16 %v3185
    %v3808 = vunpack.c.l.b16 %v3186
    %v3809 = vunpack.c.h.b16 %v3186
    %v3810 = vunpack.c.l.b16 %v3187
    %v3811 = vunpack.c.h.b16 %v3187
    %v3812 = vunpack.c.l.b16 %v3188
    %v3813 = vunpack.c.l.b16 %v3189
    %v3814 = vunpack.c.h.b16 %v3189
    %v3815 = vunpack.c.l.b16 %v3190
    %v3816 = vunpack.c.h.b16 %v3190
    %v3817 = vunpack.c.l.b16 %v3191
    %v3818 = vunpack.c.h.b16 %v3191
    %v3819 = vunpack.c.l.b16 %v3192
    %v3820 = vunpack.c.l.b16 %v3193
    %v3821 = vunpack.c.h.b16 %v3193
    %v3822 = vunpack.c.l.b16 %v3194
    %v3823 = vunpack.c.h.b16 %v3194
    %v3824 = vunpack.c.l.b16 %v3195
    %v3825 = vunpack.c.h.b16 %v3195
    %v3826 = vunpack.c.l.b16 %v3196
    %v3827 = vunpack.c.l.b16 %v3197
    %v3828 = vunpack.c.h.b16 %v3197
    %v3829 = vunpack.c.l.b16 %v3198
    %v3830 = vunpack.c.h.b16 %v3198
    %v3831 = vunpack.c.l.b16 %v3199
    %v3832 = vunpack.c.h.b16 %v3199
    %v3833 = vunpack.c.l.b16 %v3200
    %v3834 = vunpack.c.l.b16 %v3201
    %v3835 = vunpack.c.h.b16 %v3201
    %v3836 = vunpack.c.l.b16 %v3202
    %v3837 = vunpack.c.h.b16 %v3202
    %v3838 = vunpack.c.l.b16 %v3203
    %v3839 = vunpack.c.h.b16 %v3203
    %v3840 = vunpack.c.l.b16 %v3204
    %v3841 = vunpack.c.l.b16 %v3205
    %v3842 = vunpack.c.h.b16 %v3205
    %v3843 = vunpack.c.l.b16 %v3206
    %v3844 = vunpack.c.h.b16 %v3206
    %v3845 = vunpack.c.l.b16 %v3207
    %v3846 = vunpack.c.h.b16 %v3207
    %v3847 = vunpack.c.l.b16 %v3208
    %v3848 = vunpack.c.l.b16 %v3209
    %v3849 = vunpack.c.h.b16 %v3209
    %v3850 = vunpack.c.l.b16 %v3210
    %v3851 = vunpack.c.h.b16 %v3210
    %v3852 = vunpack.c.l.b16 %v3211
    %v3853 = vunpack.c.h.b16 %v3211
    %v3854 = vunpack.c.l.b16 %v3212
    %v3855 = vunpack.c.l.b16 %v3213
    %v3856 = vunpack.c.h.b16 %v3213
    %v3857 = vunpack.c.l.b16 %v3214
    %v3858 = vunpack.c.h.b16 %v3214
    %v3859 = vunpack.c.l.b16 %v3215
    %v3860 = vunpack.c.h.b16 %v3215
    %v3861 = vunpack.c.l.b16 %v3216
    %v3862 = vunpack.c.l.b16 %v3217
    %v3863 = vunpack.c.h.b16 %v3217
    %v3864 = vunpack.c.l.b16 %v3218
    %v3865 = vunpack.c.h.b16 %v3218
    %v3866 = vunpack.c.l.b16 %v3219
    %v3867 = vunpack.c.h.b16 %v3219
    %v3868 = vunpack.c.l.b16 %v3220
    %v3869 = vunpack.c.l.b16 %v3221
    %v3870 = vunpack.c.h.b16 %v3221
    %v3871 = vunpack.c.l.b16 %v3222
    %v3872 = vunpack.c.h.b16 %v3222
    %v3873 = vunpack.c.l.b16 %v3223
    %v3874 = vunpack.c.h.b16 %v3223
    %v3875 = vunpack.c.l.b16 %v3224
    %v3876 = vunpack.c.l.b16 %v3225
    %v3877 = vunpack.c.h.b16 %v3225
    %v3878 = vunpack.c.l.b16 %v3226
    %v3879 = vunpack.c.h.b16 %v3226
    %v3880 = vunpack.c.l.b16 %v3227
    %v3881 = vunpack.c.h.b16 %v3227
    %v3882 = vunpack.c.l.b16 %v3228
    %v3883 = vunpack.c.l.b16 %v3229
    %v3884 = vunpack.c.h.b16 %v3229
    %v3885 = vunpack.c.l.b16 %v3230
    %v3886 = vunpack.c.h.b16 %v3230
    %v3887 = vunpack.c.l.b16 %v3231
    %v3888 = vunpack.c.h.b16 %v3231
    %v3889 = vunpack.c.l.b16 %v3232
    %v3890 = vunpack.c.l.b16 %v3233
    %v3891 = vunpack.c.h.b16 %v3233
    %v3892 = vunpack.c.l.b16 %v3234
    %v3893 = vunpack.c.h.b16 %v3234
    %v3894 = vunpack.c.l.b16 %v3235
    %v3895 = vunpack.c.h.b16 %v3235
    %v3896 = vunpack.c.l.b16 %v3236
    %v3897 = vunpack.c.l.b16 %v3237
    %v3898 = vunpack.c.h.b16 %v3237
    %v3899 = vunpack.c.l.b16 %v3238
    %v3900 = vunpack.c.h.b16 %v3238
    %v3901 = vunpack.c.l.b16 %v3239
    %v3902 = vunpack.c.h.b16 %v3239
    %v3903 = vunpack.c.l.b16 %v3240
    %v3904 = vunpack.c.l.b16 %v3241
    %v3905 = vunpack.c.h.b16 %v3241
    %v3906 = vunpack.c.l.b16 %v3242
    %v3907 = vunpack.c.h.b16 %v3242
    %v3908 = vunpack.c.l.b16 %v3243
    %v3909 = vunpack.c.h.b16 %v3243
    %v3910 = vunpack.c.l.b16 %v3244
    %v3911 = vunpack.c.l.b16 %v3245
    %v3912 = vunpack.c.h.b16 %v3245
    %v3913 = vunpack.c.l.b16 %v3246
    %v3914 = vunpack.c.h.b16 %v3246
    %v3915 = vunpack.c.l.b16 %v3247
    %v3916 = vunpack.c.h.b16 %v3247
    %v3917 = vunpack.c.l.b16 %v3248
    %v3918 = vunpack.c.l.b16 %v3249
    %v3919 = vunpack.c.h.b16 %v3249
    %v3920 = vunpack.c.l.b16 %v3250
    %v3921 = vunpack.c.h.b16 %v3250
    %v3922 = vunpack.c.l.b16 %v3251
    %v3923 = vunpack.c.h.b16 %v3251
    %v3924 = vunpack.c.l.b16 %v3252
    %v3925 = vunpack.c.l.b16 %v3253
    %v3926 = vunpack.c.h.b16 %v3253
    %v3927 = vunpack.c.l.b16 %v3254
    %v3928 = vunpack.c.h.b16 %v3254
    %v3929 = vunpack.c.l.b16 %v3255
    %v3930 = vunpack.c.h.b16 %v3255
    %v3931 = vunpack.c.l.b16 %v3256
    %v3932 = vunpack.c.l.b16 %v3257
    %v3933 = vunpack.c.h.b16 %v3257
    %v3934 = vunpack.c.l.b16 %v3258
    %v3935 = vunpack.c.h.b16 %v3258
    %v3936 = vunpack.c.l.b16 %v3259
    %v3937 = vunpack.c.h.b16 %v3259
    %v3938 = vunpack.c.l.b16 %v3260
    %v3939 = vunpack.c.l.b16 %v3261
    %v3940 = vunpack.c.h.b16 %v3261
    %v3941 = vunpack.c.l.b16 %v3262
    %v3942 = vunpack.c.h.b16 %v3262
    %v3943 = vunpack.c.l.b16 %v3263
    %v3944 = vunpack.c.h.b16 %v3263
    %v3945 = vunpack.c.l.b16 %v3264
    %v3946 = vunpack.c.l.b16 %v3265
    %v3947 = vunpack.c.h.b16 %v3265
    %v3948 = vunpack.c.l.b16 %v3266
    %v3949 = vunpack.c.h.b16 %v3266
    %v3950 = vunpack.c.l.b16 %v3267
    %v3951 = vunpack.c.h.b16 %v3267
    %v3952 = vunpack.c.l.b16 %v3268
    %v3953 = vunpack.c.l.b16 %v3269
    %v3954 = vunpack.c.h.b16 %v3269
    %v3955 = vunpack.c.l.b16 %v3270
    %v3956 = vunpack.c.h.b16 %v3270
    %v3957 = vunpack.c.l.b16 %v3271
    %v3958 = vunpack.c.h.b16 %v3271
    %v3959 = vunpack.c.l.b16 %v3272
    %v3960 = vunpack.c.l.b16 %v3273
    %v3961 = vunpack.c.h.b16 %v3273
    %v3962 = vunpack.c.l.b16 %v3274
    %v3963 = vunpack.c.h.b16 %v3274
    %v3964 = vunpack.c.l.b16 %v3275
    %v3965 = vunpack.c.h.b16 %v3275
    %v3966 = vunpack.c.l.b16 %v3276
    %v3967 = vunpack.c.l.b16 %v3277
    %v3968 = vunpack.c.h.b16 %v3277
    %v3969 = vunpack.c.l.b16 %v3278
    %v3970 = vunpack.c.h.b16 %v3278
    %v3971 = vunpack.c.l.b16 %v3279
    %v3972 = vunpack.c.h.b16 %v3279
    %v3973 = vunpack.c.l.b16 %v3280
    %v3974 = vunpack.c.l.b16 %v3281
    %v3975 = vunpack.c.h.b16 %v3281
    %v3976 = vunpack.c.l.b16 %v3282
    %v3977 = vunpack.c.h.b16 %v3282
    %v3978 = vunpack.c.l.b16 %v3283
    %v3979 = vunpack.c.h.b16 %v3283
    %v3980 = vunpack.c.l.b16 %v3284
    %v3981 = vunpack.c.l.b16 %v3285
    %v3982 = vunpack.c.h.b16 %v3285
    %v3983 = vunpack.c.l.b16 %v3286
    %v3984 = vunpack.c.h.b16 %v3286
    %v3985 = vunpack.c.l.b16 %v3287
    %v3986 = vunpack.c.h.b16 %v3287
    %v3987 = vunpack.c.l.b16 %v3288
    %v3988 = vunpack.c.l.b16 %v3289
    %v3989 = vunpack.c.h.b16 %v3289
    %v3990 = vunpack.c.l.b16 %v3290
    %v3991 = vunpack.c.h.b16 %v3290
    %v3992 = vunpack.c.l.b16 %v3291
    %v3993 = vunpack.c.h.b16 %v3291
    %v3994 = vunpack.c.l.b16 %v3292
    %v3995 = vunpack.c.l.b16 %v3293
    %v3996 = vunpack.c.h.b16 %v3293
    %v3997 = vunpack.c.l.b16 %v3294
    %v3998 = vunpack.c.h.b16 %v3294
    %v3999 = vunpack.c.l.b16 %v3295
    %v4000 = vunpack.c.h.b16 %v3295
    %v4001 = vunpack.c.l.b16 %v3296
    %v4002 = vunpack.c.l.b16 %v3297
    %v4003 = vunpack.c.h.b16 %v3297
    %v4004 = vunpack.c.l.b16 %v3298
    %v4005 = vunpack.c.h.b16 %v3298
    %v4006 = vunpack.c.l.b16 %v3299
    %v4007 = vunpack.c.h.b16 %v3299
    %v4008 = vunpack.c.l.b16 %v3300
    %v4009 = vunpack.c.l.b16 %v3301
    %v4010 = vunpack.c.h.b16 %v3301
    %v4011 = vunpack.c.l.b16 %v3302
    %v4012 = vunpack.c.h.b16 %v3302
    %v4013 = vunpack.c.l.b16 %v3303
    %v4014 = vunpack.c.h.b16 %v3303
    %v4015 = vunpack.c.l.b16 %v3304
    %v4016 = vunpack.c.l.b16 %v3305
    %v4017 = vunpack.c.h.b16 %v3305
    %v4018 = vunpack.c.l.b16 %v3306
    %v4019 = vunpack.c.h.b16 %v3306
    %v4020 = vunpack.c.l.b16 %v3307
    %v4021 = vunpack.c.h.b16 %v3307
    %v4022 = vunpack.c.l.b16 %v3308
    %v4023 = vunpack.c.l.b16 %v3309
    %v4024 = vunpack.c.h.b16 %v3309
    %v4025 = vunpack.c.l.b16 %v3310
    %v4026 = vunpack.c.h.b16 %v3310
    %v4027 = vunpack.c.l.b16 %v3311
    %v4028 = vunpack.c.h.b16 %v3311
    %v4029 = vunpack.c.l.b16 %v3312
    %v4030 = vunpack.c.l.b16 %v3313
    %v4031 = vunpack.c.h.b16 %v3313
    %v4032 = vunpack.c.l.b16 %v3314
    %v4033 = vunpack.c.h.b16 %v3314
    %v4034 = vunpack.c.l.b16 %v3315
    %v4035 = vunpack.c.h.b16 %v3315
    %v4036 = vunpack.c.l.b16 %v3316
    %v4037 = vunpack.c.l.b16 %v3317
    %v4038 = vunpack.c.h.b16 %v3317
    %v4039 = vunpack.c.l.b16 %v3318
    %v4040 = vunpack.c.h.b16 %v3318
    %v4041 = vunpack.c.l.b16 %v3319
    %v4042 = vunpack.c.h.b16 %v3319
    %v4043 = vunpack.c.l.b16 %v3320
    %v4044 = vunpack.c.l.b16 %v3321
    %v4045 = vunpack.c.h.b16 %v3321
    %v4046 = vunpack.c.l.b16 %v3322
    %v4047 = vunpack.c.h.b16 %v3322
    %v4048 = vunpack.c.l.b16 %v3323
    %v4049 = vunpack.c.h.b16 %v3323
    %v4050 = vunpack.c.l.b16 %v3324
    %v4051 = vunpack.c.l.b16 %v3325
    %v4052 = vunpack.c.h.b16 %v3325
    %v4053 = vunpack.c.l.b16 %v3326
    %v4054 = vunpack.c.h.b16 %v3326
    %v4055 = vunpack.c.l.b16 %v3327
    %v4056 = vunpack.c.h.b16 %v3327
    %v4057 = vunpack.c.l.b16 %v3328
    %v4058 = vunpack.c.l.b16 %v3329
    %v4059 = vunpack.c.h.b16 %v3329
    %v4060 = vunpack.c.l.b16 %v3330
    %v4061 = vunpack.c.h.b16 %v3330
    %v4062 = vunpack.c.l.b16 %v3331
    %v4063 = vunpack.c.h.b16 %v3331
    %v4064 = vunpack.c.l.b16 %v3332
    %v4065 = vunpack.c.l.b16 %v3333
    %v4066 = vunpack.c.h.b16 %v3333
    %v4067 = vunpack.c.l.b16 %v3334
    %v4068 = vunpack.c.h.b16 %v3334
    %v4069 = vunpack.c.l.b16 %v3335
    %v4070 = vunpack.c.h.b16 %v3335
    %v4071 = vunpack.c.l.b16 %v3336
    %v4072 = vunpack.c.l.b16 %v3337
    %v4073 = vunpack.c.h.b16 %v3337
    %v4074 = vunpack.c.l.b16 %v3338
    %v4075 = vunpack.c.h.b16 %v3338
    %v4076 = vunpack.c.l.b16 %v3339
    %v4077 = vunpack.c.h.b16 %v3339
    %v4078 = vunpack.c.l.b16 %v3340
    %v4079 = vunpack.c.l.b16 %v3341
    %v4080 = vunpack.c.h.b16 %v3341
    %v4081 = vunpack.c.l.b16 %v3342
    %v4082 = vunpack.c.h.b16 %v3342
    %v4083 = vunpack.c.l.b16 %v3343
    %v4084 = vunpack.c.h.b16 %v3343
    %v4085 = vunpack.c.l.b16 %v3344
    %v4086 = vpack.c.b16 %v3645, %v3638
    %v4087 = vpack.c.b16 %v3646, %v3639
    %v4088 = vpack.c.b16 %v3647, %v3640
    %v4089 = vpack.c.b16 %v3648, %v3641
    %v4090 = vpack.c.b16 %v3649, %v3642
    %v4091 = vpack.c.b16 %v3650, %v3643
    %v4092 = vpack.c.b16 %v3651, %v3644
    %v4093 = vpack.c.b16 %v3659, %v3652
    %v4094 = vpack.c.b16 %v3660, %v3653
    %v4095 = vpack.c.b16 %v3661, %v3654
    %v4096 = vpack.c.b16 %v3662, %v3655
    %v4097 = vpack.c.b16 %v3663, %v3656
    %v4098 = vpack.c.b16 %v3664, %v3657
    %v4099 = vpack.c.b16 %v3665, %v3658
    %v4100 = vpack.c.b16 %v3673, %v3666
    %v4101 = vpack.c.b16 %v3674, %v3667
    %v4102 = vpack.c.b16 %v3675, %v3668
    %v4103 = vpack.c.b16 %v3676, %v3669
    %v4104 = vpack.c.b16 %v3677, %v3670
    %v4105 = vpack.c.b16 %v3678, %v3671
    %v4106 = vpack.c.b16 %v3679, %v3672
    %v4107 = vpack.c.b16 %v3687, %v3680
    %v4108 = vpack.c.b16 %v3688, %v3681
    %v4109 = vpack.c.b16 %v3689, %v3682
    %v4110 = vpack.c.b16 %v3690, %v3683
    %v4111 = vpack.c.b16 %v3691, %v3684
    %v4112 = vpack.c.b16 %v3692, %v3685
    %v4113 = vpack.c.b16 %v3693, %v3686
    %v4114 = vpack.c.b16 %v3701, %v3694
    %v4115 = vpack.c.b16 %v3702, %v3695
    %v4116 = vpack.c.b16 %v3703, %v3696
    %v4117 = vpack.c.b16 %v3704, %v3697
    %v4118 = vpack.c.b16 %v3705, %v3698
    %v4119 = vpack.c.b16 %v3706, %v3699
    %v4120 = vpack.c.b16 %v3707, %v3700
    %v4121 = vpack.c.b16 %v3715, %v3708
    %v4122 = vpack.c.b16 %v3716, %v3709
    %v4123 = vpack.c.b16 %v3717, %v3710
    %v4124 = vpack.c.b16 %v3718, %v3711
    %v4125 = vpack.c.b16 %v3719, %v3712
    %v4126 = vpack.c.b16 %v3720, %v3713
    %v4127 = vpack.c.b16 %v3721, %v3714
    %v4128 = vpack.c.b16 %v3729, %v3722
    %v4129 = vpack.c.b16 %v3730, %v3723
    %v4130 = vpack.c.b16 %v3731, %v3724
    %v4131 = vpack.c.b16 %v3732, %v3725
    %v4132 = vpack.c.b16 %v3733, %v3726
    %v4133 = vpack.c.b16 %v3734, %v3727
    %v4134 = vpack.c.b16 %v3735, %v3728
    %v4135 = vpack.c.b16 %v3743, %v3736
    %v4136 = vpack.c.b16 %v3744, %v3737
    %v4137 = vpack.c.b16 %v3745, %v3738
    %v4138 = vpack.c.b16 %v3746, %v3739
    %v4139 = vpack.c.b16 %v3747, %v3740
    %v4140 = vpack.c.b16 %v3748, %v3741
    %v4141 = vpack.c.b16 %v3749, %v3742
    %v4142 = vpack.c.b16 %v3757, %v3750
    %v4143 = vpack.c.b16 %v3758, %v3751
    %v4144 = vpack.c.b16 %v3759, %v3752
    %v4145 = vpack.c.b16 %v3760, %v3753
    %v4146 = vpack.c.b16 %v3761, %v3754
    %v4147 = vpack.c.b16 %v3762, %v3755
    %v4148 = vpack.c.b16 %v3763, %v3756
    %v4149 = vpack.c.b16 %v3771, %v3764
    %v4150 = vpack.c.b16 %v3772, %v3765
    %v4151 = vpack.c.b16 %v3773, %v3766
    %v4152 = vpack.c.b16 %v3774, %v3767
    %v4153 = vpack.c.b16 %v3775, %v3768
    %v4154 = vpack.c.b16 %v3776, %v3769
    %v4155 = vpack.c.b16 %v3777, %v3770
    %v4156 = vpack.c.b16 %v3785, %v3778
    %v4157 = vpack.c.b16 %v3786, %v3779
    %v4158 = vpack.c.b16 %v3787, %v3780
    %v4159 = vpack.c.b16 %v3788, %v3781
    %v4160 = vpack.c.b16 %v3789, %v3782
    %v4161 = vpack.c.b16 %v3790, %v3783
    %v4162 = vpack.c.b16 %v3791, %v3784
    %v4163 = vpack.c.b16 %v3799, %v3792
    %v4164 = vpack.c.b16 %v3800, %v3793
    %v4165 = vpack.c.b16 %v3801, %v3794
    %v4166 = vpack.c.b16 %v3802, %v3795
    %v4167 = vpack.c.b16 %v3803, %v3796
    %v4168 = vpack.c.b16 %v3804, %v3797
    %v4169 = vpack.c.b16 %v3805, %v3798
    %v4170 = vpack.c.b16 %v3813, %v3806
    %v4171 = vpack.c.b16 %v3814, %v3807
    %v4172 = vpack.c.b16 %v3815, %v3808
    %v4173 = vpack.c.b16 %v3816, %v3809
    %v4174 = vpack.c.b16 %v3817, %v3810
    %v4175 = vpack.c.b16 %v3818, %v3811
    %v4176 = vpack.c.b16 %v3819, %v3812
    %v4177 = vpack.c.b16 %v3827, %v3820
    %v4178 = vpack.c.b16 %v3828, %v3821
    %v4179 = vpack.c.b16 %v3829, %v3822
    %v4180 = vpack.c.b16 %v3830, %v3823
    %v4181 = vpack.c.b16 %v3831, %v3824
    %v4182 = vpack.c.b16 %v3832, %v3825
    %v4183 = vpack.c.b16 %v3833, %v3826
    %v4184 = vpack.c.b16 %v3841, %v3834
    %v4185 = vpack.c.b16 %v3842, %v3835
    %v4186 = vpack.c.b16 %v3843, %v3836
    %v4187 = vpack.c.b16 %v3844, %v3837
    %v4188 = vpack.c.b16 %v3845, %v3838
    %v4189 = vpack.c.b16 %v3846, %v3839
    %v4190 = vpack.c.b16 %v3847, %v3840
    %v4191 = vpack.c.b16 %v3855, %v3848
    %v4192 = vpack.c.b16 %v3856, %v3849
    %v4193 = vpack.c.b16 %v3857, %v3850
    %v4194 = vpack.c.b16 %v3858, %v3851
    %v4195 = vpack.c.b16 %v3859, %v3852
    %v4196 = vpack.c.b16 %v3860, %v3853
    %v4197 = vpack.c.b16 %v3861, %v3854
    %v4198 = vpack.c.b16 %v3869, %v3862
    %v4199 = vpack.c.b16 %v3870, %v3863
    %v4200 = vpack.c.b16 %v3871, %v3864
    %v4201 = vpack.c.b16 %v3872, %v3865
    %v4202 = vpack.c.b16 %v3873, %v3866
    %v4203 = vpack.c.b16 %v3874, %v3867
    %v4204 = vpack.c.b16 %v3875, %v3868
    %v4205 = vpack.c.b16 %v3883, %v3876
    %v4206 = vpack.c.b16 %v3884, %v3877
    %v4207 = vpack.c.b16 %v3885, %v3878
    %v4208 = vpack.c.b16 %v3886, %v3879
    %v4209 = vpack.c.b16 %v3887, %v3880
    %v4210 = vpack.c.b16 %v3888, %v3881
    %v4211 = vpack.c.b16 %v3889, %v3882
    %v4212 = vpack.c.b16 %v3897, %v3890
    %v4213 = vpack.c.b16 %v3898, %v3891
    %v4214 = vpack.c.b16 %v3899, %v3892
    %v4215 = vpack.c.b16 %v3900, %v3893
    %v4216 = vpack.c.b16 %v3901, %v3894
    %v4217 = vpack.c.b16 %v3902, %v3895
    %v4218 = vpack.c.b16 %v3903, %v3896
    %v4219 = vpack.c.b16 %v3911, %v3904
    %v4220 = vpack.c.b16 %v3912, %v3905
    %v4221 = vpack.c.b16 %v3913, %v3906
    %v4222 = vpack.c.b16 %v3914, %v3907
    %v4223 = vpack.c.b16 %v3915, %v3908
    %v4224 = vpack.c.b16 %v3916, %v3909
    %v4225 = vpack.c.b16 %v3917, %v3910
    %v4226 = vpack.c.b16 %v3925, %v3918
    %v4227 = vpack.c.b16 %v3926, %v3919
    %v4228 = vpack.c.b16 %v3927, %v3920
    %v4229 = vpack.c.b16 %v3928, %v3921
    %v4230 = vpack.c.b16 %v3929, %v3922
    %v4231 = vpack.c.b16 %v3930, %v3923
    %v4232 = vpack.c.b16 %v3931, %v3924
    %v4233 = vpack.c.b16 %v3939, %v3932
    %v4234 = vpack.c.b16 %v3940, %v3933
    %v4235 = vpack.c.b16 %v3941, %v3934
    %v4236 = vpack.c.b16 %v3942, %v3935
    %v4237 = vpack.c.b16 %v3943, %v3936
    %v4238 = vpack.c.b16 %v3944, %v3937
    %v4239 = vpack.c.b16 %v3945, %v3938
    %v4240 = vpack.c.b16 %v3953, %v3946
    %v4241 = vpack.c.b16 %v3954, %v3947
    %v4242 = vpack.c.b16 %v3955, %v3948
    %v4243 = vpack.c.b16 %v3956, %v3949
    %v4244 = vpack.c.b16 %v3957, %v3950
    %v4245 = vpack.c.b16 %v3958, %v3951
    %v4246 = vpack.c.b16 %v3959, %v3952
    %v4247 = vpack.c.b16 %v3967, %v3960
    %v4248 = vpack.c.b16 %v3968, %v3961
    %v4249 = vpack.c.b16 %v3969, %v3962
    %v4250 = vpack.c.b16 %v3970, %v3963
    %v4251 = vpack.c.b16 %v3971, %v3964
    %v4252 = vpack.c.b16 %v3972, %v3965
    %v4253 = vpack.c.b16 %v3973, %v3966
    %v4254 = vpack.c.b16 %v3981, %v3974
    %v4255 = vpack.c.b16 %v3982, %v3975
    %v4256 = vpack.c.b16 %v3983, %v3976
    %v4257 = vpack.c.b16 %v3984, %v3977
    %v4258 = vpack.c.b16 %v3985, %v3978
    %v4259 = vpack.c.b16 %v3986, %v3979
    %v4260 = vpack.c.b16 %v3987, %v3980
    %v4261 = vpack.c.b16 %v3995, %v3988
    %v4262 = vpack.c.b16 %v3996, %v3989
    %v4263 = vpack.c.b16 %v3997, %v3990
    %v4264 = vpack.c.b16 %v3998, %v3991
    %v4265 = vpack.c.b16 %v3999, %v3992
    %v4266 = vpack.c.b16 %v4000, %v3993
    %v4267 = vpack.c.b16 %v4001, %v3994
    %v4268 = vpack.c.b16 %v4009, %v4002
    %v4269 = vpack.c.b16 %v4010, %v4003
    %v4270 = vpack.c.b16 %v4011, %v4004
    %v4271 = vpack.c.b16 %v4012, %v4005
    %v4272 = vpack.c.b16 %v4013, %v4006
    %v4273 = vpack.c.b16 %v4014, %v4007
    %v4274 = vpack.c.b16 %v4015, %v4008
    %v4275 = vpack.c.b16 %v4023, %v4016
    %v4276 = vpack.c.b16 %v4024, %v4017
    %v4277 = vpack.c.b16 %v4025, %v4018
    %v4278 = vpack.c.b16 %v4026, %v4019
    %v4279 = vpack.c.b16 %v4027, %v4020
    %v4280 = vpack.c.b16 %v4028, %v4021
    %v4281 = vpack.c.b16 %v4029, %v4022
    %v4282 = vpack.c.b16 %v4037, %v4030
    %v4283 = vpack.c.b16 %v4038, %v4031
    %v4284 = vpack.c.b16 %v4039, %v4032
    %v4285 = vpack.c.b16 %v4040, %v4033
    %v4286 = vpack.c.b16 %v4041, %v4034
    %v4287 = vpack.c.b16 %v4042, %v4035
    %v4288 = vpack.c.b16 %v4043, %v4036
    %v4289 = vpack.c.b16 %v4051, %v4044
    %v4290 = vpack.c.b16 %v4052, %v4045
    %v4291 = vpack.c.b16 %v4053, %v4046
    %v4292 = vpack.c.b16 %v4054, %v4047
    %v4293 = vpack.c.b16 %v4055, %v4048
    %v4294 = vpack.c.b16 %v4056, %v4049
    %v4295 = vpack.c.b16 %v4057, %v4050
    %v4296 = vpack.c.b16 %v4065, %v4058
    %v4297 = vpack.c.b16 %v4066, %v4059
    %v4298 = vpack.c.b16 %v4067, %v4060
    %v4299 = vpack.c.b16 %v4068, %v4061
    %v4300 = vpack.c.b16 %v4069, %v4062
    %v4301 = vpack.c.b16 %v4070, %v4063
    %v4302 = vpack.c.b16 %v4071, %v4064
    %v4303 = vpack.c.b16 %v4079, %v4072
    %v4304 = vpack.c.b16 %v4080, %v4073
    %v4305 = vpack.c.b16 %v4081, %v4074
    %v4306 = vpack.c.b16 %v4082, %v4075
    %v4307 = vpack.c.b16 %v4083, %v4076
    %v4308 = vpack.c.b16 %v4084, %v4077
    %v4309 = vpack.c.b16 %v4085, %v4078
    %4534 = vmatprep.subr.bf16.mxu0 %v4087
    %4535 = vmatpush1.bf16.msra.mxu0 %v4086
    %4536 = vmatprep.subr.bf16.mxu0 %v4094
    %4537 = vmatpush1.bf16.msra.mxu0 %v4093
    %4538 = vmatprep.subr.bf16.mxu0 %v4101
    %4539 = vmatpush1.bf16.msra.mxu0 %v4100
    %4540 = vmatprep.subr.bf16.mxu0 %v4108
    %4541 = vmatpush1.bf16.msra.mxu0 %v4107
    %4542 = vmatprep.subr.bf16.mxu0 %v4115
    %4543 = vmatpush1.bf16.msra.mxu0 %v4114
    %4544 = vmatprep.subr.bf16.mxu0 %v4122
    %4545 = vmatpush1.bf16.msra.mxu0 %v4121
    %4546 = vmatprep.subr.bf16.mxu0 %v4129
    %4547 = vmatpush1.bf16.msra.mxu0 %v4128
    %4548 = vmatprep.subr.bf16.mxu0 %v4136
    %4549 = vmatpush1.bf16.msra.mxu0 %v4135
    %4550 = vmatprep.subr.bf16.mxu0 %v4143
    %4551 = vmatpush1.bf16.msra.mxu0 %v4142
    %4552 = vmatprep.subr.bf16.mxu0 %v4150
    %4553 = vmatpush1.bf16.msra.mxu0 %v4149
    %4554 = vmatprep.subr.bf16.mxu0 %v4157
    %4555 = vmatpush1.bf16.msra.mxu0 %v4156
    %4556 = vmatprep.subr.bf16.mxu0 %v4164
    %4557 = vmatpush1.bf16.msra.mxu0 %v4163
    %4558 = vmatprep.subr.bf16.mxu0 %v4171
    %4559 = vmatpush1.bf16.msra.mxu0 %v4170
    %4560 = vmatprep.subr.bf16.mxu0 %v4178
    %4561 = vmatpush1.bf16.msra.mxu0 %v4177
    %4562 = vmatprep.subr.bf16.mxu0 %v4185
    %4563 = vmatpush1.bf16.msra.mxu0 %v4184
    %4564 = vmatprep.subr.bf16.mxu0 %v4192
    %4565 = vmatpush1.bf16.msra.mxu0 %v4191
    %4566 = vmatprep.mubr.bf16.mxu0 %v3086
    %4567 = vmatmul.mubr.bf16.gmra.mrb[0].mxu0 %v3085
    %v4568 = vpop.f32.mrb[0].mxu0
    %v4569 = vadd.f32 %v3350, %v4568
    %v4570 = vpop.f32.mrb[0].mxu0
    %v4571 = vadd.f32 %v3354, %v4570
    %v4572 = vpop.f32.mrb[0].mxu0
    %v4573 = vpop.f32.mrb[0].mxu0
    %4574 = vdwg.mxu0
    %4575 = vmatprep.subr.bf16.mxu0 %v4199
    %4576 = vmatpush1.bf16.msra.mxu0 %v4198
    %4577 = vmatprep.subr.bf16.mxu0 %v4206
    %4578 = vmatpush1.bf16.msra.mxu0 %v4205
    %4579 = vmatprep.subr.bf16.mxu0 %v4213
    %4580 = vmatpush1.bf16.msra.mxu0 %v4212
    %4581 = vmatprep.subr.bf16.mxu0 %v4220
    %4582 = vmatpush1.bf16.msra.mxu0 %v4219
    %4583 = vmatprep.subr.bf16.mxu0 %v4227
    %4584 = vmatpush1.bf16.msra.mxu0 %v4226
    %4585 = vmatprep.subr.bf16.mxu0 %v4234
    %4586 = vmatpush1.bf16.msra.mxu0 %v4233
    %4587 = vmatprep.subr.bf16.mxu0 %v4241
    %4588 = vmatpush1.bf16.msra.mxu0 %v4240
    %4589 = vmatprep.subr.bf16.mxu0 %v4248
    %4590 = vmatpush1.bf16.msra.mxu0 %v4247
    %4591 = vmatprep.subr.bf16.mxu0 %v4255
    %4592 = vmatpush1.bf16.msra.mxu0 %v4254
    %4593 = vmatprep.subr.bf16.mxu0 %v4262
    %4594 = vmatpush1.bf16.msra.mxu0 %v4261
    %4595 = vmatprep.subr.bf16.mxu0 %v4269
    %4596 = vmatpush1.bf16.msra.mxu0 %v4268
    %4597 = vmatprep.subr.bf16.mxu0 %v4276
    %4598 = vmatpush1.bf16.msra.mxu0 %v4275
    %4599 = vmatprep.subr.bf16.mxu0 %v4283
    %4600 = vmatpush1.bf16.msra.mxu0 %v4282
    %4601 = vmatprep.subr.bf16.mxu0 %v4290
    %4602 = vmatpush1.bf16.msra.mxu0 %v4289
    %4603 = vmatprep.subr.bf16.mxu0 %v4297
    %4604 = vmatpush1.bf16.msra.mxu0 %v4296
    %4605 = vmatprep.subr.bf16.mxu0 %v4304
    %4606 = vmatpush1.bf16.msra.mxu0 %v4303
    %4607 = vmatprep.mubr.bf16.mxu0 %v3088
    %4608 = vmatmul.mubr.bf16.gmra.mrb[0].mxu0 %v3087
    %v4609 = vpop.f32.mrb[0].mxu0
    %v4610 = vadd.f32 %v4569, %v4609
    %v4611 = vpop.f32.mrb[0].mxu0
    %v4612 = vadd.f32 %v4571, %v4611
    %v4613 = vpop.f32.mrb[0].mxu0
    %v4614 = vpop.f32.mrb[0].mxu0
    %4615 = vdwg.mxu0
    %4616 = vmatprep.subr.bf16.mxu0 %v4089
    %4617 = vmatpush1.bf16.msra.mxu0 %v4088
    %4618 = vmatprep.subr.bf16.mxu0 %v4096
    %4619 = vmatpush1.bf16.msra.mxu0 %v4095
    %4620 = vmatprep.subr.bf16.mxu0 %v4103
    %4621 = vmatpush1.bf16.msra.mxu0 %v4102
    %4622 = vmatprep.subr.bf16.mxu0 %v4110
    %4623 = vmatpush1.bf16.msra.mxu0 %v4109
    %4624 = vmatprep.subr.bf16.mxu0 %v4117
    %4625 = vmatpush1.bf16.msra.mxu0 %v4116
    %4626 = vmatprep.subr.bf16.mxu0 %v4124
    %4627 = vmatpush1.bf16.msra.mxu0 %v4123
    %4628 = vmatprep.subr.bf16.mxu0 %v4131
    %4629 = vmatpush1.bf16.msra.mxu0 %v4130
    %4630 = vmatprep.subr.bf16.mxu0 %v4138
    %4631 = vmatpush1.bf16.msra.mxu0 %v4137
    %4632 = vmatprep.subr.bf16.mxu0 %v4145
    %4633 = vmatpush1.bf16.msra.mxu0 %v4144
    %4634 = vmatprep.subr.bf16.mxu0 %v4152
    %4635 = vmatpush1.bf16.msra.mxu0 %v4151
    %4636 = vmatprep.subr.bf16.mxu0 %v4159
    %4637 = vmatpush1.bf16.msra.mxu0 %v4158
    %4638 = vmatprep.subr.bf16.mxu0 %v4166
    %4639 = vmatpush1.bf16.msra.mxu0 %v4165
    %4640 = vmatprep.subr.bf16.mxu0 %v4173
    %4641 = vmatpush1.bf16.msra.mxu0 %v4172
    %4642 = vmatprep.subr.bf16.mxu0 %v4180
    %4643 = vmatpush1.bf16.msra.mxu0 %v4179
    %4644 = vmatprep.subr.bf16.mxu0 %v4187
    %4645 = vmatpush1.bf16.msra.mxu0 %v4186
    %4646 = vmatprep.subr.bf16.mxu0 %v4194
    %4647 = vmatpush1.bf16.msra.mxu0 %v4193
    %4648 = vmatprep.mubr.bf16.mxu0 %v3086
    %4649 = vmatmul.mubr.bf16.gmra.mrb[0].mxu0 %v3085
    %v4650 = vpop.f32.mrb[0].mxu0
    %v4651 = vadd.f32 %v3358, %v4650
    %v4652 = vpop.f32.mrb[0].mxu0
    %v4653 = vadd.f32 %v3362, %v4652
    %v4654 = vpop.f32.mrb[0].mxu0
    %v4655 = vpop.f32.mrb[0].mxu0
    %4656 = vdwg.mxu0
    %4657 = vmatprep.subr.bf16.mxu0 %v4201
    %4658 = vmatpush1.bf16.msra.mxu0 %v4200
    %4659 = vmatprep.subr.bf16.mxu0 %v4208
    %4660 = vmatpush1.bf16.msra.mxu0 %v4207
    %4661 = vmatprep.subr.bf16.mxu0 %v4215
    %4662 = vmatpush1.bf16.msra.mxu0 %v4214
    %4663 = vmatprep.subr.bf16.mxu0 %v4222
    %4664 = vmatpush1.bf16.msra.mxu0 %v4221
    %4665 = vmatprep.subr.bf16.mxu0 %v4229
    %4666 = vmatpush1.bf16.msra.mxu0 %v4228
    %4667 = vmatprep.subr.bf16.mxu0 %v4236
    %4668 = vmatpush1.bf16.msra.mxu0 %v4235
    %4669 = vmatprep.subr.bf16.mxu0 %v4243
    %4670 = vmatpush1.bf16.msra.mxu0 %v4242
    %4671 = vmatprep.subr.bf16.mxu0 %v4250
    %4672 = vmatpush1.bf16.msra.mxu0 %v4249
    %4673 = vmatprep.subr.bf16.mxu0 %v4257
    %4674 = vmatpush1.bf16.msra.mxu0 %v4256
    %4675 = vmatprep.subr.bf16.mxu0 %v4264
    %4676 = vmatpush1.bf16.msra.mxu0 %v4263
    %4677 = vmatprep.subr.bf16.mxu0 %v4271
    %4678 = vmatpush1.bf16.msra.mxu0 %v4270
    %4679 = vmatprep.subr.bf16.mxu0 %v4278
    %4680 = vmatpush1.bf16.msra.mxu0 %v4277
    %4681 = vmatprep.subr.bf16.mxu0 %v4285
    %4682 = vmatpush1.bf16.msra.mxu0 %v4284
    %4683 = vmatprep.subr.bf16.mxu0 %v4292
    %4684 = vmatpush1.bf16.msra.mxu0 %v4291
    %4685 = vmatprep.subr.bf16.mxu0 %v4299
    %4686 = vmatpush1.bf16.msra.mxu0 %v4298
    %4687 = vmatprep.subr.bf16.mxu0 %v4306
    %4688 = vmatpush1.bf16.msra.mxu0 %v4305
    %4689 = vmatprep.mubr.bf16.mxu0 %v3088
    %4690 = vmatmul.mubr.bf16.gmra.mrb[0].mxu0 %v3087
    %v4691 = vpop.f32.mrb[0].mxu0
    %v4692 = vadd.f32 %v4651, %v4691
    %v4693 = vpop.f32.mrb[0].mxu0
    %v4694 = vadd.f32 %v4653, %v4693
    %v4695 = vpop.f32.mrb[0].mxu0
    %v4696 = vpop.f32.mrb[0].mxu0
    %4697 = vdwg.mxu0
    %4698 = vmatprep.subr.bf16.mxu0 %v4091
    %4699 = vmatpush1.bf16.msra.mxu0 %v4090
    %4700 = vmatprep.subr.bf16.mxu0 %v4098
    %4701 = vmatpush1.bf16.msra.mxu0 %v4097
    %4702 = vmatprep.subr.bf16.mxu0 %v4105
    %4703 = vmatpush1.bf16.msra.mxu0 %v4104
    %4704 = vmatprep.subr.bf16.mxu0 %v4112
    %4705 = vmatpush1.bf16.msra.mxu0 %v4111
    %4706 = vmatprep.subr.bf16.mxu0 %v4119
    %4707 = vmatpush1.bf16.msra.mxu0 %v4118
    %4708 = vmatprep.subr.bf16.mxu0 %v4126
    %4709 = vmatpush1.bf16.msra.mxu0 %v4125
    %4710 = vmatprep.subr.bf16.mxu0 %v4133
    %4711 = vmatpush1.bf16.msra.mxu0 %v4132
    %4712 = vmatprep.subr.bf16.mxu0 %v4140
    %4713 = vmatpush1.bf16.msra.mxu0 %v4139
    %4714 = vmatprep.subr.bf16.mxu0 %v4147
    %4715 = vmatpush1.bf16.msra.mxu0 %v4146
    %4716 = vmatprep.subr.bf16.mxu0 %v4154
    %4717 = vmatpush1.bf16.msra.mxu0 %v4153
    %4718 = vmatprep.subr.bf16.mxu0 %v4161
    %4719 = vmatpush1.bf16.msra.mxu0 %v4160
    %4720 = vmatprep.subr.bf16.mxu0 %v4168
    %4721 = vmatpush1.bf16.msra.mxu0 %v4167
    %4722 = vmatprep.subr.bf16.mxu0 %v4175
    %4723 = vmatpush1.bf16.msra.mxu0 %v4174
    %4724 = vmatprep.subr.bf16.mxu0 %v4182
    %4725 = vmatpush1.bf16.msra.mxu0 %v4181
    %4726 = vmatprep.subr.bf16.mxu0 %v4189
    %4727 = vmatpush1.bf16.msra.mxu0 %v4188
    %4728 = vmatprep.subr.bf16.mxu0 %v4196
    %4729 = vmatpush1.bf16.msra.mxu0 %v4195
    %4730 = vmatprep.mubr.bf16.mxu0 %v3086
    %4731 = vmatmul.mubr.bf16.gmra.mrb[0].mxu0 %v3085
    %v4732 = vpop.f32.mrb[0].mxu0
    %v4733 = vadd.f32 %v3366, %v4732
    %v4734 = vpop.f32.mrb[0].mxu0
    %v4735 = vadd.f32 %v3370, %v4734
    %v4736 = vpop.f32.mrb[0].mxu0
    %v4737 = vpop.f32.mrb[0].mxu0
    %4738 = vdwg.mxu0
    %4739 = vmatprep.subr.bf16.mxu0 %v4203
    %4740 = vmatpush1.bf16.msra.mxu0 %v4202
    %4741 = vmatprep.subr.bf16.mxu0 %v4210
    %4742 = vmatpush1.bf16.msra.mxu0 %v4209
    %4743 = vmatprep.subr.bf16.mxu0 %v4217
    %4744 = vmatpush1.bf16.msra.mxu0 %v4216
    %4745 = vmatprep.subr.bf16.mxu0 %v4224
    %4746 = vmatpush1.bf16.msra.mxu0 %v4223
    %4747 = vmatprep.subr.bf16.mxu0 %v4231
    %4748 = vmatpush1.bf16.msra.mxu0 %v4230
    %4749 = vmatprep.subr.bf16.mxu0 %v4238
    %4750 = vmatpush1.bf16.msra.mxu0 %v4237
    %4751 = vmatprep.subr.bf16.mxu0 %v4245
    %4752 = vmatpush1.bf16.msra.mxu0 %v4244
    %4753 = vmatprep.subr.bf16.mxu0 %v4252
    %4754 = vmatpush1.bf16.msra.mxu0 %v4251
    %4755 = vmatprep.subr.bf16.mxu0 %v4259
    %4756 = vmatpush1.bf16.msra.mxu0 %v4258
    %4757 = vmatprep.subr.bf16.mxu0 %v4266
    %4758 = vmatpush1.bf16.msra.mxu0 %v4265
    %4759 = vmatprep.subr.bf16.mxu0 %v4273
    %4760 = vmatpush1.bf16.msra.mxu0 %v4272
    %4761 = vmatprep.subr.bf16.mxu0 %v4280
    %4762 = vmatpush1.bf16.msra.mxu0 %v4279
    %4763 = vmatprep.subr.bf16.mxu0 %v4287
    %4764 = vmatpush1.bf16.msra.mxu0 %v4286
    %4765 = vmatprep.subr.bf16.mxu0 %v4294
    %4766 = vmatpush1.bf16.msra.mxu0 %v4293
    %4767 = vmatprep.subr.bf16.mxu0 %v4301
    %4768 = vmatpush1.bf16.msra.mxu0 %v4300
    %4769 = vmatprep.subr.bf16.mxu0 %v4308
    %4770 = vmatpush1.bf16.msra.mxu0 %v4307
    %4771 = vmatprep.mubr.bf16.mxu0 %v3088
    %4772 = vmatmul.mubr.bf16.gmra.mrb[0].mxu0 %v3087
    %v4773 = vpop.f32.mrb[0].mxu0
    %v4774 = vadd.f32 %v4733, %v4773
    %v4775 = vpop.f32.mrb[0].mxu0
    %v4776 = vadd.f32 %v4735, %v4775
    %v4777 = vpop.f32.mrb[0].mxu0
    %v4778 = vpop.f32.mrb[0].mxu0
    %4779 = vdwg.mxu0
    %4780 = vmatprep.subr.bf16.mxu0 0
    %4781 = vmatpush1.bf16.msra.mxu0 %v4092
    %4782 = vmatprep.subr.bf16.mxu0 0
    %4783 = vmatpush1.bf16.msra.mxu0 %v4099
    %4784 = vmatprep.subr.bf16.mxu0 0
    %4785 = vmatpush1.bf16.msra.mxu0 %v4106
    %4786 = vmatprep.subr.bf16.mxu0 0
    %4787 = vmatpush1.bf16.msra.mxu0 %v4113
    %4788 = vmatprep.subr.bf16.mxu0 0
    %4789 = vmatpush1.bf16.msra.mxu0 %v4120
    %4790 = vmatprep.subr.bf16.mxu0 0
    %4791 = vmatpush1.bf16.msra.mxu0 %v4127
    %4792 = vmatprep.subr.bf16.mxu0 0
    %4793 = vmatpush1.bf16.msra.mxu0 %v4134
    %4794 = vmatprep.subr.bf16.mxu0 0
    %4795 = vmatpush1.bf16.msra.mxu0 %v4141
    %4796 = vmatprep.subr.bf16.mxu0 0
    %4797 = vmatpush1.bf16.msra.mxu0 %v4148
    %4798 = vmatprep.subr.bf16.mxu0 0
    %4799 = vmatpush1.bf16.msra.mxu0 %v4155
    %4800 = vmatprep.subr.bf16.mxu0 0
    %4801 = vmatpush1.bf16.msra.mxu0 %v4162
    %4802 = vmatprep.subr.bf16.mxu0 0
    %4803 = vmatpush1.bf16.msra.mxu0 %v4169
    %4804 = vmatprep.subr.bf16.mxu0 0
    %4805 = vmatpush1.bf16.msra.mxu0 %v4176
    %4806 = vmatprep.subr.bf16.mxu0 0
    %4807 = vmatpush1.bf16.msra.mxu0 %v4183
    %4808 = vmatprep.subr.bf16.mxu0 0
    %4809 = vmatpush1.bf16.msra.mxu0 %v4190
    %4810 = vmatprep.subr.bf16.mxu0 0
    %4811 = vmatpush1.bf16.msra.mxu0 %v4197
    %4812 = vmatprep.mubr.bf16.mxu0 %v3086
    %4813 = vmatmul.mubr.bf16.gmra.mrb[0].mxu0 %v3085
    %v4814 = vpop.f32.mrb[0].mxu0
    %v4815 = vadd.f32 %v3374, %v4814
    %v4816 = vpop.f32.mrb[0].mxu0
    %v4817 = vpop.f32.mrb[0].mxu0
    %v4818 = vpop.f32.mrb[0].mxu0
    %4819 = vdwg.mxu0
    %4820 = vmatprep.subr.bf16.mxu0 0
    %4821 = vmatpush1.bf16.msra.mxu0 %v4204
    %4822 = vmatprep.subr.bf16.mxu0 0
    %4823 = vmatpush1.bf16.msra.mxu0 %v4211
    %4824 = vmatprep.subr.bf16.mxu0 0
    %4825 = vmatpush1.bf16.msra.mxu0 %v4218
    %4826 = vmatprep.subr.bf16.mxu0 0
    %4827 = vmatpush1.bf16.msra.mxu0 %v4225
    %4828 = vmatprep.subr.bf16.mxu0 0
    %4829 = vmatpush1.bf16.msra.mxu0 %v4232
    %4830 = vmatprep.subr.bf16.mxu0 0
    %4831 = vmatpush1.bf16.msra.mxu0 %v4239
    %4832 = vmatprep.subr.bf16.mxu0 0
    %4833 = vmatpush1.bf16.msra.mxu0 %v4246
    %4834 = vmatprep.subr.bf16.mxu0 0
    %4835 = vmatpush1.bf16.msra.mxu0 %v4253
    %4836 = vmatprep.subr.bf16.mxu0 0
    %4837 = vmatpush1.bf16.msra.mxu0 %v4260
    %4838 = vmatprep.subr.bf16.mxu0 0
    %4839 = vmatpush1.bf16.msra.mxu0 %v4267
    %4840 = vmatprep.subr.bf16.mxu0 0
    %4841 = vmatpush1.bf16.msra.mxu0 %v4274
    %4842 = vmatprep.subr.bf16.mxu0 0
    %4843 = vmatpush1.bf16.msra.mxu0 %v4281
    %4844 = vmatprep.subr.bf16.mxu0 0
    %4845 = vmatpush1.bf16.msra.mxu0 %v4288
    %4846 = vmatprep.subr.bf16.mxu0 0
    %4847 = vmatpush1.bf16.msra.mxu0 %v4295
    %4848 = vmatprep.subr.bf16.mxu0 0
    %4849 = vmatpush1.bf16.msra.mxu0 %v4302
    %4850 = vmatprep.subr.bf16.mxu0 0
    %4851 = vmatpush1.bf16.msra.mxu0 %v4309
    %4852 = vmatprep.mubr.bf16.mxu0 %v3088
    %4853 = vmatmul.mubr.bf16.gmra.mrb[0].mxu0 %v3087
    %v4854 = vpop.f32.mrb[0].mxu0
    %v4855 = vadd.f32 %v4815, %v4854
    %v4856 = vpop.f32.mrb[0].mxu0
    %v4857 = vpop.f32.mrb[0].mxu0
    %v4858 = vpop.f32.mrb[0].mxu0
    %4859 = vdwg.mxu0
    %v4860 = vxor.u32 %v4610, 2147483648
    %v4861 = vxor.u32 %v4612, 2147483648
    %v4862 = vxor.u32 %v4692, 2147483648
    %v4863 = vxor.u32 %v4694, 2147483648
    %v4864 = vxor.u32 %v4774, 2147483648
    %v4865 = vxor.u32 %v4776, 2147483648
    %v4866 = vxor.u32 %v4855, 2147483648
    %v4867 = vmul.f32 %v4860, 1.442695
    %v4868 = vpow.pop %v4867
    %v4869 = vmul.f32 %v4861, 1.442695
    %v4870 = vpow.pop %v4869
    %v4871 = vmul.f32 %v4862, 1.442695
    %v4872 = vpow.pop %v4871
    %v4873 = vmul.f32 %v4863, 1.442695
    %v4874 = vpow.pop %v4873
    %v4875 = vmul.f32 %v4864, 1.442695
    %v4876 = vpow.pop %v4875
    %v4877 = vmul.f32 %v4865, 1.442695
    %v4878 = vpow.pop %v4877
    %v4879 = vmul.f32 %v4866, 1.442695
    %v4880 = vpow.pop %v4879
    %v4881 = vadd.f32 %v4868, 1.0
    %v4882 = vadd.f32 %v4870, 1.0
    %v4883 = vadd.f32 %v4872, 1.0
    %v4884 = vadd.f32 %v4874, 1.0
    %v4885 = vadd.f32 %v4876, 1.0
    %v4886 = vadd.f32 %v4878, 1.0
    %v4887 = vadd.f32 %v4880, 1.0
    %v4888 = vrcp.pop %v4881
    %v4889 = vmul.f32 1.0, %v4888
    %v4890 = vrcp.pop %v4882
    %v4891 = vmul.f32 1.0, %v4890
    %v4892 = vrcp.pop %v4883
    %v4893 = vmul.f32 1.0, %v4892
    %v4894 = vrcp.pop %v4884
    %v4895 = vmul.f32 1.0, %v4894
    %v4896 = vrcp.pop %v4885
    %v4897 = vmul.f32 1.0, %v4896
    %v4898 = vrcp.pop %v4886
    %v4899 = vmul.f32 1.0, %v4898
    %v4900 = vrcp.pop %v4887
    %v4901 = vmul.f32 1.0, %v4900
    %4902 = vst [vmem:[#allocation10] sm:$0xff] %v4889
    %4903 = vst [vmem:[#allocation10 + $0x8] sm:$0xff] %v4891
    %4904 = vst [vmem:[#allocation10 + $0x10] sm:$0xff] %v4893
    %4905 = vst [vmem:[#allocation10 + $0x18] sm:$0xff] %v4895
    %4906 = vst [vmem:[#allocation10 + $0x20] sm:$0xff] %v4897
    %4907 = vst [vmem:[#allocation10 + $0x28] sm:$0xff] %v4899
    %4908 = vst [vmem:[#allocation10 + $0x30] sm:$0xff] %v4901
    // Predicated region
    $region74: #{tpu_custom_call.1} parent=1 // pred_check
      _
    $region75: #{tpu_custom_call.1} parent=1 // pred_check_branch
      %4910 = sbr.rel (0) target = $region77
    $region76: #{tpu_custom_call.1} parent=1 // pred_region
      %s4912 = ssub.s32 896, 896
      %4913 = vsyncadd [#allocation4], %s4912
      %s4915 = sshll.u32 [#allocation10], 4
      %s4916 = int_to_ptr.vmem [resolvable:$true] %s4915
      %4918 = dma.vmem_to_hbm [thread:$0]  %s4916, 896, %s14, [#allocation4]
    $region77: #{tpu_custom_call.1} parent=1 // pred_fallthru
      _
    // Predicated region
    $region78: #{tpu_custom_call.1} parent=1 // pred_check
      _
    $region79: #{tpu_custom_call.1} parent=1 // pred_check_branch
      %4920 = sbr.rel (0) target = $region81
    $region80: #{tpu_custom_call.1} parent=1 // pred_region
      %s4922 = ssub.s32 128, 128
      %4923 = vsyncadd [#allocation12], %s4922
      %s4925 = sshll.u32 [#allocation11], 4
      %s4926 = int_to_ptr.vmem [resolvable:$true] %s4925
      %4928 = dma.vmem_to_hbm [thread:$0]  %s4926, 128, %s15, [#allocation12]
    $region81: #{tpu_custom_call.1} parent=1 // pred_fallthru
      _
    // Predicated region
    $region82: #{tpu_custom_call.1} parent=1 // pred_check
      _
    $region83: #{tpu_custom_call.1} parent=1 // pred_check_branch
      %4930 = sbr.rel (0) target = $region85
    $region84: #{tpu_custom_call.1} parent=1 // pred_region
      %4931 = dma.done [#allocation4], 896
    $region85: #{tpu_custom_call.1} parent=1 // pred_fallthru
      _
    // Predicated region
    $region86: #{tpu_custom_call.1} parent=1 // pred_check
      _
    $region87: #{tpu_custom_call.1} parent=1 // pred_check_branch
      %4933 = sbr.rel (0) target = $region89
    $region88: #{tpu_custom_call.1} parent=1 // pred_region
      %4934 = dma.done [#allocation12], 128
    $region89: #{tpu_custom_call.1} parent=1 // pred_fallthru
      _
    %4935 = vsyncpa [#allocation3], 1
    %4936 = vsyncpa [#allocation6], 1
    %4937 = vsyncpa [#allocation9], 1
    %4938 = vsyncpa [#allocation4], 1
    %4939 = vsyncpa [#allocation12], 1

</llo_original>
